<compile_context>
chip_gen: v5e
topology: v5e:2x2
jax: 0.10.0
libtpu: 0.0.40
codegen_flags: <defaults>
</compile_context>

<pallas_src>
import jax
import jax.numpy as jnp
from jax.experimental import pallas as pl
from jax.experimental.pallas import tpu as pltpu

C1_IN, C, L, LP = 2, 32, 128, 64      # in-channels, channels, seq len, pooled len
HID, NCLS = 64, 4
EPS = 1e-5


def _batched_layernorm(h, gamma_t, beta_t, seg):
    """Per-sample LayerNorm over contiguous `seg`-wide lane segments of h (C, nb*seg).

    gamma_t / beta_t are the per-sample-tiled affine params (same shape as h).
    One-pass (biased) variance, matching torch LayerNorm; the stat loop is a static
    Python loop so it is fully unrolled (keeps XLU/VPU work visible to the scheduler).
    """
    rows, S = h.shape
    nb = S // seg
    n = rows * seg
    h2 = h * h
    mu_cols, inv_cols = [], []
    for b in range(nb):
        lo = b * seg
        mu = jnp.sum(h[:, lo:lo + seg]) / n
        var = jnp.sum(h2[:, lo:lo + seg]) / n - mu * mu
        inv = jax.lax.rsqrt(var + EPS)
        mu_cols.append(jnp.full((1, seg), mu, dtype=jnp.float32))
        inv_cols.append(jnp.full((1, seg), inv, dtype=jnp.float32))
    mu_l = jnp.concatenate(mu_cols, axis=1)
    inv_l = jnp.concatenate(inv_cols, axis=1)
    return (h - mu_l) * inv_l * gamma_t + beta_t


def conv_stack_kernel(x_ref, w1_ref, w23_ref, st_ref, ln12_ref, ln3_ref, se_ref,
                      out_ref):
    S = x_ref.shape[1]          # B * L for this sample block
    nb = S // L

    # Zero-padding boundary masks for the rolled taps, built ONCE per grid step
    # at full (C, S) shape (no per-layer re-broadcast).
    col = jax.lax.broadcasted_iota(jnp.int32, (C, S), 1)
    nf = ((col & (L - 1)) != 0).astype(jnp.float32)        # l-1 tap invalid at l == 0
    nl = ((col & (L - 1)) != (L - 1)).astype(jnp.float32)  # l+1 tap invalid at l == L-1

    st = st_ref[...]            # (C, 3) per-layer folded conv-bias + BN shift

    def taps_to_act(a, shift):
        # a: (3C, S) stacked-tap results. Combine with XLU rolls + masks, add the
        # folded BN/bias shift (BN scale is pre-folded into the weights), ReLU.
        y = (a[C:2 * C]
             + pltpu.roll(a[0:C], 1, axis=1) * nf
             + pltpu.roll(a[2 * C:3 * C], S - 1, axis=1) * nl)
        return jnp.maximum(y + shift, 0.0)

    # ---- Conv1 (C_in = 2): K=2, so two VPU rank-1 updates instead of an MXU dot.
    w1 = w1_ref[...]
    x = x_ref[...]
    a1 = w1[:, 0:1] * x[0:1, :] + w1[:, 1:2] * x[1:2, :]          # (3C, S) f32
    h = taps_to_act(a1, st[:, 0:1])
    h = _batched_layernorm(h, ln12_ref[0], ln12_ref[1], L)

    # ---- Conv2 / Conv3: one bf16 MXU matmul per layer over the whole block.
    a2 = jnp.dot(w23_ref[0], h.astype(jnp.bfloat16),
                 preferred_element_type=jnp.float32)               # (3C, S)
    h = taps_to_act(a2, st[:, 1:2])
    h = _batched_layernorm(h, ln12_ref[2], ln12_ref[3], L)

    a3 = jnp.dot(w23_ref[1], h.astype(jnp.bfloat16),
                 preferred_element_type=jnp.float32)
    h = taps_to_act(a3, st[:, 2:3])

    # ---- MaxPool1d(2): pairwise max via roll, then per-128-lane-segment even-lane
    # compaction with the (L, LP) 0/1 selector (exact: one bf16 value per column).
    m = jnp.maximum(h, pltpu.roll(h, S - 1, axis=1)).astype(jnp.bfloat16)
    se = se_ref[...]
    g3 = ln3_ref[0]
    b3 = ln3_ref[1]
    n3 = C * LP
    parts = []
    for b in range(nb):                                            # static unroll
        pb = jnp.dot(m[:, b * L:(b + 1) * L], se,
                     preferred_element_type=jnp.float32)           # (C, LP)
        mu = jnp.sum(pb) / n3
        var = jnp.sum(pb * pb) / n3 - mu * mu
        inv = jax.lax.rsqrt(var + EPS)
        parts.append(((pb - mu) * inv * g3 + b3).astype(jnp.bfloat16))
    # Lane-dense (C, B*LP) store; HBM writeback is a full unmasked tile.
    out_ref[...] = jnp.concatenate(parts, axis=1)


def fc_kernel(x_ref, w1_ref, b1_ref, w2_ref, b2_ref, out_ref):
    # Dropout layers are identity in inference mode.
    h = jnp.dot(x_ref[...].astype(jnp.bfloat16), w1_ref[...],
                preferred_element_type=jnp.float32) + b1_ref[...]
    h = jnp.maximum(h, 0.0)
    out_ref[...] = (jnp.dot(h.astype(jnp.bfloat16), w2_ref[...],
                            preferred_element_type=jnp.float32) + b2_ref[...])


def cnn2_forward(x, p, *, block_n=32):
    N = x.shape[0]
    B = min(block_n, N)
    B += B % 2                          # even B keeps the (C, B*LP) output lane-aligned
    n_pad = pl.cdiv(N, B) * B
    if n_pad != N:
        x = jnp.pad(x, ((0, n_pad - N), (0, 0), (0, 0)))

    # Samples along the lane axis: (C_in, n_pad*L); one block = (C_in, B*L).
    xt = x.transpose(1, 0, 2).reshape(C1_IN, n_pad * L)
    # Per-sample-tiled LayerNorm affine params for the batched normalize.
    ln12_t = jnp.tile(p["ln12"], (1, 1, B))        # (4, C, B*L)

    def full(a):
        nd = a.ndim
        return pl.BlockSpec(a.shape, lambda i, _nd=nd: (0,) * _nd)

    consts = [p["w1"], p["w23"], p["st"], ln12_t, p["ln3"], p["Se"]]
    feats = pl.pallas_call(
        conv_stack_kernel,
        out_shape=jax.ShapeDtypeStruct((C, n_pad * LP), jnp.bfloat16),
        grid=(n_pad // B,),
        in_specs=[pl.BlockSpec((C1_IN, B * L), lambda i: (0, i))]
                 + [full(a) for a in consts],
        out_specs=pl.BlockSpec((C, B * LP), lambda i: (0, i)),
        compiler_params=pltpu.CompilerParams(
            dimension_semantics=("parallel",),
            vmem_limit_bytes=48 * 1024 * 1024),
    )(xt, *consts)

    # Lane-dense feats -> (N, C*LP) in torch Flatten order (c-major); tiny XLA transpose.
    flat = feats.reshape(C, n_pad, LP).transpose(1, 0, 2).reshape(n_pad, C * LP)

    # FC head, row-blocked so large batches pipeline through VMEM.
    RB = 256 if n_pad > 256 else n_pad
    rows = pl.cdiv(n_pad, RB) * RB
    if rows != n_pad:
        flat = jnp.pad(flat, ((0, rows - n_pad), (0, 0)))
    logits = pl.pallas_call(
        fc_kernel,
        out_shape=jax.ShapeDtypeStruct((rows, NCLS), jnp.float32),
        grid=(rows // RB,),
        in_specs=[pl.BlockSpec((RB, C * LP), lambda i: (i, 0)),
                  full(p["fc1_w"]), full(p["fc1_b"]),
                  full(p["fc2_w"]), full(p["fc2_b"])],
        out_specs=pl.BlockSpec((RB, NCLS), lambda i: (i, 0)),
        compiler_params=pltpu.CompilerParams(dimension_semantics=("parallel",)),
    )(flat, p["fc1_w"], p["fc1_b"], p["fc2_w"], p["fc2_b"])
    return logits[:N]


def init_params(key):
    ks = iter(jax.random.split(key, 32))

    def nrm(shape, scale=0.1):
        return scale * jax.random.normal(next(ks), shape, dtype=jnp.float32)

    params = {}
    idx = jnp.arange(L)
    j = jnp.arange(LP)
    params["Se"] = (idx[:, None] == 2 * j[None, :]).astype(jnp.bfloat16)  # even-lane select

    def conv_bn(cin):
        w = nrm((C, cin, 3))                   # torch Conv1d weight layout (C_out, C_in, k)
        b = nrm((C,))
        gamma = 1.0 + nrm((C,))
        beta = nrm((C,))
        rmean = nrm((C,))
        rvar = 0.5 + jax.random.uniform(next(ks), (C,), dtype=jnp.float32)
        scale = gamma * jax.lax.rsqrt(rvar + EPS)
        shift = beta + (b - rmean) * scale
        # Taps stacked along M; BN (eval) scale folded into the weights.
        wcat = jnp.concatenate([w[:, :, 0], w[:, :, 1], w[:, :, 2]], axis=0)   # (3C, cin)
        wcat = wcat * jnp.concatenate([scale, scale, scale])[:, None]
        return wcat, shift

    w1, t1 = conv_bn(C1_IN)
    w2, t2 = conv_bn(C)
    w3, t3 = conv_bn(C)
    params["w1"] = w1                                                  # (3C, 2)  f32 (VPU)
    params["w23"] = jnp.stack([w2, w3], axis=0).astype(jnp.bfloat16)   # (2, 3C, C) bf16 (MXU)
    params["st"] = jnp.stack([t1, t2, t3], axis=1)                     # (C, 3) shifts
    params["ln12"] = jnp.stack([1.0 + nrm((C, L)), nrm((C, L)),
                                1.0 + nrm((C, L)), nrm((C, L))], axis=0)   # g1,b1,g2,b2
    params["ln3"] = jnp.stack([1.0 + nrm((C, LP)), nrm((C, LP))], axis=0)  # g3,b3

    params["fc1_w"] = nrm((C * LP, HID), 0.02).astype(jnp.bfloat16)  # torch fc1.weight.T
    params["fc1_b"] = nrm((1, HID))
    params["fc2_w"] = nrm((HID, NCLS), 0.02).astype(jnp.bfloat16)    # torch fc2.weight.T
    params["fc2_b"] = nrm((1, NCLS))
    return params


def cnn2_reference(x, p):
    """Pure-JAX reference (explicit zero-pad conv, two-pass LN), mirroring the kernel's
    bf16-MXU-operand / f32-accumulation numerics choices."""
    hi = jax.lax.Precision.HIGHEST
    kw = dict(preferred_element_type=jnp.float32, precision=hi)

    def conv_taps(h, wcat):
        w0, w1, w2 = wcat[0:C], wcat[C:2 * C], wcat[2 * C:3 * C]
        hp = jnp.pad(h, ((0, 0), (0, 0), (1, 1)))
        return (jnp.einsum('oc,ncl->nol', w0, hp[:, :, 0:L], **kw)
                + jnp.einsum('oc,ncl->nol', w1, hp[:, :, 1:L + 1], **kw)
                + jnp.einsum('oc,ncl->nol', w2, hp[:, :, 2:L + 2], **kw))

    def ln(h, g, b):
        mu = h.mean(axis=(1, 2), keepdims=True)
        var = ((h - mu) ** 2).mean(axis=(1, 2), keepdims=True)
        return (h - mu) * jax.lax.rsqrt(var + EPS) * g[None] + b[None]

    st = p["st"]
    relu = lambda v: jnp.maximum(v, 0.0)
    h = relu(conv_taps(x, p["w1"]) + st[:, 0][None, :, None])
    h = ln(h, p["ln12"][0], p["ln12"][1])
    h = relu(conv_taps(h.astype(jnp.bfloat16), p["w23"][0]) + st[:, 1][None, :, None])
    h = ln(h, p["ln12"][2], p["ln12"][3])
    h = relu(conv_taps(h.astype(jnp.bfloat16), p["w23"][1]) + st[:, 2][None, :, None])
    h = h.reshape(h.shape[0], C, LP, 2).max(axis=-1)               # MaxPool1d(2)
    h = h.astype(jnp.bfloat16).astype(jnp.float32)                 # mirror bf16 pooling path
    h = ln(h, p["ln3"][0], p["ln3"][1])
    flat = h.reshape(h.shape[0], C * LP)
    hid = jnp.maximum(jnp.einsum('nk,kh->nh', flat.astype(jnp.bfloat16),
                                 p["fc1_w"], **kw) + p["fc1_b"], 0.0)
    return (jnp.einsum('nh,hc->nc', hid.astype(jnp.bfloat16), p["fc2_w"], **kw)
            + p["fc2_b"])


if __name__ == "__main__":
    key = jax.random.PRNGKey(0)
    pkey, xkey = jax.random.split(key)
    params = init_params(pkey)
    N = 5
    x = jax.random.normal(xkey, (N, C1_IN, L), dtype=jnp.float32)   # (N, C_in, L)

    # block_n=4 exercises the multi-block grid (2 steps) and the padding path.
    fwd = jax.jit(cnn2_forward, static_argnames=("block_n",))
    out = jax.block_until_ready(fwd(x, params, block_n=4))
    assert out.shape == (N, NCLS) and out.dtype == jnp.float32

    ref = cnn2_reference(x, params)
    assert bool(jnp.allclose(out, ref, rtol=1e-3, atol=1e-3)), (
        "max|diff|=%g" % float(jnp.max(jnp.abs(out - ref))))
    print("KERNEL_OK")
</pallas_src>

<mosaic_0001>
module attributes {stable_mosaic.version = 11 : i64} {
  func.func @conv_stack_kernel(%arg0: i32, %arg1: memref<2x512xf32, #tpu.memory_space<vmem>>, %arg2: memref<96x2xf32, #tpu.memory_space<vmem>>, %arg3: memref<2x96x32xbf16, #tpu.memory_space<vmem>>, %arg4: memref<32x3xf32, #tpu.memory_space<vmem>>, %arg5: memref<4x32x512xf32, #tpu.memory_space<vmem>>, %arg6: memref<2x32x64xf32, #tpu.memory_space<vmem>>, %arg7: memref<128x64xbf16, #tpu.memory_space<vmem>>, %arg8: memref<32x256xbf16, #tpu.memory_space<vmem>>) attributes {dimension_semantics = [#tpu.dimension_semantics<parallel>], iteration_bounds = array<i64: 2>, scalar_prefetch = 0 : i64, scratch_operands = 0 : i64, tpu.core_type = #tpu.core_type<tc>, window_params = [{transform_indices = @transform_0, window_bounds = array<i64: 2, 512>}, {pipeline_mode = #tpu.pipeline_mode<synchronous>, transform_indices = @transform_1, window_bounds = array<i64: 96, 2>}, {pipeline_mode = #tpu.pipeline_mode<synchronous>, transform_indices = @transform_2, window_bounds = array<i64: 2, 96, 32>}, {pipeline_mode = #tpu.pipeline_mode<synchronous>, transform_indices = @transform_3, window_bounds = array<i64: 32, 3>}, {pipeline_mode = #tpu.pipeline_mode<synchronous>, transform_indices = @transform_4, window_bounds = array<i64: 4, 32, 512>}, {pipeline_mode = #tpu.pipeline_mode<synchronous>, transform_indices = @transform_5, window_bounds = array<i64: 2, 32, 64>}, {pipeline_mode = #tpu.pipeline_mode<synchronous>, transform_indices = @transform_6, window_bounds = array<i64: 128, 64>}, {transform_indices = @transform_7, window_bounds = array<i64: 32, 256>}]} {
    %0 = tpu.iota {dimensions = array<i32: 1>} : vector<32x512xi32>
    %c127_i32 = arith.constant 127 : i32
    %1 = vector.broadcast %c127_i32 : i32 to vector<32x512xi32>
    %2 = arith.andi %0, %1 : vector<32x512xi32>
    %c0_i32 = arith.constant 0 : i32
    %3 = vector.broadcast %c0_i32 : i32 to vector<32x512xi32>
    %4 = arith.cmpi ne, %2, %3 : vector<32x512xi32>
    %5 = arith.extui %4 : vector<32x512xi1> to vector<32x512xi32>
    %6 = arith.sitofp %5 : vector<32x512xi32> to vector<32x512xf32>
    %c127_i32_0 = arith.constant 127 : i32
    %7 = vector.broadcast %c127_i32_0 : i32 to vector<32x512xi32>
    %8 = arith.andi %0, %7 : vector<32x512xi32>
    %c127_i32_1 = arith.constant 127 : i32
    %9 = vector.broadcast %c127_i32_1 : i32 to vector<32x512xi32>
    %10 = arith.cmpi ne, %8, %9 : vector<32x512xi32>
    %11 = arith.extui %10 : vector<32x512xi1> to vector<32x512xi32>
    %12 = arith.sitofp %11 : vector<32x512xi32> to vector<32x512xf32>
    %c0 = arith.constant 0 : index
    %c0_2 = arith.constant 0 : index
    %13 = vector.load %arg4[%c0, %c0_2] : memref<32x3xf32, #tpu.memory_space<vmem>>, vector<32x3xf32>
    %c0_3 = arith.constant 0 : index
    %c0_4 = arith.constant 0 : index
    %14 = vector.load %arg2[%c0_3, %c0_4] : memref<96x2xf32, #tpu.memory_space<vmem>>, vector<96x2xf32>
    %c0_5 = arith.constant 0 : index
    %c0_6 = arith.constant 0 : index
    %15 = vector.load %arg1[%c0_5, %c0_6] : memref<2x512xf32, #tpu.memory_space<vmem>>, vector<2x512xf32>
    %16 = vector.extract_strided_slice %14 {offsets = [0, 0], sizes = [96, 1], strides = [1, 1]} : vector<96x2xf32> to vector<96x1xf32>
    %17 = vector.extract_strided_slice %15 {offsets = [0, 0], sizes = [1, 512], strides = [1, 1]} : vector<2x512xf32> to vector<1x512xf32>
    %18 = vector.broadcast %16 : vector<96x1xf32> to vector<96x512xf32>
    %19 = vector.broadcast %17 : vector<1x512xf32> to vector<96x512xf32>
    %20 = arith.mulf %18, %19 : vector<96x512xf32>
    %21 = vector.extract_strided_slice %14 {offsets = [0, 1], sizes = [96, 1], strides = [1, 1]} : vector<96x2xf32> to vector<96x1xf32>
    %22 = vector.extract_strided_slice %15 {offsets = [1, 0], sizes = [1, 512], strides = [1, 1]} : vector<2x512xf32> to vector<1x512xf32>
    %23 = vector.broadcast %21 : vector<96x1xf32> to vector<96x512xf32>
    %24 = vector.broadcast %22 : vector<1x512xf32> to vector<96x512xf32>
    %25 = arith.mulf %23, %24 : vector<96x512xf32>
    %26 = arith.addf %20, %25 : vector<96x512xf32>
    %27 = vector.extract_strided_slice %13 {offsets = [0, 0], sizes = [32, 1], strides = [1, 1]} : vector<32x3xf32> to vector<32x1xf32>
    %28 = vector.extract_strided_slice %26 {offsets = [32, 0], sizes = [32, 512], strides = [1, 1]} : vector<96x512xf32> to vector<32x512xf32>
    %29 = vector.extract_strided_slice %26 {offsets = [0, 0], sizes = [32, 512], strides = [1, 1]} : vector<96x512xf32> to vector<32x512xf32>
    %c1_i32 = arith.constant 1 : i32
    %30 = tpu.dynamic_rotate %29 by %c1_i32 dim 1 : vector<32x512xf32>, i32 -> vector<32x512xf32>
    %31 = arith.mulf %30, %6 : vector<32x512xf32>
    %32 = arith.addf %28, %31 : vector<32x512xf32>
    %33 = vector.extract_strided_slice %26 {offsets = [64, 0], sizes = [32, 512], strides = [1, 1]} : vector<96x512xf32> to vector<32x512xf32>
    %c511_i32 = arith.constant 511 : i32
    %34 = tpu.dynamic_rotate %33 by %c511_i32 dim 1 : vector<32x512xf32>, i32 -> vector<32x512xf32>
    %35 = arith.mulf %34, %12 : vector<32x512xf32>
    %36 = arith.addf %32, %35 : vector<32x512xf32>
    %37 = vector.broadcast %27 : vector<32x1xf32> to vector<32x512xf32>
    %38 = arith.addf %36, %37 : vector<32x512xf32>
    %cst = arith.constant 0.000000e+00 : f32
    %39 = vector.broadcast %cst : f32 to vector<32x512xf32>
    %40 = arith.maximumf %38, %39 : vector<32x512xf32>
    %c0_7 = arith.constant 0 : index
    %c0_8 = arith.constant 0 : index
    %c0_9 = arith.constant 0 : index
    %41 = vector.load %arg5[%c0_7, %c0_8, %c0_9] : memref<4x32x512xf32, #tpu.memory_space<vmem>>, vector<1x32x512xf32>
    %42 = vector.shape_cast %41 : vector<1x32x512xf32> to vector<32x512xf32>
    %c1 = arith.constant 1 : index
    %c0_10 = arith.constant 0 : index
    %c0_11 = arith.constant 0 : index
    %43 = vector.load %arg5[%c1, %c0_10, %c0_11] : memref<4x32x512xf32, #tpu.memory_space<vmem>>, vector<1x32x512xf32>
    %44 = vector.shape_cast %43 : vector<1x32x512xf32> to vector<32x512xf32>
    %45 = arith.mulf %40, %40 : vector<32x512xf32>
    %46 = vector.extract_strided_slice %40 {offsets = [0, 0], sizes = [32, 128], strides = [1, 1]} : vector<32x512xf32> to vector<32x128xf32>
    %47 = vector.shape_cast %46 : vector<32x128xf32> to vector<1x32x128xf32>
    %cst_12 = arith.constant dense<0.000000e+00> : vector<1xf32>
    %48 = vector.multi_reduction <add>, %47, %cst_12 [1, 2] : vector<1x32x128xf32> to vector<1xf32>
    %49 = vector.shape_cast %48 : vector<1xf32> to vector<1x1x1xf32>
    %50 = vector.extract %49[0, 0, 0] : f32 from vector<1x1x1xf32>
    %cst_13 = arith.constant 4.096000e+03 : f32
    %51 = arith.divf %50, %cst_13 : f32
    %52 = vector.extract_strided_slice %45 {offsets = [0, 0], sizes = [32, 128], strides = [1, 1]} : vector<32x512xf32> to vector<32x128xf32>
    %53 = vector.shape_cast %52 : vector<32x128xf32> to vector<1x32x128xf32>
    %cst_14 = arith.constant dense<0.000000e+00> : vector<1xf32>
    %54 = vector.multi_reduction <add>, %53, %cst_14 [1, 2] : vector<1x32x128xf32> to vector<1xf32>
    %55 = vector.shape_cast %54 : vector<1xf32> to vector<1x1x1xf32>
    %56 = vector.extract %55[0, 0, 0] : f32 from vector<1x1x1xf32>
    %cst_15 = arith.constant 4.096000e+03 : f32
    %57 = arith.divf %56, %cst_15 : f32
    %58 = arith.mulf %51, %51 : f32
    %59 = arith.subf %57, %58 : f32
    %cst_16 = arith.constant 9.99999974E-6 : f32
    %60 = arith.addf %59, %cst_16 : f32
    %61 = math.rsqrt %60 : f32
    %62 = vector.broadcast %51 : f32 to vector<1x128xf32>
    %63 = vector.broadcast %61 : f32 to vector<1x128xf32>
    %64 = vector.extract_strided_slice %40 {offsets = [0, 128], sizes = [32, 128], strides = [1, 1]} : vector<32x512xf32> to vector<32x128xf32>
    %65 = vector.shape_cast %64 : vector<32x128xf32> to vector<1x32x128xf32>
    %cst_17 = arith.constant dense<0.000000e+00> : vector<1xf32>
    %66 = vector.multi_reduction <add>, %65, %cst_17 [1, 2] : vector<1x32x128xf32> to vector<1xf32>
    %67 = vector.shape_cast %66 : vector<1xf32> to vector<1x1x1xf32>
    %68 = vector.extract %67[0, 0, 0] : f32 from vector<1x1x1xf32>
    %cst_18 = arith.constant 4.096000e+03 : f32
    %69 = arith.divf %68, %cst_18 : f32
    %70 = vector.extract_strided_slice %45 {offsets = [0, 128], sizes = [32, 128], strides = [1, 1]} : vector<32x512xf32> to vector<32x128xf32>
    %71 = vector.shape_cast %70 : vector<32x128xf32> to vector<1x32x128xf32>
    %cst_19 = arith.constant dense<0.000000e+00> : vector<1xf32>
    %72 = vector.multi_reduction <add>, %71, %cst_19 [1, 2] : vector<1x32x128xf32> to vector<1xf32>
    %73 = vector.shape_cast %72 : vector<1xf32> to vector<1x1x1xf32>
    %74 = vector.extract %73[0, 0, 0] : f32 from vector<1x1x1xf32>
    %cst_20 = arith.constant 4.096000e+03 : f32
    %75 = arith.divf %74, %cst_20 : f32
    %76 = arith.mulf %69, %69 : f32
    %77 = arith.subf %75, %76 : f32
    %cst_21 = arith.constant 9.99999974E-6 : f32
    %78 = arith.addf %77, %cst_21 : f32
    %79 = math.rsqrt %78 : f32
    %80 = vector.broadcast %69 : f32 to vector<1x128xf32>
    %81 = vector.broadcast %79 : f32 to vector<1x128xf32>
    %82 = vector.extract_strided_slice %40 {offsets = [0, 256], sizes = [32, 128], strides = [1, 1]} : vector<32x512xf32> to vector<32x128xf32>
    %83 = vector.shape_cast %82 : vector<32x128xf32> to vector<1x32x128xf32>
    %cst_22 = arith.constant dense<0.000000e+00> : vector<1xf32>
    %84 = vector.multi_reduction <add>, %83, %cst_22 [1, 2] : vector<1x32x128xf32> to vector<1xf32>
    %85 = vector.shape_cast %84 : vector<1xf32> to vector<1x1x1xf32>
    %86 = vector.extract %85[0, 0, 0] : f32 from vector<1x1x1xf32>
    %cst_23 = arith.constant 4.096000e+03 : f32
    %87 = arith.divf %86, %cst_23 : f32
    %88 = vector.extract_strided_slice %45 {offsets = [0, 256], sizes = [32, 128], strides = [1, 1]} : vector<32x512xf32> to vector<32x128xf32>
    %89 = vector.shape_cast %88 : vector<32x128xf32> to vector<1x32x128xf32>
    %cst_24 = arith.constant dense<0.000000e+00> : vector<1xf32>
    %90 = vector.multi_reduction <add>, %89, %cst_24 [1, 2] : vector<1x32x128xf32> to vector<1xf32>
    %91 = vector.shape_cast %90 : vector<1xf32> to vector<1x1x1xf32>
    %92 = vector.extract %91[0, 0, 0] : f32 from vector<1x1x1xf32>
    %cst_25 = arith.constant 4.096000e+03 : f32
    %93 = arith.divf %92, %cst_25 : f32
    %94 = arith.mulf %87, %87 : f32
    %95 = arith.subf %93, %94 : f32
    %cst_26 = arith.constant 9.99999974E-6 : f32
    %96 = arith.addf %95, %cst_26 : f32
    %97 = math.rsqrt %96 : f32
    %98 = vector.broadcast %87 : f32 to vector<1x128xf32>
    %99 = vector.broadcast %97 : f32 to vector<1x128xf32>
    %100 = vector.extract_strided_slice %40 {offsets = [0, 384], sizes = [32, 128], strides = [1, 1]} : vector<32x512xf32> to vector<32x128xf32>
    %101 = vector.shape_cast %100 : vector<32x128xf32> to vector<1x32x128xf32>
    %cst_27 = arith.constant dense<0.000000e+00> : vector<1xf32>
    %102 = vector.multi_reduction <add>, %101, %cst_27 [1, 2] : vector<1x32x128xf32> to vector<1xf32>
    %103 = vector.shape_cast %102 : vector<1xf32> to vector<1x1x1xf32>
    %104 = vector.extract %103[0, 0, 0] : f32 from vector<1x1x1xf32>
    %cst_28 = arith.constant 4.096000e+03 : f32
    %105 = arith.divf %104, %cst_28 : f32
    %106 = vector.extract_strided_slice %45 {offsets = [0, 384], sizes = [32, 128], strides = [1, 1]} : vector<32x512xf32> to vector<32x128xf32>
    %107 = vector.shape_cast %106 : vector<32x128xf32> to vector<1x32x128xf32>
    %cst_29 = arith.constant dense<0.000000e+00> : vector<1xf32>
    %108 = vector.multi_reduction <add>, %107, %cst_29 [1, 2] : vector<1x32x128xf32> to vector<1xf32>
    %109 = vector.shape_cast %108 : vector<1xf32> to vector<1x1x1xf32>
    %110 = vector.extract %109[0, 0, 0] : f32 from vector<1x1x1xf32>
    %cst_30 = arith.constant 4.096000e+03 : f32
    %111 = arith.divf %110, %cst_30 : f32
    %112 = arith.mulf %105, %105 : f32
    %113 = arith.subf %111, %112 : f32
    %cst_31 = arith.constant 9.99999974E-6 : f32
    %114 = arith.addf %113, %cst_31 : f32
    %115 = math.rsqrt %114 : f32
    %116 = vector.broadcast %105 : f32 to vector<1x128xf32>
    %117 = vector.broadcast %115 : f32 to vector<1x128xf32>
    %118 = tpu.concatenate %62, %80, %98, %116 in 1 : vector<1x128xf32>, vector<1x128xf32>, vector<1x128xf32>, vector<1x128xf32> -> vector<1x512xf32>
    %119 = tpu.concatenate %63, %81, %99, %117 in 1 : vector<1x128xf32>, vector<1x128xf32>, vector<1x128xf32>, vector<1x128xf32> -> vector<1x512xf32>
    %120 = vector.broadcast %118 : vector<1x512xf32> to vector<32x512xf32>
    %121 = arith.subf %40, %120 : vector<32x512xf32>
    %122 = vector.broadcast %119 : vector<1x512xf32> to vector<32x512xf32>
    %123 = arith.mulf %121, %122 : vector<32x512xf32>
    %124 = arith.mulf %123, %42 : vector<32x512xf32>
    %125 = arith.addf %124, %44 : vector<32x512xf32>
    %c0_32 = arith.constant 0 : index
    %c0_33 = arith.constant 0 : index
    %c0_34 = arith.constant 0 : index
    %126 = vector.load %arg3[%c0_32, %c0_33, %c0_34] : memref<2x96x32xbf16, #tpu.memory_space<vmem>>, vector<1x96x32xbf16>
    %127 = vector.shape_cast %126 : vector<1x96x32xbf16> to vector<96x32xbf16>
    %128 = arith.truncf %125 : vector<32x512xf32> to vector<32x512xbf16>
    %cst_35 = arith.constant dense<0.000000e+00> : vector<96x512xf32>
    %129 = tpu.matmul %127, %128, %cst_35 {dimension_numbers = #tpu.dot_dimension_numbers<[1], [0], [0], [1], [0, 0, 1, 1], [], []>} : vector<96x32xbf16>, vector<32x512xbf16>, vector<96x512xf32> -> vector<96x512xf32>
    %130 = vector.extract_strided_slice %13 {offsets = [0, 1], sizes = [32, 1], strides = [1, 1]} : vector<32x3xf32> to vector<32x1xf32>
    %131 = vector.extract_strided_slice %129 {offsets = [32, 0], sizes = [32, 512], strides = [1, 1]} : vector<96x512xf32> to vector<32x512xf32>
    %132 = vector.extract_strided_slice %129 {offsets = [0, 0], sizes = [32, 512], strides = [1, 1]} : vector<96x512xf32> to vector<32x512xf32>
    %c1_i32_36 = arith.constant 1 : i32
    %133 = tpu.dynamic_rotate %132 by %c1_i32_36 dim 1 : vector<32x512xf32>, i32 -> vector<32x512xf32>
    %134 = arith.mulf %133, %6 : vector<32x512xf32>
    %135 = arith.addf %131, %134 : vector<32x512xf32>
    %136 = vector.extract_strided_slice %129 {offsets = [64, 0], sizes = [32, 512], strides = [1, 1]} : vector<96x512xf32> to vector<32x512xf32>
    %c511_i32_37 = arith.constant 511 : i32
    %137 = tpu.dynamic_rotate %136 by %c511_i32_37 dim 1 : vector<32x512xf32>, i32 -> vector<32x512xf32>
    %138 = arith.mulf %137, %12 : vector<32x512xf32>
    %139 = arith.addf %135, %138 : vector<32x512xf32>
    %140 = vector.broadcast %130 : vector<32x1xf32> to vector<32x512xf32>
    %141 = arith.addf %139, %140 : vector<32x512xf32>
    %cst_38 = arith.constant 0.000000e+00 : f32
    %142 = vector.broadcast %cst_38 : f32 to vector<32x512xf32>
    %143 = arith.maximumf %141, %142 : vector<32x512xf32>
    %c2 = arith.constant 2 : index
    %c0_39 = arith.constant 0 : index
    %c0_40 = arith.constant 0 : index
    %144 = vector.load %arg5[%c2, %c0_39, %c0_40] : memref<4x32x512xf32, #tpu.memory_space<vmem>>, vector<1x32x512xf32>
    %145 = vector.shape_cast %144 : vector<1x32x512xf32> to vector<32x512xf32>
    %c3 = arith.constant 3 : index
    %c0_41 = arith.constant 0 : index
    %c0_42 = arith.constant 0 : index
    %146 = vector.load %arg5[%c3, %c0_41, %c0_42] : memref<4x32x512xf32, #tpu.memory_space<vmem>>, vector<1x32x512xf32>
    %147 = vector.shape_cast %146 : vector<1x32x512xf32> to vector<32x512xf32>
    %148 = arith.mulf %143, %143 : vector<32x512xf32>
    %149 = vector.extract_strided_slice %143 {offsets = [0, 0], sizes = [32, 128], strides = [1, 1]} : vector<32x512xf32> to vector<32x128xf32>
    %150 = vector.shape_cast %149 : vector<32x128xf32> to vector<1x32x128xf32>
    %cst_43 = arith.constant dense<0.000000e+00> : vector<1xf32>
    %151 = vector.multi_reduction <add>, %150, %cst_43 [1, 2] : vector<1x32x128xf32> to vector<1xf32>
    %152 = vector.shape_cast %151 : vector<1xf32> to vector<1x1x1xf32>
    %153 = vector.extract %152[0, 0, 0] : f32 from vector<1x1x1xf32>
    %cst_44 = arith.constant 4.096000e+03 : f32
    %154 = arith.divf %153, %cst_44 : f32
    %155 = vector.extract_strided_slice %148 {offsets = [0, 0], sizes = [32, 128], strides = [1, 1]} : vector<32x512xf32> to vector<32x128xf32>
    %156 = vector.shape_cast %155 : vector<32x128xf32> to vector<1x32x128xf32>
    %cst_45 = arith.constant dense<0.000000e+00> : vector<1xf32>
    %157 = vector.multi_reduction <add>, %156, %cst_45 [1, 2] : vector<1x32x128xf32> to vector<1xf32>
    %158 = vector.shape_cast %157 : vector<1xf32> to vector<1x1x1xf32>
    %159 = vector.extract %158[0, 0, 0] : f32 from vector<1x1x1xf32>
    %cst_46 = arith.constant 4.096000e+03 : f32
    %160 = arith.divf %159, %cst_46 : f32
    %161 = arith.mulf %154, %154 : f32
    %162 = arith.subf %160, %161 : f32
    %cst_47 = arith.constant 9.99999974E-6 : f32
    %163 = arith.addf %162, %cst_47 : f32
    %164 = math.rsqrt %163 : f32
    %165 = vector.broadcast %154 : f32 to vector<1x128xf32>
    %166 = vector.broadcast %164 : f32 to vector<1x128xf32>
    %167 = vector.extract_strided_slice %143 {offsets = [0, 128], sizes = [32, 128], strides = [1, 1]} : vector<32x512xf32> to vector<32x128xf32>
    %168 = vector.shape_cast %167 : vector<32x128xf32> to vector<1x32x128xf32>
    %cst_48 = arith.constant dense<0.000000e+00> : vector<1xf32>
    %169 = vector.multi_reduction <add>, %168, %cst_48 [1, 2] : vector<1x32x128xf32> to vector<1xf32>
    %170 = vector.shape_cast %169 : vector<1xf32> to vector<1x1x1xf32>
    %171 = vector.extract %170[0, 0, 0] : f32 from vector<1x1x1xf32>
    %cst_49 = arith.constant 4.096000e+03 : f32
    %172 = arith.divf %171, %cst_49 : f32
    %173 = vector.extract_strided_slice %148 {offsets = [0, 128], sizes = [32, 128], strides = [1, 1]} : vector<32x512xf32> to vector<32x128xf32>
    %174 = vector.shape_cast %173 : vector<32x128xf32> to vector<1x32x128xf32>
    %cst_50 = arith.constant dense<0.000000e+00> : vector<1xf32>
    %175 = vector.multi_reduction <add>, %174, %cst_50 [1, 2] : vector<1x32x128xf32> to vector<1xf32>
    %176 = vector.shape_cast %175 : vector<1xf32> to vector<1x1x1xf32>
    %177 = vector.extract %176[0, 0, 0] : f32 from vector<1x1x1xf32>
    %cst_51 = arith.constant 4.096000e+03 : f32
    %178 = arith.divf %177, %cst_51 : f32
    %179 = arith.mulf %172, %172 : f32
    %180 = arith.subf %178, %179 : f32
    %cst_52 = arith.constant 9.99999974E-6 : f32
    %181 = arith.addf %180, %cst_52 : f32
    %182 = math.rsqrt %181 : f32
    %183 = vector.broadcast %172 : f32 to vector<1x128xf32>
    %184 = vector.broadcast %182 : f32 to vector<1x128xf32>
    %185 = vector.extract_strided_slice %143 {offsets = [0, 256], sizes = [32, 128], strides = [1, 1]} : vector<32x512xf32> to vector<32x128xf32>
    %186 = vector.shape_cast %185 : vector<32x128xf32> to vector<1x32x128xf32>
    %cst_53 = arith.constant dense<0.000000e+00> : vector<1xf32>
    %187 = vector.multi_reduction <add>, %186, %cst_53 [1, 2] : vector<1x32x128xf32> to vector<1xf32>
    %188 = vector.shape_cast %187 : vector<1xf32> to vector<1x1x1xf32>
    %189 = vector.extract %188[0, 0, 0] : f32 from vector<1x1x1xf32>
    %cst_54 = arith.constant 4.096000e+03 : f32
    %190 = arith.divf %189, %cst_54 : f32
    %191 = vector.extract_strided_slice %148 {offsets = [0, 256], sizes = [32, 128], strides = [1, 1]} : vector<32x512xf32> to vector<32x128xf32>
    %192 = vector.shape_cast %191 : vector<32x128xf32> to vector<1x32x128xf32>
    %cst_55 = arith.constant dense<0.000000e+00> : vector<1xf32>
    %193 = vector.multi_reduction <add>, %192, %cst_55 [1, 2] : vector<1x32x128xf32> to vector<1xf32>
    %194 = vector.shape_cast %193 : vector<1xf32> to vector<1x1x1xf32>
    %195 = vector.extract %194[0, 0, 0] : f32 from vector<1x1x1xf32>
    %cst_56 = arith.constant 4.096000e+03 : f32
    %196 = arith.divf %195, %cst_56 : f32
    %197 = arith.mulf %190, %190 : f32
    %198 = arith.subf %196, %197 : f32
    %cst_57 = arith.constant 9.99999974E-6 : f32
    %199 = arith.addf %198, %cst_57 : f32
    %200 = math.rsqrt %199 : f32
    %201 = vector.broadcast %190 : f32 to vector<1x128xf32>
    %202 = vector.broadcast %200 : f32 to vector<1x128xf32>
    %203 = vector.extract_strided_slice %143 {offsets = [0, 384], sizes = [32, 128], strides = [1, 1]} : vector<32x512xf32> to vector<32x128xf32>
    %204 = vector.shape_cast %203 : vector<32x128xf32> to vector<1x32x128xf32>
    %cst_58 = arith.constant dense<0.000000e+00> : vector<1xf32>
    %205 = vector.multi_reduction <add>, %204, %cst_58 [1, 2] : vector<1x32x128xf32> to vector<1xf32>
    %206 = vector.shape_cast %205 : vector<1xf32> to vector<1x1x1xf32>
    %207 = vector.extract %206[0, 0, 0] : f32 from vector<1x1x1xf32>
    %cst_59 = arith.constant 4.096000e+03 : f32
    %208 = arith.divf %207, %cst_59 : f32
    %209 = vector.extract_strided_slice %148 {offsets = [0, 384], sizes = [32, 128], strides = [1, 1]} : vector<32x512xf32> to vector<32x128xf32>
    %210 = vector.shape_cast %209 : vector<32x128xf32> to vector<1x32x128xf32>
    %cst_60 = arith.constant dense<0.000000e+00> : vector<1xf32>
    %211 = vector.multi_reduction <add>, %210, %cst_60 [1, 2] : vector<1x32x128xf32> to vector<1xf32>
    %212 = vector.shape_cast %211 : vector<1xf32> to vector<1x1x1xf32>
    %213 = vector.extract %212[0, 0, 0] : f32 from vector<1x1x1xf32>
    %cst_61 = arith.constant 4.096000e+03 : f32
    %214 = arith.divf %213, %cst_61 : f32
    %215 = arith.mulf %208, %208 : f32
    %216 = arith.subf %214, %215 : f32
    %cst_62 = arith.constant 9.99999974E-6 : f32
    %217 = arith.addf %216, %cst_62 : f32
    %218 = math.rsqrt %217 : f32
    %219 = vector.broadcast %208 : f32 to vector<1x128xf32>
    %220 = vector.broadcast %218 : f32 to vector<1x128xf32>
    %221 = tpu.concatenate %165, %183, %201, %219 in 1 : vector<1x128xf32>, vector<1x128xf32>, vector<1x128xf32>, vector<1x128xf32> -> vector<1x512xf32>
    %222 = tpu.concatenate %166, %184, %202, %220 in 1 : vector<1x128xf32>, vector<1x128xf32>, vector<1x128xf32>, vector<1x128xf32> -> vector<1x512xf32>
    %223 = vector.broadcast %221 : vector<1x512xf32> to vector<32x512xf32>
    %224 = arith.subf %143, %223 : vector<32x512xf32>
    %225 = vector.broadcast %222 : vector<1x512xf32> to vector<32x512xf32>
    %226 = arith.mulf %224, %225 : vector<32x512xf32>
    %227 = arith.mulf %226, %145 : vector<32x512xf32>
    %228 = arith.addf %227, %147 : vector<32x512xf32>
    %c1_63 = arith.constant 1 : index
    %c0_64 = arith.constant 0 : index
    %c0_65 = arith.constant 0 : index
    %229 = vector.load %arg3[%c1_63, %c0_64, %c0_65] : memref<2x96x32xbf16, #tpu.memory_space<vmem>>, vector<1x96x32xbf16>
    %230 = vector.shape_cast %229 : vector<1x96x32xbf16> to vector<96x32xbf16>
    %231 = arith.truncf %228 : vector<32x512xf32> to vector<32x512xbf16>
    %cst_66 = arith.constant dense<0.000000e+00> : vector<96x512xf32>
    %232 = tpu.matmul %230, %231, %cst_66 {dimension_numbers = #tpu.dot_dimension_numbers<[1], [0], [0], [1], [0, 0, 1, 1], [], []>} : vector<96x32xbf16>, vector<32x512xbf16>, vector<96x512xf32> -> vector<96x512xf32>
    %233 = vector.extract_strided_slice %13 {offsets = [0, 2], sizes = [32, 1], strides = [1, 1]} : vector<32x3xf32> to vector<32x1xf32>
    %234 = vector.extract_strided_slice %232 {offsets = [32, 0], sizes = [32, 512], strides = [1, 1]} : vector<96x512xf32> to vector<32x512xf32>
    %235 = vector.extract_strided_slice %232 {offsets = [0, 0], sizes = [32, 512], strides = [1, 1]} : vector<96x512xf32> to vector<32x512xf32>
    %c1_i32_67 = arith.constant 1 : i32
    %236 = tpu.dynamic_rotate %235 by %c1_i32_67 dim 1 : vector<32x512xf32>, i32 -> vector<32x512xf32>
    %237 = arith.mulf %236, %6 : vector<32x512xf32>
    %238 = arith.addf %234, %237 : vector<32x512xf32>
    %239 = vector.extract_strided_slice %232 {offsets = [64, 0], sizes = [32, 512], strides = [1, 1]} : vector<96x512xf32> to vector<32x512xf32>
    %c511_i32_68 = arith.constant 511 : i32
    %240 = tpu.dynamic_rotate %239 by %c511_i32_68 dim 1 : vector<32x512xf32>, i32 -> vector<32x512xf32>
    %241 = arith.mulf %240, %12 : vector<32x512xf32>
    %242 = arith.addf %238, %241 : vector<32x512xf32>
    %243 = vector.broadcast %233 : vector<32x1xf32> to vector<32x512xf32>
    %244 = arith.addf %242, %243 : vector<32x512xf32>
    %cst_69 = arith.constant 0.000000e+00 : f32
    %245 = vector.broadcast %cst_69 : f32 to vector<32x512xf32>
    %246 = arith.maximumf %244, %245 : vector<32x512xf32>
    %c511_i32_70 = arith.constant 511 : i32
    %247 = tpu.dynamic_rotate %246 by %c511_i32_70 dim 1 : vector<32x512xf32>, i32 -> vector<32x512xf32>
    %248 = arith.maximumf %246, %247 : vector<32x512xf32>
    %249 = arith.truncf %248 : vector<32x512xf32> to vector<32x512xbf16>
    %c0_71 = arith.constant 0 : index
    %c0_72 = arith.constant 0 : index
    %250 = vector.load %arg7[%c0_71, %c0_72] : memref<128x64xbf16, #tpu.memory_space<vmem>>, vector<128x64xbf16>
    %c0_73 = arith.constant 0 : index
    %c0_74 = arith.constant 0 : index
    %c0_75 = arith.constant 0 : index
    %251 = vector.load %arg6[%c0_73, %c0_74, %c0_75] : memref<2x32x64xf32, #tpu.memory_space<vmem>>, vector<1x32x64xf32>
    %252 = vector.shape_cast %251 : vector<1x32x64xf32> to vector<32x64xf32>
    %c1_76 = arith.constant 1 : index
    %c0_77 = arith.constant 0 : index
    %c0_78 = arith.constant 0 : index
    %253 = vector.load %arg6[%c1_76, %c0_77, %c0_78] : memref<2x32x64xf32, #tpu.memory_space<vmem>>, vector<1x32x64xf32>
    %254 = vector.shape_cast %253 : vector<1x32x64xf32> to vector<32x64xf32>
    %255 = vector.extract_strided_slice %249 {offsets = [0, 0], sizes = [32, 128], strides = [1, 1]} : vector<32x512xbf16> to vector<32x128xbf16>
    %cst_79 = arith.constant dense<0.000000e+00> : vector<32x64xf32>
    %256 = tpu.matmul %255, %250, %cst_79 {dimension_numbers = #tpu.dot_dimension_numbers<[1], [0], [0], [1], [0, 0, 1, 1], [], []>} : vector<32x128xbf16>, vector<128x64xbf16>, vector<32x64xf32> -> vector<32x64xf32>
    %257 = vector.shape_cast %256 : vector<32x64xf32> to vector<1x32x64xf32>
    %cst_80 = arith.constant dense<0.000000e+00> : vector<1xf32>
    %258 = vector.multi_reduction <add>, %257, %cst_80 [1, 2] : vector<1x32x64xf32> to vector<1xf32>
    %259 = vector.shape_cast %258 : vector<1xf32> to vector<1x1x1xf32>
    %260 = vector.extract %259[0, 0, 0] : f32 from vector<1x1x1xf32>
    %cst_81 = arith.constant 2.048000e+03 : f32
    %261 = arith.divf %260, %cst_81 : f32
    %262 = arith.mulf %256, %256 : vector<32x64xf32>
    %263 = vector.shape_cast %262 : vector<32x64xf32> to vector<1x32x64xf32>
    %cst_82 = arith.constant dense<0.000000e+00> : vector<1xf32>
    %264 = vector.multi_reduction <add>, %263, %cst_82 [1, 2] : vector<1x32x64xf32> to vector<1xf32>
    %265 = vector.shape_cast %264 : vector<1xf32> to vector<1x1x1xf32>
    %266 = vector.extract %265[0, 0, 0] : f32 from vector<1x1x1xf32>
    %cst_83 = arith.constant 2.048000e+03 : f32
    %267 = arith.divf %266, %cst_83 : f32
    %268 = arith.mulf %261, %261 : f32
    %269 = arith.subf %267, %268 : f32
    %cst_84 = arith.constant 9.99999974E-6 : f32
    %270 = arith.addf %269, %cst_84 : f32
    %271 = math.rsqrt %270 : f32
    %272 = vector.broadcast %261 : f32 to vector<32x64xf32>
    %273 = arith.subf %256, %272 : vector<32x64xf32>
    %274 = vector.broadcast %271 : f32 to vector<32x64xf32>
    %275 = arith.mulf %273, %274 : vector<32x64xf32>
    %276 = arith.mulf %275, %252 : vector<32x64xf32>
    %277 = arith.addf %276, %254 : vector<32x64xf32>
    %278 = arith.truncf %277 : vector<32x64xf32> to vector<32x64xbf16>
    %279 = vector.extract_strided_slice %249 {offsets = [0, 128], sizes = [32, 128], strides = [1, 1]} : vector<32x512xbf16> to vector<32x128xbf16>
    %cst_85 = arith.constant dense<0.000000e+00> : vector<32x64xf32>
    %280 = tpu.matmul %279, %250, %cst_85 {dimension_numbers = #tpu.dot_dimension_numbers<[1], [0], [0], [1], [0, 0, 1, 1], [], []>} : vector<32x128xbf16>, vector<128x64xbf16>, vector<32x64xf32> -> vector<32x64xf32>
    %281 = vector.shape_cast %280 : vector<32x64xf32> to vector<1x32x64xf32>
    %cst_86 = arith.constant dense<0.000000e+00> : vector<1xf32>
    %282 = vector.multi_reduction <add>, %281, %cst_86 [1, 2] : vector<1x32x64xf32> to vector<1xf32>
    %283 = vector.shape_cast %282 : vector<1xf32> to vector<1x1x1xf32>
    %284 = vector.extract %283[0, 0, 0] : f32 from vector<1x1x1xf32>
    %cst_87 = arith.constant 2.048000e+03 : f32
    %285 = arith.divf %284, %cst_87 : f32
    %286 = arith.mulf %280, %280 : vector<32x64xf32>
    %287 = vector.shape_cast %286 : vector<32x64xf32> to vector<1x32x64xf32>
    %cst_88 = arith.constant dense<0.000000e+00> : vector<1xf32>
    %288 = vector.multi_reduction <add>, %287, %cst_88 [1, 2] : vector<1x32x64xf32> to vector<1xf32>
    %289 = vector.shape_cast %288 : vector<1xf32> to vector<1x1x1xf32>
    %290 = vector.extract %289[0, 0, 0] : f32 from vector<1x1x1xf32>
    %cst_89 = arith.constant 2.048000e+03 : f32
    %291 = arith.divf %290, %cst_89 : f32
    %292 = arith.mulf %285, %285 : f32
    %293 = arith.subf %291, %292 : f32
    %cst_90 = arith.constant 9.99999974E-6 : f32
    %294 = arith.addf %293, %cst_90 : f32
    %295 = math.rsqrt %294 : f32
    %296 = vector.broadcast %285 : f32 to vector<32x64xf32>
    %297 = arith.subf %280, %296 : vector<32x64xf32>
    %298 = vector.broadcast %295 : f32 to vector<32x64xf32>
    %299 = arith.mulf %297, %298 : vector<32x64xf32>
    %300 = arith.mulf %299, %252 : vector<32x64xf32>
    %301 = arith.addf %300, %254 : vector<32x64xf32>
    %302 = arith.truncf %301 : vector<32x64xf32> to vector<32x64xbf16>
    %303 = vector.extract_strided_slice %249 {offsets = [0, 256], sizes = [32, 128], strides = [1, 1]} : vector<32x512xbf16> to vector<32x128xbf16>
    %cst_91 = arith.constant dense<0.000000e+00> : vector<32x64xf32>
    %304 = tpu.matmul %303, %250, %cst_91 {dimension_numbers = #tpu.dot_dimension_numbers<[1], [0], [0], [1], [0, 0, 1, 1], [], []>} : vector<32x128xbf16>, vector<128x64xbf16>, vector<32x64xf32> -> vector<32x64xf32>
    %305 = vector.shape_cast %304 : vector<32x64xf32> to vector<1x32x64xf32>
    %cst_92 = arith.constant dense<0.000000e+00> : vector<1xf32>
    %306 = vector.multi_reduction <add>, %305, %cst_92 [1, 2] : vector<1x32x64xf32> to vector<1xf32>
    %307 = vector.shape_cast %306 : vector<1xf32> to vector<1x1x1xf32>
    %308 = vector.extract %307[0, 0, 0] : f32 from vector<1x1x1xf32>
    %cst_93 = arith.constant 2.048000e+03 : f32
    %309 = arith.divf %308, %cst_93 : f32
    %310 = arith.mulf %304, %304 : vector<32x64xf32>
    %311 = vector.shape_cast %310 : vector<32x64xf32> to vector<1x32x64xf32>
    %cst_94 = arith.constant dense<0.000000e+00> : vector<1xf32>
    %312 = vector.multi_reduction <add>, %311, %cst_94 [1, 2] : vector<1x32x64xf32> to vector<1xf32>
    %313 = vector.shape_cast %312 : vector<1xf32> to vector<1x1x1xf32>
    %314 = vector.extract %313[0, 0, 0] : f32 from vector<1x1x1xf32>
    %cst_95 = arith.constant 2.048000e+03 : f32
    %315 = arith.divf %314, %cst_95 : f32
    %316 = arith.mulf %309, %309 : f32
    %317 = arith.subf %315, %316 : f32
    %cst_96 = arith.constant 9.99999974E-6 : f32
    %318 = arith.addf %317, %cst_96 : f32
    %319 = math.rsqrt %318 : f32
    %320 = vector.broadcast %309 : f32 to vector<32x64xf32>
    %321 = arith.subf %304, %320 : vector<32x64xf32>
    %322 = vector.broadcast %319 : f32 to vector<32x64xf32>
    %323 = arith.mulf %321, %322 : vector<32x64xf32>
    %324 = arith.mulf %323, %252 : vector<32x64xf32>
    %325 = arith.addf %324, %254 : vector<32x64xf32>
    %326 = arith.truncf %325 : vector<32x64xf32> to vector<32x64xbf16>
    %327 = vector.extract_strided_slice %249 {offsets = [0, 384], sizes = [32, 128], strides = [1, 1]} : vector<32x512xbf16> to vector<32x128xbf16>
    %cst_97 = arith.constant dense<0.000000e+00> : vector<32x64xf32>
    %328 = tpu.matmul %327, %250, %cst_97 {dimension_numbers = #tpu.dot_dimension_numbers<[1], [0], [0], [1], [0, 0, 1, 1], [], []>} : vector<32x128xbf16>, vector<128x64xbf16>, vector<32x64xf32> -> vector<32x64xf32>
    %329 = vector.shape_cast %328 : vector<32x64xf32> to vector<1x32x64xf32>
    %cst_98 = arith.constant dense<0.000000e+00> : vector<1xf32>
    %330 = vector.multi_reduction <add>, %329, %cst_98 [1, 2] : vector<1x32x64xf32> to vector<1xf32>
    %331 = vector.shape_cast %330 : vector<1xf32> to vector<1x1x1xf32>
    %332 = vector.extract %331[0, 0, 0] : f32 from vector<1x1x1xf32>
    %cst_99 = arith.constant 2.048000e+03 : f32
    %333 = arith.divf %332, %cst_99 : f32
    %334 = arith.mulf %328, %328 : vector<32x64xf32>
    %335 = vector.shape_cast %334 : vector<32x64xf32> to vector<1x32x64xf32>
    %cst_100 = arith.constant dense<0.000000e+00> : vector<1xf32>
    %336 = vector.multi_reduction <add>, %335, %cst_100 [1, 2] : vector<1x32x64xf32> to vector<1xf32>
    %337 = vector.shape_cast %336 : vector<1xf32> to vector<1x1x1xf32>
    %338 = vector.extract %337[0, 0, 0] : f32 from vector<1x1x1xf32>
    %cst_101 = arith.constant 2.048000e+03 : f32
    %339 = arith.divf %338, %cst_101 : f32
    %340 = arith.mulf %333, %333 : f32
    %341 = arith.subf %339, %340 : f32
    %cst_102 = arith.constant 9.99999974E-6 : f32
    %342 = arith.addf %341, %cst_102 : f32
    %343 = math.rsqrt %342 : f32
    %344 = vector.broadcast %333 : f32 to vector<32x64xf32>
    %345 = arith.subf %328, %344 : vector<32x64xf32>
    %346 = vector.broadcast %343 : f32 to vector<32x64xf32>
    %347 = arith.mulf %345, %346 : vector<32x64xf32>
    %348 = arith.mulf %347, %252 : vector<32x64xf32>
    %349 = arith.addf %348, %254 : vector<32x64xf32>
    %350 = arith.truncf %349 : vector<32x64xf32> to vector<32x64xbf16>
    %351 = tpu.concatenate %278, %302, %326, %350 in 1 : vector<32x64xbf16>, vector<32x64xbf16>, vector<32x64xbf16>, vector<32x64xbf16> -> vector<32x256xbf16>
    %c0_103 = arith.constant 0 : index
    %c0_104 = arith.constant 0 : index
    %352 = vector.load %arg8[%c0_103, %c0_104] : memref<32x256xbf16, #tpu.memory_space<vmem>>, vector<32x256xbf16>
    tpu.vector_store %arg8[%c0_103, %c0_104], %351 {strides = array<i32>} : memref<32x256xbf16, #tpu.memory_space<vmem>>, vector<32x256xbf16>,
    return
  }
  func.func @transform_0(%arg0: i32) -> (i32, i32) {
    %c0_i32 = arith.constant 0 : i32
    %c0_i32_0 = arith.constant 0 : i32
    return %c0_i32, %arg0 : i32, i32
  }
  func.func @transform_1(%arg0: i32) -> (i32, i32) {
    %c0_i32 = arith.constant 0 : i32
    %c0_i32_0 = arith.constant 0 : i32
    %c0_i32_1 = arith.constant 0 : i32
    return %c0_i32, %c0_i32_0 : i32, i32
  }
  func.func @transform_2(%arg0: i32) -> (i32, i32, i32) {
    %c0_i32 = arith.constant 0 : i32
    %c0_i32_0 = arith.constant 0 : i32
    %c0_i32_1 = arith.constant 0 : i32
    %c0_i32_2 = arith.constant 0 : i32
    return %c0_i32, %c0_i32_0, %c0_i32_1 : i32, i32, i32
  }
  func.func @transform_3(%arg0: i32) -> (i32, i32) {
    %c0_i32 = arith.constant 0 : i32
    %c0_i32_0 = arith.constant 0 : i32
    %c0_i32_1 = arith.constant 0 : i32
    return %c0_i32, %c0_i32_0 : i32, i32
  }
  func.func @transform_4(%arg0: i32) -> (i32, i32, i32) {
    %c0_i32 = arith.constant 0 : i32
    %c0_i32_0 = arith.constant 0 : i32
    %c0_i32_1 = arith.constant 0 : i32
    %c0_i32_2 = arith.constant 0 : i32
    return %c0_i32, %c0_i32_0, %c0_i32_1 : i32, i32, i32
  }
  func.func @transform_5(%arg0: i32) -> (i32, i32, i32) {
    %c0_i32 = arith.constant 0 : i32
    %c0_i32_0 = arith.constant 0 : i32
    %c0_i32_1 = arith.constant 0 : i32
    %c0_i32_2 = arith.constant 0 : i32
    return %c0_i32, %c0_i32_0, %c0_i32_1 : i32, i32, i32
  }
  func.func @transform_6(%arg0: i32) -> (i32, i32) {
    %c0_i32 = arith.constant 0 : i32
    %c0_i32_0 = arith.constant 0 : i32
    %c0_i32_1 = arith.constant 0 : i32
    return %c0_i32, %c0_i32_0 : i32, i32
  }
  func.func @transform_7(%arg0: i32) -> (i32, i32) {
    %c0_i32 = arith.constant 0 : i32
    %c0_i32_0 = arith.constant 0 : i32
    return %c0_i32, %arg0 : i32, i32
  }
}

module attributes {stable_mosaic.version = 11 : i64} {
  func.func @fc_kernel(%arg0: i32, %arg1: memref<8x2048xbf16, #tpu.memory_space<vmem>>, %arg2: memref<2048x64xbf16, #tpu.memory_space<vmem>>, %arg3: memref<1x64xf32, #tpu.memory_space<vmem>>, %arg4: memref<64x4xbf16, #tpu.memory_space<vmem>>, %arg5: memref<1x4xf32, #tpu.memory_space<vmem>>, %arg6: memref<8x4xf32, #tpu.memory_space<vmem>>) attributes {dimension_semantics = [#tpu.dimension_semantics<parallel>], iteration_bounds = array<i64: 1>, scalar_prefetch = 0 : i64, scratch_operands = 0 : i64, tpu.core_type = #tpu.core_type<tc>, window_params = [{transform_indices = @transform_0, window_bounds = array<i64: 8, 2048>}, {pipeline_mode = #tpu.pipeline_mode<synchronous>, transform_indices = @transform_1, window_bounds = array<i64: 2048, 64>}, {pipeline_mode = #tpu.pipeline_mode<synchronous>, transform_indices = @transform_2, window_bounds = array<i64: 1, 64>}, {pipeline_mode = #tpu.pipeline_mode<synchronous>, transform_indices = @transform_3, window_bounds = array<i64: 64, 4>}, {pipeline_mode = #tpu.pipeline_mode<synchronous>, transform_indices = @transform_4, window_bounds = array<i64: 1, 4>}, {transform_indices = @transform_5, window_bounds = array<i64: 8, 4>}]} {
    %c0 = arith.constant 0 : index
    %c0_0 = arith.constant 0 : index
    %0 = vector.load %arg1[%c0, %c0_0] : memref<8x2048xbf16, #tpu.memory_space<vmem>>, vector<8x2048xbf16>
    %c0_1 = arith.constant 0 : index
    %c0_2 = arith.constant 0 : index
    %1 = vector.load %arg2[%c0_1, %c0_2] : memref<2048x64xbf16, #tpu.memory_space<vmem>>, vector<2048x64xbf16>
    %cst = arith.constant dense<0.000000e+00> : vector<8x64xf32>
    %2 = tpu.matmul %0, %1, %cst {dimension_numbers = #tpu.dot_dimension_numbers<[1], [0], [0], [1], [0, 0, 1, 1], [], []>} : vector<8x2048xbf16>, vector<2048x64xbf16>, vector<8x64xf32> -> vector<8x64xf32>
    %c0_3 = arith.constant 0 : index
    %c0_4 = arith.constant 0 : index
    %3 = vector.load %arg3[%c0_3, %c0_4] : memref<1x64xf32, #tpu.memory_space<vmem>>, vector<1x64xf32>
    %4 = vector.broadcast %3 : vector<1x64xf32> to vector<8x64xf32>
    %5 = arith.addf %2, %4 : vector<8x64xf32>
    %cst_5 = arith.constant 0.000000e+00 : f32
    %6 = vector.broadcast %cst_5 : f32 to vector<8x64xf32>
    %7 = arith.maximumf %5, %6 : vector<8x64xf32>
    %8 = arith.truncf %7 : vector<8x64xf32> to vector<8x64xbf16>
    %c0_6 = arith.constant 0 : index
    %c0_7 = arith.constant 0 : index
    %9 = vector.load %arg4[%c0_6, %c0_7] : memref<64x4xbf16, #tpu.memory_space<vmem>>, vector<64x4xbf16>
    %cst_8 = arith.constant dense<0.000000e+00> : vector<8x4xf32>
    %10 = tpu.matmul %8, %9, %cst_8 {dimension_numbers = #tpu.dot_dimension_numbers<[1], [0], [0], [1], [0, 0, 1, 1], [], []>} : vector<8x64xbf16>, vector<64x4xbf16>, vector<8x4xf32> -> vector<8x4xf32>
    %c0_9 = arith.constant 0 : index
    %c0_10 = arith.constant 0 : index
    %11 = vector.load %arg5[%c0_9, %c0_10] : memref<1x4xf32, #tpu.memory_space<vmem>>, vector<1x4xf32>
    %12 = vector.broadcast %11 : vector<1x4xf32> to vector<8x4xf32>
    %13 = arith.addf %10, %12 : vector<8x4xf32>
    %c0_11 = arith.constant 0 : index
    %c0_12 = arith.constant 0 : index
    %14 = vector.load %arg6[%c0_11, %c0_12] : memref<8x4xf32, #tpu.memory_space<vmem>>, vector<8x4xf32>
    tpu.vector_store %arg6[%c0_11, %c0_12], %13 {strides = array<i32>} : memref<8x4xf32, #tpu.memory_space<vmem>>, vector<8x4xf32>,
    return
  }
  func.func @transform_0(%arg0: i32) -> (i32, i32) {
    %c0_i32 = arith.constant 0 : i32
    %c0_i32_0 = arith.constant 0 : i32
    return %arg0, %c0_i32 : i32, i32
  }
  func.func @transform_1(%arg0: i32) -> (i32, i32) {
    %c0_i32 = arith.constant 0 : i32
    %c0_i32_0 = arith.constant 0 : i32
    %c0_i32_1 = arith.constant 0 : i32
    return %c0_i32, %c0_i32_0 : i32, i32
  }
  func.func @transform_2(%arg0: i32) -> (i32, i32) {
    %c0_i32 = arith.constant 0 : i32
    %c0_i32_0 = arith.constant 0 : i32
    %c0_i32_1 = arith.constant 0 : i32
    return %c0_i32, %c0_i32_0 : i32, i32
  }
  func.func @transform_3(%arg0: i32) -> (i32, i32) {
    %c0_i32 = arith.constant 0 : i32
    %c0_i32_0 = arith.constant 0 : i32
    %c0_i32_1 = arith.constant 0 : i32
    return %c0_i32, %c0_i32_0 : i32, i32
  }
  func.func @transform_4(%arg0: i32) -> (i32, i32) {
    %c0_i32 = arith.constant 0 : i32
    %c0_i32_0 = arith.constant 0 : i32
    %c0_i32_1 = arith.constant 0 : i32
    return %c0_i32, %c0_i32_0 : i32, i32
  }
  func.func @transform_5(%arg0: i32) -> (i32, i32) {
    %c0_i32 = arith.constant 0 : i32
    %c0_i32_0 = arith.constant 0 : i32
    return %arg0, %c0_i32 : i32, i32
  }
}

</mosaic_0001>

<llo_original>
// kernel: tile.9
$region0: #{tile.9}
  %s0 = inlined_call_operand.vmem [shape: f32[4,32,4,128], index: 0, kind: input, shape index: {}]
  %s1 = inlined_call_operand.vmem [shape: f32[4,32,512], index: 1, kind: output, shape index: {}]
  $region1: #{tile.9} parent=0
    #allocation0 [shape = 'u8[524288]{0}', space=vmem, size = 0x80000, scoped, tag = 'scoped mem for input reshape']
    %s3 = ssub.s32 16, 1
    %s4 = scalar_lea.vmem %s0, 508
    %v5 = vld [vmem:[%s4] sm:%s3]
    %s6 = scalar_lea.vmem [#allocation0], 1016
    %7 = vst [vmem:[%s6] sm:%s3] %v5
    %s8 = scalar_lea.vmem %s0, 504
    %v9 = vld [vmem:[%s8] sm:%s3]
    %s10 = scalar_lea.vmem [#allocation0], 1008
    %11 = vst [vmem:[%s10] sm:%s3] %v9
    %s12 = scalar_lea.vmem %s0, 500
    %v13 = vld [vmem:[%s12] sm:%s3]
    %s14 = scalar_lea.vmem [#allocation0], 1000
    %15 = vst [vmem:[%s14] sm:%s3] %v13
    %s16 = scalar_lea.vmem %s0, 496
    %v17 = vld [vmem:[%s16] sm:%s3]
    %s18 = scalar_lea.vmem [#allocation0], 992
    %19 = vst [vmem:[%s18] sm:%s3] %v17
    %s20 = scalar_lea.vmem %s0, 492
    %v21 = vld [vmem:[%s20] sm:%s3]
    %s22 = scalar_lea.vmem [#allocation0], 984
    %23 = vst [vmem:[%s22] sm:%s3] %v21
    %s24 = scalar_lea.vmem %s0, 488
    %v25 = vld [vmem:[%s24] sm:%s3]
    %s26 = scalar_lea.vmem [#allocation0], 976
    %27 = vst [vmem:[%s26] sm:%s3] %v25
    %s28 = scalar_lea.vmem %s0, 484
    %v29 = vld [vmem:[%s28] sm:%s3]
    %s30 = scalar_lea.vmem [#allocation0], 968
    %31 = vst [vmem:[%s30] sm:%s3] %v29
    %s32 = scalar_lea.vmem %s0, 480
    %v33 = vld [vmem:[%s32] sm:%s3]
    %s34 = scalar_lea.vmem [#allocation0], 960
    %35 = vst [vmem:[%s34] sm:%s3] %v33
    %s36 = scalar_lea.vmem %s0, 476
    %v37 = vld [vmem:[%s36] sm:%s3]
    %s38 = scalar_lea.vmem [#allocation0], 952
    %39 = vst [vmem:[%s38] sm:%s3] %v37
    %s40 = scalar_lea.vmem %s0, 472
    %v41 = vld [vmem:[%s40] sm:%s3]
    %s42 = scalar_lea.vmem [#allocation0], 944
    %43 = vst [vmem:[%s42] sm:%s3] %v41
    %s44 = scalar_lea.vmem %s0, 468
    %v45 = vld [vmem:[%s44] sm:%s3]
    %s46 = scalar_lea.vmem [#allocation0], 936
    %47 = vst [vmem:[%s46] sm:%s3] %v45
    %s48 = scalar_lea.vmem %s0, 464
    %v49 = vld [vmem:[%s48] sm:%s3]
    %s50 = scalar_lea.vmem [#allocation0], 928
    %51 = vst [vmem:[%s50] sm:%s3] %v49
    %s52 = scalar_lea.vmem %s0, 460
    %v53 = vld [vmem:[%s52] sm:%s3]
    %s54 = scalar_lea.vmem [#allocation0], 920
    %55 = vst [vmem:[%s54] sm:%s3] %v53
    %s56 = scalar_lea.vmem %s0, 456
    %v57 = vld [vmem:[%s56] sm:%s3]
    %s58 = scalar_lea.vmem [#allocation0], 912
    %59 = vst [vmem:[%s58] sm:%s3] %v57
    %s60 = scalar_lea.vmem %s0, 452
    %v61 = vld [vmem:[%s60] sm:%s3]
    %s62 = scalar_lea.vmem [#allocation0], 904
    %63 = vst [vmem:[%s62] sm:%s3] %v61
    %s64 = scalar_lea.vmem %s0, 448
    %v65 = vld [vmem:[%s64] sm:%s3]
    %s66 = scalar_lea.vmem [#allocation0], 896
    %67 = vst [vmem:[%s66] sm:%s3] %v65
    %s68 = scalar_lea.vmem %s0, 444
    %v69 = vld [vmem:[%s68] sm:%s3]
    %s70 = scalar_lea.vmem [#allocation0], 888
    %71 = vst [vmem:[%s70] sm:%s3] %v69
    %s72 = scalar_lea.vmem %s0, 440
    %v73 = vld [vmem:[%s72] sm:%s3]
    %s74 = scalar_lea.vmem [#allocation0], 880
    %75 = vst [vmem:[%s74] sm:%s3] %v73
    %s76 = scalar_lea.vmem %s0, 436
    %v77 = vld [vmem:[%s76] sm:%s3]
    %s78 = scalar_lea.vmem [#allocation0], 872
    %79 = vst [vmem:[%s78] sm:%s3] %v77
    %s80 = scalar_lea.vmem %s0, 432
    %v81 = vld [vmem:[%s80] sm:%s3]
    %s82 = scalar_lea.vmem [#allocation0], 864
    %83 = vst [vmem:[%s82] sm:%s3] %v81
    %s84 = scalar_lea.vmem %s0, 428
    %v85 = vld [vmem:[%s84] sm:%s3]
    %s86 = scalar_lea.vmem [#allocation0], 856
    %87 = vst [vmem:[%s86] sm:%s3] %v85
    %s88 = scalar_lea.vmem %s0, 424
    %v89 = vld [vmem:[%s88] sm:%s3]
    %s90 = scalar_lea.vmem [#allocation0], 848
    %91 = vst [vmem:[%s90] sm:%s3] %v89
    %s92 = scalar_lea.vmem %s0, 420
    %v93 = vld [vmem:[%s92] sm:%s3]
    %s94 = scalar_lea.vmem [#allocation0], 840
    %95 = vst [vmem:[%s94] sm:%s3] %v93
    %s96 = scalar_lea.vmem %s0, 416
    %v97 = vld [vmem:[%s96] sm:%s3]
    %s98 = scalar_lea.vmem [#allocation0], 832
    %99 = vst [vmem:[%s98] sm:%s3] %v97
    %s100 = scalar_lea.vmem %s0, 412
    %v101 = vld [vmem:[%s100] sm:%s3]
    %s102 = scalar_lea.vmem [#allocation0], 824
    %103 = vst [vmem:[%s102] sm:%s3] %v101
    %s104 = scalar_lea.vmem %s0, 408
    %v105 = vld [vmem:[%s104] sm:%s3]
    %s106 = scalar_lea.vmem [#allocation0], 816
    %107 = vst [vmem:[%s106] sm:%s3] %v105
    %s108 = scalar_lea.vmem %s0, 404
    %v109 = vld [vmem:[%s108] sm:%s3]
    %s110 = scalar_lea.vmem [#allocation0], 808
    %111 = vst [vmem:[%s110] sm:%s3] %v109
    %s112 = scalar_lea.vmem %s0, 400
    %v113 = vld [vmem:[%s112] sm:%s3]
    %s114 = scalar_lea.vmem [#allocation0], 800
    %115 = vst [vmem:[%s114] sm:%s3] %v113
    %s116 = scalar_lea.vmem %s0, 396
    %v117 = vld [vmem:[%s116] sm:%s3]
    %s118 = scalar_lea.vmem [#allocation0], 792
    %119 = vst [vmem:[%s118] sm:%s3] %v117
    %s120 = scalar_lea.vmem %s0, 392
    %v121 = vld [vmem:[%s120] sm:%s3]
    %s122 = scalar_lea.vmem [#allocation0], 784
    %123 = vst [vmem:[%s122] sm:%s3] %v121
    %s124 = scalar_lea.vmem %s0, 388
    %v125 = vld [vmem:[%s124] sm:%s3]
    %s126 = scalar_lea.vmem [#allocation0], 776
    %127 = vst [vmem:[%s126] sm:%s3] %v125
    %s128 = scalar_lea.vmem %s0, 384
    %v129 = vld [vmem:[%s128] sm:%s3]
    %s130 = scalar_lea.vmem [#allocation0], 768
    %131 = vst [vmem:[%s130] sm:%s3] %v129
    %s132 = scalar_lea.vmem %s0, 380
    %v133 = vld [vmem:[%s132] sm:%s3]
    %s134 = scalar_lea.vmem [#allocation0], 760
    %135 = vst [vmem:[%s134] sm:%s3] %v133
    %s136 = scalar_lea.vmem %s0, 376
    %v137 = vld [vmem:[%s136] sm:%s3]
    %s138 = scalar_lea.vmem [#allocation0], 752
    %139 = vst [vmem:[%s138] sm:%s3] %v137
    %s140 = scalar_lea.vmem %s0, 372
    %v141 = vld [vmem:[%s140] sm:%s3]
    %s142 = scalar_lea.vmem [#allocation0], 744
    %143 = vst [vmem:[%s142] sm:%s3] %v141
    %s144 = scalar_lea.vmem %s0, 368
    %v145 = vld [vmem:[%s144] sm:%s3]
    %s146 = scalar_lea.vmem [#allocation0], 736
    %147 = vst [vmem:[%s146] sm:%s3] %v145
    %s148 = scalar_lea.vmem %s0, 364
    %v149 = vld [vmem:[%s148] sm:%s3]
    %s150 = scalar_lea.vmem [#allocation0], 728
    %151 = vst [vmem:[%s150] sm:%s3] %v149
    %s152 = scalar_lea.vmem %s0, 360
    %v153 = vld [vmem:[%s152] sm:%s3]
    %s154 = scalar_lea.vmem [#allocation0], 720
    %155 = vst [vmem:[%s154] sm:%s3] %v153
    %s156 = scalar_lea.vmem %s0, 356
    %v157 = vld [vmem:[%s156] sm:%s3]
    %s158 = scalar_lea.vmem [#allocation0], 712
    %159 = vst [vmem:[%s158] sm:%s3] %v157
    %s160 = scalar_lea.vmem %s0, 352
    %v161 = vld [vmem:[%s160] sm:%s3]
    %s162 = scalar_lea.vmem [#allocation0], 704
    %163 = vst [vmem:[%s162] sm:%s3] %v161
    %s164 = scalar_lea.vmem %s0, 348
    %v165 = vld [vmem:[%s164] sm:%s3]
    %s166 = scalar_lea.vmem [#allocation0], 696
    %167 = vst [vmem:[%s166] sm:%s3] %v165
    %s168 = scalar_lea.vmem %s0, 344
    %v169 = vld [vmem:[%s168] sm:%s3]
    %s170 = scalar_lea.vmem [#allocation0], 688
    %171 = vst [vmem:[%s170] sm:%s3] %v169
    %s172 = scalar_lea.vmem %s0, 340
    %v173 = vld [vmem:[%s172] sm:%s3]
    %s174 = scalar_lea.vmem [#allocation0], 680
    %175 = vst [vmem:[%s174] sm:%s3] %v173
    %s176 = scalar_lea.vmem %s0, 336
    %v177 = vld [vmem:[%s176] sm:%s3]
    %s178 = scalar_lea.vmem [#allocation0], 672
    %179 = vst [vmem:[%s178] sm:%s3] %v177
    %s180 = scalar_lea.vmem %s0, 332
    %v181 = vld [vmem:[%s180] sm:%s3]
    %s182 = scalar_lea.vmem [#allocation0], 664
    %183 = vst [vmem:[%s182] sm:%s3] %v181
    %s184 = scalar_lea.vmem %s0, 328
    %v185 = vld [vmem:[%s184] sm:%s3]
    %s186 = scalar_lea.vmem [#allocation0], 656
    %187 = vst [vmem:[%s186] sm:%s3] %v185
    %s188 = scalar_lea.vmem %s0, 324
    %v189 = vld [vmem:[%s188] sm:%s3]
    %s190 = scalar_lea.vmem [#allocation0], 648
    %191 = vst [vmem:[%s190] sm:%s3] %v189
    %s192 = scalar_lea.vmem %s0, 320
    %v193 = vld [vmem:[%s192] sm:%s3]
    %s194 = scalar_lea.vmem [#allocation0], 640
    %195 = vst [vmem:[%s194] sm:%s3] %v193
    %s196 = scalar_lea.vmem %s0, 316
    %v197 = vld [vmem:[%s196] sm:%s3]
    %s198 = scalar_lea.vmem [#allocation0], 632
    %199 = vst [vmem:[%s198] sm:%s3] %v197
    %s200 = scalar_lea.vmem %s0, 312
    %v201 = vld [vmem:[%s200] sm:%s3]
    %s202 = scalar_lea.vmem [#allocation0], 624
    %203 = vst [vmem:[%s202] sm:%s3] %v201
    %s204 = scalar_lea.vmem %s0, 308
    %v205 = vld [vmem:[%s204] sm:%s3]
    %s206 = scalar_lea.vmem [#allocation0], 616
    %207 = vst [vmem:[%s206] sm:%s3] %v205
    %s208 = scalar_lea.vmem %s0, 304
    %v209 = vld [vmem:[%s208] sm:%s3]
    %s210 = scalar_lea.vmem [#allocation0], 608
    %211 = vst [vmem:[%s210] sm:%s3] %v209
    %s212 = scalar_lea.vmem %s0, 300
    %v213 = vld [vmem:[%s212] sm:%s3]
    %s214 = scalar_lea.vmem [#allocation0], 600
    %215 = vst [vmem:[%s214] sm:%s3] %v213
    %s216 = scalar_lea.vmem %s0, 296
    %v217 = vld [vmem:[%s216] sm:%s3]
    %s218 = scalar_lea.vmem [#allocation0], 592
    %219 = vst [vmem:[%s218] sm:%s3] %v217
    %s220 = scalar_lea.vmem %s0, 292
    %v221 = vld [vmem:[%s220] sm:%s3]
    %s222 = scalar_lea.vmem [#allocation0], 584
    %223 = vst [vmem:[%s222] sm:%s3] %v221
    %s224 = scalar_lea.vmem %s0, 288
    %v225 = vld [vmem:[%s224] sm:%s3]
    %s226 = scalar_lea.vmem [#allocation0], 576
    %227 = vst [vmem:[%s226] sm:%s3] %v225
    %s228 = scalar_lea.vmem %s0, 284
    %v229 = vld [vmem:[%s228] sm:%s3]
    %s230 = scalar_lea.vmem [#allocation0], 568
    %231 = vst [vmem:[%s230] sm:%s3] %v229
    %s232 = scalar_lea.vmem %s0, 280
    %v233 = vld [vmem:[%s232] sm:%s3]
    %s234 = scalar_lea.vmem [#allocation0], 560
    %235 = vst [vmem:[%s234] sm:%s3] %v233
    %s236 = scalar_lea.vmem %s0, 276
    %v237 = vld [vmem:[%s236] sm:%s3]
    %s238 = scalar_lea.vmem [#allocation0], 552
    %239 = vst [vmem:[%s238] sm:%s3] %v237
    %s240 = scalar_lea.vmem %s0, 272
    %v241 = vld [vmem:[%s240] sm:%s3]
    %s242 = scalar_lea.vmem [#allocation0], 544
    %243 = vst [vmem:[%s242] sm:%s3] %v241
    %s244 = scalar_lea.vmem %s0, 268
    %v245 = vld [vmem:[%s244] sm:%s3]
    %s246 = scalar_lea.vmem [#allocation0], 536
    %247 = vst [vmem:[%s246] sm:%s3] %v245
    %s248 = scalar_lea.vmem %s0, 264
    %v249 = vld [vmem:[%s248] sm:%s3]
    %s250 = scalar_lea.vmem [#allocation0], 528
    %251 = vst [vmem:[%s250] sm:%s3] %v249
    %s252 = scalar_lea.vmem %s0, 260
    %v253 = vld [vmem:[%s252] sm:%s3]
    %s254 = scalar_lea.vmem [#allocation0], 520
    %255 = vst [vmem:[%s254] sm:%s3] %v253
    %s256 = scalar_lea.vmem %s0, 256
    %v257 = vld [vmem:[%s256] sm:%s3]
    %s258 = scalar_lea.vmem [#allocation0], 512
    %259 = vst [vmem:[%s258] sm:%s3] %v257
    %s260 = scalar_lea.vmem %s0, 252
    %v261 = vld [vmem:[%s260] sm:%s3]
    %s262 = scalar_lea.vmem [#allocation0], 504
    %263 = vst [vmem:[%s262] sm:%s3] %v261
    %s264 = scalar_lea.vmem %s0, 248
    %v265 = vld [vmem:[%s264] sm:%s3]
    %s266 = scalar_lea.vmem [#allocation0], 496
    %267 = vst [vmem:[%s266] sm:%s3] %v265
    %s268 = scalar_lea.vmem %s0, 244
    %v269 = vld [vmem:[%s268] sm:%s3]
    %s270 = scalar_lea.vmem [#allocation0], 488
    %271 = vst [vmem:[%s270] sm:%s3] %v269
    %s272 = scalar_lea.vmem %s0, 240
    %v273 = vld [vmem:[%s272] sm:%s3]
    %s274 = scalar_lea.vmem [#allocation0], 480
    %275 = vst [vmem:[%s274] sm:%s3] %v273
    %s276 = scalar_lea.vmem %s0, 236
    %v277 = vld [vmem:[%s276] sm:%s3]
    %s278 = scalar_lea.vmem [#allocation0], 472
    %279 = vst [vmem:[%s278] sm:%s3] %v277
    %s280 = scalar_lea.vmem %s0, 232
    %v281 = vld [vmem:[%s280] sm:%s3]
    %s282 = scalar_lea.vmem [#allocation0], 464
    %283 = vst [vmem:[%s282] sm:%s3] %v281
    %s284 = scalar_lea.vmem %s0, 228
    %v285 = vld [vmem:[%s284] sm:%s3]
    %s286 = scalar_lea.vmem [#allocation0], 456
    %287 = vst [vmem:[%s286] sm:%s3] %v285
    %s288 = scalar_lea.vmem %s0, 224
    %v289 = vld [vmem:[%s288] sm:%s3]
    %s290 = scalar_lea.vmem [#allocation0], 448
    %291 = vst [vmem:[%s290] sm:%s3] %v289
    %s292 = scalar_lea.vmem %s0, 220
    %v293 = vld [vmem:[%s292] sm:%s3]
    %s294 = scalar_lea.vmem [#allocation0], 440
    %295 = vst [vmem:[%s294] sm:%s3] %v293
    %s296 = scalar_lea.vmem %s0, 216
    %v297 = vld [vmem:[%s296] sm:%s3]
    %s298 = scalar_lea.vmem [#allocation0], 432
    %299 = vst [vmem:[%s298] sm:%s3] %v297
    %s300 = scalar_lea.vmem %s0, 212
    %v301 = vld [vmem:[%s300] sm:%s3]
    %s302 = scalar_lea.vmem [#allocation0], 424
    %303 = vst [vmem:[%s302] sm:%s3] %v301
    %s304 = scalar_lea.vmem %s0, 208
    %v305 = vld [vmem:[%s304] sm:%s3]
    %s306 = scalar_lea.vmem [#allocation0], 416
    %307 = vst [vmem:[%s306] sm:%s3] %v305
    %s308 = scalar_lea.vmem %s0, 204
    %v309 = vld [vmem:[%s308] sm:%s3]
    %s310 = scalar_lea.vmem [#allocation0], 408
    %311 = vst [vmem:[%s310] sm:%s3] %v309
    %s312 = scalar_lea.vmem %s0, 200
    %v313 = vld [vmem:[%s312] sm:%s3]
    %s314 = scalar_lea.vmem [#allocation0], 400
    %315 = vst [vmem:[%s314] sm:%s3] %v313
    %s316 = scalar_lea.vmem %s0, 196
    %v317 = vld [vmem:[%s316] sm:%s3]
    %s318 = scalar_lea.vmem [#allocation0], 392
    %319 = vst [vmem:[%s318] sm:%s3] %v317
    %s320 = scalar_lea.vmem %s0, 192
    %v321 = vld [vmem:[%s320] sm:%s3]
    %s322 = scalar_lea.vmem [#allocation0], 384
    %323 = vst [vmem:[%s322] sm:%s3] %v321
    %s324 = scalar_lea.vmem %s0, 188
    %v325 = vld [vmem:[%s324] sm:%s3]
    %s326 = scalar_lea.vmem [#allocation0], 376
    %327 = vst [vmem:[%s326] sm:%s3] %v325
    %s328 = scalar_lea.vmem %s0, 184
    %v329 = vld [vmem:[%s328] sm:%s3]
    %s330 = scalar_lea.vmem [#allocation0], 368
    %331 = vst [vmem:[%s330] sm:%s3] %v329
    %s332 = scalar_lea.vmem %s0, 180
    %v333 = vld [vmem:[%s332] sm:%s3]
    %s334 = scalar_lea.vmem [#allocation0], 360
    %335 = vst [vmem:[%s334] sm:%s3] %v333
    %s336 = scalar_lea.vmem %s0, 176
    %v337 = vld [vmem:[%s336] sm:%s3]
    %s338 = scalar_lea.vmem [#allocation0], 352
    %339 = vst [vmem:[%s338] sm:%s3] %v337
    %s340 = scalar_lea.vmem %s0, 172
    %v341 = vld [vmem:[%s340] sm:%s3]
    %s342 = scalar_lea.vmem [#allocation0], 344
    %343 = vst [vmem:[%s342] sm:%s3] %v341
    %s344 = scalar_lea.vmem %s0, 168
    %v345 = vld [vmem:[%s344] sm:%s3]
    %s346 = scalar_lea.vmem [#allocation0], 336
    %347 = vst [vmem:[%s346] sm:%s3] %v345
    %s348 = scalar_lea.vmem %s0, 164
    %v349 = vld [vmem:[%s348] sm:%s3]
    %s350 = scalar_lea.vmem [#allocation0], 328
    %351 = vst [vmem:[%s350] sm:%s3] %v349
    %s352 = scalar_lea.vmem %s0, 160
    %v353 = vld [vmem:[%s352] sm:%s3]
    %s354 = scalar_lea.vmem [#allocation0], 320
    %355 = vst [vmem:[%s354] sm:%s3] %v353
    %s356 = scalar_lea.vmem %s0, 156
    %v357 = vld [vmem:[%s356] sm:%s3]
    %s358 = scalar_lea.vmem [#allocation0], 312
    %359 = vst [vmem:[%s358] sm:%s3] %v357
    %s360 = scalar_lea.vmem %s0, 152
    %v361 = vld [vmem:[%s360] sm:%s3]
    %s362 = scalar_lea.vmem [#allocation0], 304
    %363 = vst [vmem:[%s362] sm:%s3] %v361
    %s364 = scalar_lea.vmem %s0, 148
    %v365 = vld [vmem:[%s364] sm:%s3]
    %s366 = scalar_lea.vmem [#allocation0], 296
    %367 = vst [vmem:[%s366] sm:%s3] %v365
    %s368 = scalar_lea.vmem %s0, 144
    %v369 = vld [vmem:[%s368] sm:%s3]
    %s370 = scalar_lea.vmem [#allocation0], 288
    %371 = vst [vmem:[%s370] sm:%s3] %v369
    %s372 = scalar_lea.vmem %s0, 140
    %v373 = vld [vmem:[%s372] sm:%s3]
    %s374 = scalar_lea.vmem [#allocation0], 280
    %375 = vst [vmem:[%s374] sm:%s3] %v373
    %s376 = scalar_lea.vmem %s0, 136
    %v377 = vld [vmem:[%s376] sm:%s3]
    %s378 = scalar_lea.vmem [#allocation0], 272
    %379 = vst [vmem:[%s378] sm:%s3] %v377
    %s380 = scalar_lea.vmem %s0, 132
    %v381 = vld [vmem:[%s380] sm:%s3]
    %s382 = scalar_lea.vmem [#allocation0], 264
    %383 = vst [vmem:[%s382] sm:%s3] %v381
    %s384 = scalar_lea.vmem %s0, 128
    %v385 = vld [vmem:[%s384] sm:%s3]
    %s386 = scalar_lea.vmem [#allocation0], 256
    %387 = vst [vmem:[%s386] sm:%s3] %v385
    %s388 = scalar_lea.vmem %s0, 124
    %v389 = vld [vmem:[%s388] sm:%s3]
    %s390 = scalar_lea.vmem [#allocation0], 248
    %391 = vst [vmem:[%s390] sm:%s3] %v389
    %s392 = scalar_lea.vmem %s0, 120
    %v393 = vld [vmem:[%s392] sm:%s3]
    %s394 = scalar_lea.vmem [#allocation0], 240
    %395 = vst [vmem:[%s394] sm:%s3] %v393
    %s396 = scalar_lea.vmem %s0, 116
    %v397 = vld [vmem:[%s396] sm:%s3]
    %s398 = scalar_lea.vmem [#allocation0], 232
    %399 = vst [vmem:[%s398] sm:%s3] %v397
    %s400 = scalar_lea.vmem %s0, 112
    %v401 = vld [vmem:[%s400] sm:%s3]
    %s402 = scalar_lea.vmem [#allocation0], 224
    %403 = vst [vmem:[%s402] sm:%s3] %v401
    %s404 = scalar_lea.vmem %s0, 108
    %v405 = vld [vmem:[%s404] sm:%s3]
    %s406 = scalar_lea.vmem [#allocation0], 216
    %407 = vst [vmem:[%s406] sm:%s3] %v405
    %s408 = scalar_lea.vmem %s0, 104
    %v409 = vld [vmem:[%s408] sm:%s3]
    %s410 = scalar_lea.vmem [#allocation0], 208
    %411 = vst [vmem:[%s410] sm:%s3] %v409
    %s412 = scalar_lea.vmem %s0, 100
    %v413 = vld [vmem:[%s412] sm:%s3]
    %s414 = scalar_lea.vmem [#allocation0], 200
    %415 = vst [vmem:[%s414] sm:%s3] %v413
    %s416 = scalar_lea.vmem %s0, 96
    %v417 = vld [vmem:[%s416] sm:%s3]
    %s418 = scalar_lea.vmem [#allocation0], 192
    %419 = vst [vmem:[%s418] sm:%s3] %v417
    %s420 = scalar_lea.vmem %s0, 92
    %v421 = vld [vmem:[%s420] sm:%s3]
    %s422 = scalar_lea.vmem [#allocation0], 184
    %423 = vst [vmem:[%s422] sm:%s3] %v421
    %s424 = scalar_lea.vmem %s0, 88
    %v425 = vld [vmem:[%s424] sm:%s3]
    %s426 = scalar_lea.vmem [#allocation0], 176
    %427 = vst [vmem:[%s426] sm:%s3] %v425
    %s428 = scalar_lea.vmem %s0, 84
    %v429 = vld [vmem:[%s428] sm:%s3]
    %s430 = scalar_lea.vmem [#allocation0], 168
    %431 = vst [vmem:[%s430] sm:%s3] %v429
    %s432 = scalar_lea.vmem %s0, 80
    %v433 = vld [vmem:[%s432] sm:%s3]
    %s434 = scalar_lea.vmem [#allocation0], 160
    %435 = vst [vmem:[%s434] sm:%s3] %v433
    %s436 = scalar_lea.vmem %s0, 76
    %v437 = vld [vmem:[%s436] sm:%s3]
    %s438 = scalar_lea.vmem [#allocation0], 152
    %439 = vst [vmem:[%s438] sm:%s3] %v437
    %s440 = scalar_lea.vmem %s0, 72
    %v441 = vld [vmem:[%s440] sm:%s3]
    %s442 = scalar_lea.vmem [#allocation0], 144
    %443 = vst [vmem:[%s442] sm:%s3] %v441
    %s444 = scalar_lea.vmem %s0, 68
    %v445 = vld [vmem:[%s444] sm:%s3]
    %s446 = scalar_lea.vmem [#allocation0], 136
    %447 = vst [vmem:[%s446] sm:%s3] %v445
    %s448 = scalar_lea.vmem %s0, 64
    %v449 = vld [vmem:[%s448] sm:%s3]
    %s450 = scalar_lea.vmem [#allocation0], 128
    %451 = vst [vmem:[%s450] sm:%s3] %v449
    %s452 = scalar_lea.vmem %s0, 60
    %v453 = vld [vmem:[%s452] sm:%s3]
    %s454 = scalar_lea.vmem [#allocation0], 120
    %455 = vst [vmem:[%s454] sm:%s3] %v453
    %s456 = scalar_lea.vmem %s0, 56
    %v457 = vld [vmem:[%s456] sm:%s3]
    %s458 = scalar_lea.vmem [#allocation0], 112
    %459 = vst [vmem:[%s458] sm:%s3] %v457
    %s460 = scalar_lea.vmem %s0, 52
    %v461 = vld [vmem:[%s460] sm:%s3]
    %s462 = scalar_lea.vmem [#allocation0], 104
    %463 = vst [vmem:[%s462] sm:%s3] %v461
    %s464 = scalar_lea.vmem %s0, 48
    %v465 = vld [vmem:[%s464] sm:%s3]
    %s466 = scalar_lea.vmem [#allocation0], 96
    %467 = vst [vmem:[%s466] sm:%s3] %v465
    %s468 = scalar_lea.vmem %s0, 44
    %v469 = vld [vmem:[%s468] sm:%s3]
    %s470 = scalar_lea.vmem [#allocation0], 88
    %471 = vst [vmem:[%s470] sm:%s3] %v469
    %s472 = scalar_lea.vmem %s0, 40
    %v473 = vld [vmem:[%s472] sm:%s3]
    %s474 = scalar_lea.vmem [#allocation0], 80
    %475 = vst [vmem:[%s474] sm:%s3] %v473
    %s476 = scalar_lea.vmem %s0, 36
    %v477 = vld [vmem:[%s476] sm:%s3]
    %s478 = scalar_lea.vmem [#allocation0], 72
    %479 = vst [vmem:[%s478] sm:%s3] %v477
    %s480 = scalar_lea.vmem %s0, 32
    %v481 = vld [vmem:[%s480] sm:%s3]
    %s482 = scalar_lea.vmem [#allocation0], 64
    %483 = vst [vmem:[%s482] sm:%s3] %v481
    %s484 = scalar_lea.vmem %s0, 28
    %v485 = vld [vmem:[%s484] sm:%s3]
    %s486 = scalar_lea.vmem [#allocation0], 56
    %487 = vst [vmem:[%s486] sm:%s3] %v485
    %s488 = scalar_lea.vmem %s0, 24
    %v489 = vld [vmem:[%s488] sm:%s3]
    %s490 = scalar_lea.vmem [#allocation0], 48
    %491 = vst [vmem:[%s490] sm:%s3] %v489
    %s492 = scalar_lea.vmem %s0, 20
    %v493 = vld [vmem:[%s492] sm:%s3]
    %s494 = scalar_lea.vmem [#allocation0], 40
    %495 = vst [vmem:[%s494] sm:%s3] %v493
    %s496 = scalar_lea.vmem %s0, 16
    %v497 = vld [vmem:[%s496] sm:%s3]
    %s498 = scalar_lea.vmem [#allocation0], 32
    %499 = vst [vmem:[%s498] sm:%s3] %v497
    %s500 = scalar_lea.vmem %s0, 12
    %v501 = vld [vmem:[%s500] sm:%s3]
    %s502 = scalar_lea.vmem [#allocation0], 24
    %503 = vst [vmem:[%s502] sm:%s3] %v501
    %s504 = scalar_lea.vmem %s0, 8
    %v505 = vld [vmem:[%s504] sm:%s3]
    %s506 = scalar_lea.vmem [#allocation0], 16
    %507 = vst [vmem:[%s506] sm:%s3] %v505
    %s508 = scalar_lea.vmem %s0, 4
    %v509 = vld [vmem:[%s508] sm:%s3]
    %s510 = scalar_lea.vmem [#allocation0], 8
    %511 = vst [vmem:[%s510] sm:%s3] %v509
    %v512 = vld [vmem:[%s0] sm:%s3]
    %513 = vst [vmem:[#allocation0] sm:%s3] %v512
    %v514 = vld [vmem:[#allocation0] sm:$0xf]
    %515 = vst [vmem:[%s1] ss:$8 sm:$0xf] %v514
    %s516 = scalar_lea.vmem [#allocation0], 8
    %v517 = vld [vmem:[%s516] sm:$0xf]
    %s518 = scalar_lea.vmem %s1, 1
    %519 = vst [vmem:[%s518] ss:$8 sm:$0xf] %v517
    %s520 = scalar_lea.vmem [#allocation0], 16
    %v521 = vld [vmem:[%s520] sm:$0xf]
    %s522 = scalar_lea.vmem %s1, 2
    %523 = vst [vmem:[%s522] ss:$8 sm:$0xf] %v521
    %s524 = scalar_lea.vmem [#allocation0], 24
    %v525 = vld [vmem:[%s524] sm:$0xf]
    %s526 = scalar_lea.vmem %s1, 3
    %527 = vst [vmem:[%s526] ss:$8 sm:$0xf] %v525
    %s528 = scalar_lea.vmem [#allocation0], 32
    %v529 = vld [vmem:[%s528] sm:$0xf]
    %s530 = scalar_lea.vmem %s1, 4
    %531 = vst [vmem:[%s530] ss:$8 sm:$0xf] %v529
    %s532 = scalar_lea.vmem [#allocation0], 40
    %v533 = vld [vmem:[%s532] sm:$0xf]
    %s534 = scalar_lea.vmem %s1, 5
    %535 = vst [vmem:[%s534] ss:$8 sm:$0xf] %v533
    %s536 = scalar_lea.vmem [#allocation0], 48
    %v537 = vld [vmem:[%s536] sm:$0xf]
    %s538 = scalar_lea.vmem %s1, 6
    %539 = vst [vmem:[%s538] ss:$8 sm:$0xf] %v537
    %s540 = scalar_lea.vmem [#allocation0], 56
    %v541 = vld [vmem:[%s540] sm:$0xf]
    %s542 = scalar_lea.vmem %s1, 7
    %543 = vst [vmem:[%s542] ss:$8 sm:$0xf] %v541
    %s544 = scalar_lea.vmem [#allocation0], 64
    %v545 = vld [vmem:[%s544] sm:$0xf]
    %s546 = scalar_lea.vmem %s1, 32
    %547 = vst [vmem:[%s546] ss:$8 sm:$0xf] %v545
    %s548 = scalar_lea.vmem [#allocation0], 72
    %v549 = vld [vmem:[%s548] sm:$0xf]
    %s550 = scalar_lea.vmem %s1, 33
    %551 = vst [vmem:[%s550] ss:$8 sm:$0xf] %v549
    %s552 = scalar_lea.vmem [#allocation0], 80
    %v553 = vld [vmem:[%s552] sm:$0xf]
    %s554 = scalar_lea.vmem %s1, 34
    %555 = vst [vmem:[%s554] ss:$8 sm:$0xf] %v553
    %s556 = scalar_lea.vmem [#allocation0], 88
    %v557 = vld [vmem:[%s556] sm:$0xf]
    %s558 = scalar_lea.vmem %s1, 35
    %559 = vst [vmem:[%s558] ss:$8 sm:$0xf] %v557
    %s560 = scalar_lea.vmem [#allocation0], 96
    %v561 = vld [vmem:[%s560] sm:$0xf]
    %s562 = scalar_lea.vmem %s1, 36
    %563 = vst [vmem:[%s562] ss:$8 sm:$0xf] %v561
    %s564 = scalar_lea.vmem [#allocation0], 104
    %v565 = vld [vmem:[%s564] sm:$0xf]
    %s566 = scalar_lea.vmem %s1, 37
    %567 = vst [vmem:[%s566] ss:$8 sm:$0xf] %v565
    %s568 = scalar_lea.vmem [#allocation0], 112
    %v569 = vld [vmem:[%s568] sm:$0xf]
    %s570 = scalar_lea.vmem %s1, 38
    %571 = vst [vmem:[%s570] ss:$8 sm:$0xf] %v569
    %s572 = scalar_lea.vmem [#allocation0], 120
    %v573 = vld [vmem:[%s572] sm:$0xf]
    %s574 = scalar_lea.vmem %s1, 39
    %575 = vst [vmem:[%s574] ss:$8 sm:$0xf] %v573
    %s576 = scalar_lea.vmem [#allocation0], 128
    %v577 = vld [vmem:[%s576] sm:$0xf]
    %s578 = scalar_lea.vmem %s1, 64
    %579 = vst [vmem:[%s578] ss:$8 sm:$0xf] %v577
    %s580 = scalar_lea.vmem [#allocation0], 136
    %v581 = vld [vmem:[%s580] sm:$0xf]
    %s582 = scalar_lea.vmem %s1, 65
    %583 = vst [vmem:[%s582] ss:$8 sm:$0xf] %v581
    %s584 = scalar_lea.vmem [#allocation0], 144
    %v585 = vld [vmem:[%s584] sm:$0xf]
    %s586 = scalar_lea.vmem %s1, 66
    %587 = vst [vmem:[%s586] ss:$8 sm:$0xf] %v585
    %s588 = scalar_lea.vmem [#allocation0], 152
    %v589 = vld [vmem:[%s588] sm:$0xf]
    %s590 = scalar_lea.vmem %s1, 67
    %591 = vst [vmem:[%s590] ss:$8 sm:$0xf] %v589
    %s592 = scalar_lea.vmem [#allocation0], 160
    %v593 = vld [vmem:[%s592] sm:$0xf]
    %s594 = scalar_lea.vmem %s1, 68
    %595 = vst [vmem:[%s594] ss:$8 sm:$0xf] %v593
    %s596 = scalar_lea.vmem [#allocation0], 168
    %v597 = vld [vmem:[%s596] sm:$0xf]
    %s598 = scalar_lea.vmem %s1, 69
    %599 = vst [vmem:[%s598] ss:$8 sm:$0xf] %v597
    %s600 = scalar_lea.vmem [#allocation0], 176
    %v601 = vld [vmem:[%s600] sm:$0xf]
    %s602 = scalar_lea.vmem %s1, 70
    %603 = vst [vmem:[%s602] ss:$8 sm:$0xf] %v601
    %s604 = scalar_lea.vmem [#allocation0], 184
    %v605 = vld [vmem:[%s604] sm:$0xf]
    %s606 = scalar_lea.vmem %s1, 71
    %607 = vst [vmem:[%s606] ss:$8 sm:$0xf] %v605
    %s608 = scalar_lea.vmem [#allocation0], 192
    %v609 = vld [vmem:[%s608] sm:$0xf]
    %s610 = scalar_lea.vmem %s1, 96
    %611 = vst [vmem:[%s610] ss:$8 sm:$0xf] %v609
    %s612 = scalar_lea.vmem [#allocation0], 200
    %v613 = vld [vmem:[%s612] sm:$0xf]
    %s614 = scalar_lea.vmem %s1, 97
    %615 = vst [vmem:[%s614] ss:$8 sm:$0xf] %v613
    %s616 = scalar_lea.vmem [#allocation0], 208
    %v617 = vld [vmem:[%s616] sm:$0xf]
    %s618 = scalar_lea.vmem %s1, 98
    %619 = vst [vmem:[%s618] ss:$8 sm:$0xf] %v617
    %s620 = scalar_lea.vmem [#allocation0], 216
    %v621 = vld [vmem:[%s620] sm:$0xf]
    %s622 = scalar_lea.vmem %s1, 99
    %623 = vst [vmem:[%s622] ss:$8 sm:$0xf] %v621
    %s624 = scalar_lea.vmem [#allocation0], 224
    %v625 = vld [vmem:[%s624] sm:$0xf]
    %s626 = scalar_lea.vmem %s1, 100
    %627 = vst [vmem:[%s626] ss:$8 sm:$0xf] %v625
    %s628 = scalar_lea.vmem [#allocation0], 232
    %v629 = vld [vmem:[%s628] sm:$0xf]
    %s630 = scalar_lea.vmem %s1, 101
    %631 = vst [vmem:[%s630] ss:$8 sm:$0xf] %v629
    %s632 = scalar_lea.vmem [#allocation0], 240
    %v633 = vld [vmem:[%s632] sm:$0xf]
    %s634 = scalar_lea.vmem %s1, 102
    %635 = vst [vmem:[%s634] ss:$8 sm:$0xf] %v633
    %s636 = scalar_lea.vmem [#allocation0], 248
    %v637 = vld [vmem:[%s636] sm:$0xf]
    %s638 = scalar_lea.vmem %s1, 103
    %639 = vst [vmem:[%s638] ss:$8 sm:$0xf] %v637
    %s640 = scalar_lea.vmem [#allocation0], 256
    %v641 = vld [vmem:[%s640] sm:$0xf]
    %s642 = scalar_lea.vmem %s1, 128
    %643 = vst [vmem:[%s642] ss:$8 sm:$0xf] %v641
    %s644 = scalar_lea.vmem [#allocation0], 264
    %v645 = vld [vmem:[%s644] sm:$0xf]
    %s646 = scalar_lea.vmem %s1, 129
    %647 = vst [vmem:[%s646] ss:$8 sm:$0xf] %v645
    %s648 = scalar_lea.vmem [#allocation0], 272
    %v649 = vld [vmem:[%s648] sm:$0xf]
    %s650 = scalar_lea.vmem %s1, 130
    %651 = vst [vmem:[%s650] ss:$8 sm:$0xf] %v649
    %s652 = scalar_lea.vmem [#allocation0], 280
    %v653 = vld [vmem:[%s652] sm:$0xf]
    %s654 = scalar_lea.vmem %s1, 131
    %655 = vst [vmem:[%s654] ss:$8 sm:$0xf] %v653
    %s656 = scalar_lea.vmem [#allocation0], 288
    %v657 = vld [vmem:[%s656] sm:$0xf]
    %s658 = scalar_lea.vmem %s1, 132
    %659 = vst [vmem:[%s658] ss:$8 sm:$0xf] %v657
    %s660 = scalar_lea.vmem [#allocation0], 296
    %v661 = vld [vmem:[%s660] sm:$0xf]
    %s662 = scalar_lea.vmem %s1, 133
    %663 = vst [vmem:[%s662] ss:$8 sm:$0xf] %v661
    %s664 = scalar_lea.vmem [#allocation0], 304
    %v665 = vld [vmem:[%s664] sm:$0xf]
    %s666 = scalar_lea.vmem %s1, 134
    %667 = vst [vmem:[%s666] ss:$8 sm:$0xf] %v665
    %s668 = scalar_lea.vmem [#allocation0], 312
    %v669 = vld [vmem:[%s668] sm:$0xf]
    %s670 = scalar_lea.vmem %s1, 135
    %671 = vst [vmem:[%s670] ss:$8 sm:$0xf] %v669
    %s672 = scalar_lea.vmem [#allocation0], 320
    %v673 = vld [vmem:[%s672] sm:$0xf]
    %s674 = scalar_lea.vmem %s1, 160
    %675 = vst [vmem:[%s674] ss:$8 sm:$0xf] %v673
    %s676 = scalar_lea.vmem [#allocation0], 328
    %v677 = vld [vmem:[%s676] sm:$0xf]
    %s678 = scalar_lea.vmem %s1, 161
    %679 = vst [vmem:[%s678] ss:$8 sm:$0xf] %v677
    %s680 = scalar_lea.vmem [#allocation0], 336
    %v681 = vld [vmem:[%s680] sm:$0xf]
    %s682 = scalar_lea.vmem %s1, 162
    %683 = vst [vmem:[%s682] ss:$8 sm:$0xf] %v681
    %s684 = scalar_lea.vmem [#allocation0], 344
    %v685 = vld [vmem:[%s684] sm:$0xf]
    %s686 = scalar_lea.vmem %s1, 163
    %687 = vst [vmem:[%s686] ss:$8 sm:$0xf] %v685
    %s688 = scalar_lea.vmem [#allocation0], 352
    %v689 = vld [vmem:[%s688] sm:$0xf]
    %s690 = scalar_lea.vmem %s1, 164
    %691 = vst [vmem:[%s690] ss:$8 sm:$0xf] %v689
    %s692 = scalar_lea.vmem [#allocation0], 360
    %v693 = vld [vmem:[%s692] sm:$0xf]
    %s694 = scalar_lea.vmem %s1, 165
    %695 = vst [vmem:[%s694] ss:$8 sm:$0xf] %v693
    %s696 = scalar_lea.vmem [#allocation0], 368
    %v697 = vld [vmem:[%s696] sm:$0xf]
    %s698 = scalar_lea.vmem %s1, 166
    %699 = vst [vmem:[%s698] ss:$8 sm:$0xf] %v697
    %s700 = scalar_lea.vmem [#allocation0], 376
    %v701 = vld [vmem:[%s700] sm:$0xf]
    %s702 = scalar_lea.vmem %s1, 167
    %703 = vst [vmem:[%s702] ss:$8 sm:$0xf] %v701
    %s704 = scalar_lea.vmem [#allocation0], 384
    %v705 = vld [vmem:[%s704] sm:$0xf]
    %s706 = scalar_lea.vmem %s1, 192
    %707 = vst [vmem:[%s706] ss:$8 sm:$0xf] %v705
    %s708 = scalar_lea.vmem [#allocation0], 392
    %v709 = vld [vmem:[%s708] sm:$0xf]
    %s710 = scalar_lea.vmem %s1, 193
    %711 = vst [vmem:[%s710] ss:$8 sm:$0xf] %v709
    %s712 = scalar_lea.vmem [#allocation0], 400
    %v713 = vld [vmem:[%s712] sm:$0xf]
    %s714 = scalar_lea.vmem %s1, 194
    %715 = vst [vmem:[%s714] ss:$8 sm:$0xf] %v713
    %s716 = scalar_lea.vmem [#allocation0], 408
    %v717 = vld [vmem:[%s716] sm:$0xf]
    %s718 = scalar_lea.vmem %s1, 195
    %719 = vst [vmem:[%s718] ss:$8 sm:$0xf] %v717
    %s720 = scalar_lea.vmem [#allocation0], 416
    %v721 = vld [vmem:[%s720] sm:$0xf]
    %s722 = scalar_lea.vmem %s1, 196
    %723 = vst [vmem:[%s722] ss:$8 sm:$0xf] %v721
    %s724 = scalar_lea.vmem [#allocation0], 424
    %v725 = vld [vmem:[%s724] sm:$0xf]
    %s726 = scalar_lea.vmem %s1, 197
    %727 = vst [vmem:[%s726] ss:$8 sm:$0xf] %v725
    %s728 = scalar_lea.vmem [#allocation0], 432
    %v729 = vld [vmem:[%s728] sm:$0xf]
    %s730 = scalar_lea.vmem %s1, 198
    %731 = vst [vmem:[%s730] ss:$8 sm:$0xf] %v729
    %s732 = scalar_lea.vmem [#allocation0], 440
    %v733 = vld [vmem:[%s732] sm:$0xf]
    %s734 = scalar_lea.vmem %s1, 199
    %735 = vst [vmem:[%s734] ss:$8 sm:$0xf] %v733
    %s736 = scalar_lea.vmem [#allocation0], 448
    %v737 = vld [vmem:[%s736] sm:$0xf]
    %s738 = scalar_lea.vmem %s1, 224
    %739 = vst [vmem:[%s738] ss:$8 sm:$0xf] %v737
    %s740 = scalar_lea.vmem [#allocation0], 456
    %v741 = vld [vmem:[%s740] sm:$0xf]
    %s742 = scalar_lea.vmem %s1, 225
    %743 = vst [vmem:[%s742] ss:$8 sm:$0xf] %v741
    %s744 = scalar_lea.vmem [#allocation0], 464
    %v745 = vld [vmem:[%s744] sm:$0xf]
    %s746 = scalar_lea.vmem %s1, 226
    %747 = vst [vmem:[%s746] ss:$8 sm:$0xf] %v745
    %s748 = scalar_lea.vmem [#allocation0], 472
    %v749 = vld [vmem:[%s748] sm:$0xf]
    %s750 = scalar_lea.vmem %s1, 227
    %751 = vst [vmem:[%s750] ss:$8 sm:$0xf] %v749
    %s752 = scalar_lea.vmem [#allocation0], 480
    %v753 = vld [vmem:[%s752] sm:$0xf]
    %s754 = scalar_lea.vmem %s1, 228
    %755 = vst [vmem:[%s754] ss:$8 sm:$0xf] %v753
    %s756 = scalar_lea.vmem [#allocation0], 488
    %v757 = vld [vmem:[%s756] sm:$0xf]
    %s758 = scalar_lea.vmem %s1, 229
    %759 = vst [vmem:[%s758] ss:$8 sm:$0xf] %v757
    %s760 = scalar_lea.vmem [#allocation0], 496
    %v761 = vld [vmem:[%s760] sm:$0xf]
    %s762 = scalar_lea.vmem %s1, 230
    %763 = vst [vmem:[%s762] ss:$8 sm:$0xf] %v761
    %s764 = scalar_lea.vmem [#allocation0], 504
    %v765 = vld [vmem:[%s764] sm:$0xf]
    %s766 = scalar_lea.vmem %s1, 231
    %767 = vst [vmem:[%s766] ss:$8 sm:$0xf] %v765
    %s768 = scalar_lea.vmem [#allocation0], 512
    %v769 = vld [vmem:[%s768] sm:$0xf]
    %s770 = scalar_lea.vmem %s1, 256
    %771 = vst [vmem:[%s770] ss:$8 sm:$0xf] %v769
    %s772 = scalar_lea.vmem [#allocation0], 520
    %v773 = vld [vmem:[%s772] sm:$0xf]
    %s774 = scalar_lea.vmem %s1, 257
    %775 = vst [vmem:[%s774] ss:$8 sm:$0xf] %v773
    %s776 = scalar_lea.vmem [#allocation0], 528
    %v777 = vld [vmem:[%s776] sm:$0xf]
    %s778 = scalar_lea.vmem %s1, 258
    %779 = vst [vmem:[%s778] ss:$8 sm:$0xf] %v777
    %s780 = scalar_lea.vmem [#allocation0], 536
    %v781 = vld [vmem:[%s780] sm:$0xf]
    %s782 = scalar_lea.vmem %s1, 259
    %783 = vst [vmem:[%s782] ss:$8 sm:$0xf] %v781
    %s784 = scalar_lea.vmem [#allocation0], 544
    %v785 = vld [vmem:[%s784] sm:$0xf]
    %s786 = scalar_lea.vmem %s1, 260
    %787 = vst [vmem:[%s786] ss:$8 sm:$0xf] %v785
    %s788 = scalar_lea.vmem [#allocation0], 552
    %v789 = vld [vmem:[%s788] sm:$0xf]
    %s790 = scalar_lea.vmem %s1, 261
    %791 = vst [vmem:[%s790] ss:$8 sm:$0xf] %v789
    %s792 = scalar_lea.vmem [#allocation0], 560
    %v793 = vld [vmem:[%s792] sm:$0xf]
    %s794 = scalar_lea.vmem %s1, 262
    %795 = vst [vmem:[%s794] ss:$8 sm:$0xf] %v793
    %s796 = scalar_lea.vmem [#allocation0], 568
    %v797 = vld [vmem:[%s796] sm:$0xf]
    %s798 = scalar_lea.vmem %s1, 263
    %799 = vst [vmem:[%s798] ss:$8 sm:$0xf] %v797
    %s800 = scalar_lea.vmem [#allocation0], 576
    %v801 = vld [vmem:[%s800] sm:$0xf]
    %s802 = scalar_lea.vmem %s1, 288
    %803 = vst [vmem:[%s802] ss:$8 sm:$0xf] %v801
    %s804 = scalar_lea.vmem [#allocation0], 584
    %v805 = vld [vmem:[%s804] sm:$0xf]
    %s806 = scalar_lea.vmem %s1, 289
    %807 = vst [vmem:[%s806] ss:$8 sm:$0xf] %v805
    %s808 = scalar_lea.vmem [#allocation0], 592
    %v809 = vld [vmem:[%s808] sm:$0xf]
    %s810 = scalar_lea.vmem %s1, 290
    %811 = vst [vmem:[%s810] ss:$8 sm:$0xf] %v809
    %s812 = scalar_lea.vmem [#allocation0], 600
    %v813 = vld [vmem:[%s812] sm:$0xf]
    %s814 = scalar_lea.vmem %s1, 291
    %815 = vst [vmem:[%s814] ss:$8 sm:$0xf] %v813
    %s816 = scalar_lea.vmem [#allocation0], 608
    %v817 = vld [vmem:[%s816] sm:$0xf]
    %s818 = scalar_lea.vmem %s1, 292
    %819 = vst [vmem:[%s818] ss:$8 sm:$0xf] %v817
    %s820 = scalar_lea.vmem [#allocation0], 616
    %v821 = vld [vmem:[%s820] sm:$0xf]
    %s822 = scalar_lea.vmem %s1, 293
    %823 = vst [vmem:[%s822] ss:$8 sm:$0xf] %v821
    %s824 = scalar_lea.vmem [#allocation0], 624
    %v825 = vld [vmem:[%s824] sm:$0xf]
    %s826 = scalar_lea.vmem %s1, 294
    %827 = vst [vmem:[%s826] ss:$8 sm:$0xf] %v825
    %s828 = scalar_lea.vmem [#allocation0], 632
    %v829 = vld [vmem:[%s828] sm:$0xf]
    %s830 = scalar_lea.vmem %s1, 295
    %831 = vst [vmem:[%s830] ss:$8 sm:$0xf] %v829
    %s832 = scalar_lea.vmem [#allocation0], 640
    %v833 = vld [vmem:[%s832] sm:$0xf]
    %s834 = scalar_lea.vmem %s1, 320
    %835 = vst [vmem:[%s834] ss:$8 sm:$0xf] %v833
    %s836 = scalar_lea.vmem [#allocation0], 648
    %v837 = vld [vmem:[%s836] sm:$0xf]
    %s838 = scalar_lea.vmem %s1, 321
    %839 = vst [vmem:[%s838] ss:$8 sm:$0xf] %v837
    %s840 = scalar_lea.vmem [#allocation0], 656
    %v841 = vld [vmem:[%s840] sm:$0xf]
    %s842 = scalar_lea.vmem %s1, 322
    %843 = vst [vmem:[%s842] ss:$8 sm:$0xf] %v841
    %s844 = scalar_lea.vmem [#allocation0], 664
    %v845 = vld [vmem:[%s844] sm:$0xf]
    %s846 = scalar_lea.vmem %s1, 323
    %847 = vst [vmem:[%s846] ss:$8 sm:$0xf] %v845
    %s848 = scalar_lea.vmem [#allocation0], 672
    %v849 = vld [vmem:[%s848] sm:$0xf]
    %s850 = scalar_lea.vmem %s1, 324
    %851 = vst [vmem:[%s850] ss:$8 sm:$0xf] %v849
    %s852 = scalar_lea.vmem [#allocation0], 680
    %v853 = vld [vmem:[%s852] sm:$0xf]
    %s854 = scalar_lea.vmem %s1, 325
    %855 = vst [vmem:[%s854] ss:$8 sm:$0xf] %v853
    %s856 = scalar_lea.vmem [#allocation0], 688
    %v857 = vld [vmem:[%s856] sm:$0xf]
    %s858 = scalar_lea.vmem %s1, 326
    %859 = vst [vmem:[%s858] ss:$8 sm:$0xf] %v857
    %s860 = scalar_lea.vmem [#allocation0], 696
    %v861 = vld [vmem:[%s860] sm:$0xf]
    %s862 = scalar_lea.vmem %s1, 327
    %863 = vst [vmem:[%s862] ss:$8 sm:$0xf] %v861
    %s864 = scalar_lea.vmem [#allocation0], 704
    %v865 = vld [vmem:[%s864] sm:$0xf]
    %s866 = scalar_lea.vmem %s1, 352
    %867 = vst [vmem:[%s866] ss:$8 sm:$0xf] %v865
    %s868 = scalar_lea.vmem [#allocation0], 712
    %v869 = vld [vmem:[%s868] sm:$0xf]
    %s870 = scalar_lea.vmem %s1, 353
    %871 = vst [vmem:[%s870] ss:$8 sm:$0xf] %v869
    %s872 = scalar_lea.vmem [#allocation0], 720
    %v873 = vld [vmem:[%s872] sm:$0xf]
    %s874 = scalar_lea.vmem %s1, 354
    %875 = vst [vmem:[%s874] ss:$8 sm:$0xf] %v873
    %s876 = scalar_lea.vmem [#allocation0], 728
    %v877 = vld [vmem:[%s876] sm:$0xf]
    %s878 = scalar_lea.vmem %s1, 355
    %879 = vst [vmem:[%s878] ss:$8 sm:$0xf] %v877
    %s880 = scalar_lea.vmem [#allocation0], 736
    %v881 = vld [vmem:[%s880] sm:$0xf]
    %s882 = scalar_lea.vmem %s1, 356
    %883 = vst [vmem:[%s882] ss:$8 sm:$0xf] %v881
    %s884 = scalar_lea.vmem [#allocation0], 744
    %v885 = vld [vmem:[%s884] sm:$0xf]
    %s886 = scalar_lea.vmem %s1, 357
    %887 = vst [vmem:[%s886] ss:$8 sm:$0xf] %v885
    %s888 = scalar_lea.vmem [#allocation0], 752
    %v889 = vld [vmem:[%s888] sm:$0xf]
    %s890 = scalar_lea.vmem %s1, 358
    %891 = vst [vmem:[%s890] ss:$8 sm:$0xf] %v889
    %s892 = scalar_lea.vmem [#allocation0], 760
    %v893 = vld [vmem:[%s892] sm:$0xf]
    %s894 = scalar_lea.vmem %s1, 359
    %895 = vst [vmem:[%s894] ss:$8 sm:$0xf] %v893
    %s896 = scalar_lea.vmem [#allocation0], 768
    %v897 = vld [vmem:[%s896] sm:$0xf]
    %s898 = scalar_lea.vmem %s1, 384
    %899 = vst [vmem:[%s898] ss:$8 sm:$0xf] %v897
    %s900 = scalar_lea.vmem [#allocation0], 776
    %v901 = vld [vmem:[%s900] sm:$0xf]
    %s902 = scalar_lea.vmem %s1, 385
    %903 = vst [vmem:[%s902] ss:$8 sm:$0xf] %v901
    %s904 = scalar_lea.vmem [#allocation0], 784
    %v905 = vld [vmem:[%s904] sm:$0xf]
    %s906 = scalar_lea.vmem %s1, 386
    %907 = vst [vmem:[%s906] ss:$8 sm:$0xf] %v905
    %s908 = scalar_lea.vmem [#allocation0], 792
    %v909 = vld [vmem:[%s908] sm:$0xf]
    %s910 = scalar_lea.vmem %s1, 387
    %911 = vst [vmem:[%s910] ss:$8 sm:$0xf] %v909
    %s912 = scalar_lea.vmem [#allocation0], 800
    %v913 = vld [vmem:[%s912] sm:$0xf]
    %s914 = scalar_lea.vmem %s1, 388
    %915 = vst [vmem:[%s914] ss:$8 sm:$0xf] %v913
    %s916 = scalar_lea.vmem [#allocation0], 808
    %v917 = vld [vmem:[%s916] sm:$0xf]
    %s918 = scalar_lea.vmem %s1, 389
    %919 = vst [vmem:[%s918] ss:$8 sm:$0xf] %v917
    %s920 = scalar_lea.vmem [#allocation0], 816
    %v921 = vld [vmem:[%s920] sm:$0xf]
    %s922 = scalar_lea.vmem %s1, 390
    %923 = vst [vmem:[%s922] ss:$8 sm:$0xf] %v921
    %s924 = scalar_lea.vmem [#allocation0], 824
    %v925 = vld [vmem:[%s924] sm:$0xf]
    %s926 = scalar_lea.vmem %s1, 391
    %927 = vst [vmem:[%s926] ss:$8 sm:$0xf] %v925
    %s928 = scalar_lea.vmem [#allocation0], 832
    %v929 = vld [vmem:[%s928] sm:$0xf]
    %s930 = scalar_lea.vmem %s1, 416
    %931 = vst [vmem:[%s930] ss:$8 sm:$0xf] %v929
    %s932 = scalar_lea.vmem [#allocation0], 840
    %v933 = vld [vmem:[%s932] sm:$0xf]
    %s934 = scalar_lea.vmem %s1, 417
    %935 = vst [vmem:[%s934] ss:$8 sm:$0xf] %v933
    %s936 = scalar_lea.vmem [#allocation0], 848
    %v937 = vld [vmem:[%s936] sm:$0xf]
    %s938 = scalar_lea.vmem %s1, 418
    %939 = vst [vmem:[%s938] ss:$8 sm:$0xf] %v937
    %s940 = scalar_lea.vmem [#allocation0], 856
    %v941 = vld [vmem:[%s940] sm:$0xf]
    %s942 = scalar_lea.vmem %s1, 419
    %943 = vst [vmem:[%s942] ss:$8 sm:$0xf] %v941
    %s944 = scalar_lea.vmem [#allocation0], 864
    %v945 = vld [vmem:[%s944] sm:$0xf]
    %s946 = scalar_lea.vmem %s1, 420
    %947 = vst [vmem:[%s946] ss:$8 sm:$0xf] %v945
    %s948 = scalar_lea.vmem [#allocation0], 872
    %v949 = vld [vmem:[%s948] sm:$0xf]
    %s950 = scalar_lea.vmem %s1, 421
    %951 = vst [vmem:[%s950] ss:$8 sm:$0xf] %v949
    %s952 = scalar_lea.vmem [#allocation0], 880
    %v953 = vld [vmem:[%s952] sm:$0xf]
    %s954 = scalar_lea.vmem %s1, 422
    %955 = vst [vmem:[%s954] ss:$8 sm:$0xf] %v953
    %s956 = scalar_lea.vmem [#allocation0], 888
    %v957 = vld [vmem:[%s956] sm:$0xf]
    %s958 = scalar_lea.vmem %s1, 423
    %959 = vst [vmem:[%s958] ss:$8 sm:$0xf] %v957
    %s960 = scalar_lea.vmem [#allocation0], 896
    %v961 = vld [vmem:[%s960] sm:$0xf]
    %s962 = scalar_lea.vmem %s1, 448
    %963 = vst [vmem:[%s962] ss:$8 sm:$0xf] %v961
    %s964 = scalar_lea.vmem [#allocation0], 904
    %v965 = vld [vmem:[%s964] sm:$0xf]
    %s966 = scalar_lea.vmem %s1, 449
    %967 = vst [vmem:[%s966] ss:$8 sm:$0xf] %v965
    %s968 = scalar_lea.vmem [#allocation0], 912
    %v969 = vld [vmem:[%s968] sm:$0xf]
    %s970 = scalar_lea.vmem %s1, 450
    %971 = vst [vmem:[%s970] ss:$8 sm:$0xf] %v969
    %s972 = scalar_lea.vmem [#allocation0], 920
    %v973 = vld [vmem:[%s972] sm:$0xf]
    %s974 = scalar_lea.vmem %s1, 451
    %975 = vst [vmem:[%s974] ss:$8 sm:$0xf] %v973
    %s976 = scalar_lea.vmem [#allocation0], 928
    %v977 = vld [vmem:[%s976] sm:$0xf]
    %s978 = scalar_lea.vmem %s1, 452
    %979 = vst [vmem:[%s978] ss:$8 sm:$0xf] %v977
    %s980 = scalar_lea.vmem [#allocation0], 936
    %v981 = vld [vmem:[%s980] sm:$0xf]
    %s982 = scalar_lea.vmem %s1, 453
    %983 = vst [vmem:[%s982] ss:$8 sm:$0xf] %v981
    %s984 = scalar_lea.vmem [#allocation0], 944
    %v985 = vld [vmem:[%s984] sm:$0xf]
    %s986 = scalar_lea.vmem %s1, 454
    %987 = vst [vmem:[%s986] ss:$8 sm:$0xf] %v985
    %s988 = scalar_lea.vmem [#allocation0], 952
    %v989 = vld [vmem:[%s988] sm:$0xf]
    %s990 = scalar_lea.vmem %s1, 455
    %991 = vst [vmem:[%s990] ss:$8 sm:$0xf] %v989
    %s992 = scalar_lea.vmem [#allocation0], 960
    %v993 = vld [vmem:[%s992] sm:$0xf]
    %s994 = scalar_lea.vmem %s1, 480
    %995 = vst [vmem:[%s994] ss:$8 sm:$0xf] %v993
    %s996 = scalar_lea.vmem [#allocation0], 968
    %v997 = vld [vmem:[%s996] sm:$0xf]
    %s998 = scalar_lea.vmem %s1, 481
    %999 = vst [vmem:[%s998] ss:$8 sm:$0xf] %v997
    %s1000 = scalar_lea.vmem [#allocation0], 976
    %v1001 = vld [vmem:[%s1000] sm:$0xf]
    %s1002 = scalar_lea.vmem %s1, 482
    %1003 = vst [vmem:[%s1002] ss:$8 sm:$0xf] %v1001
    %s1004 = scalar_lea.vmem [#allocation0], 984
    %v1005 = vld [vmem:[%s1004] sm:$0xf]
    %s1006 = scalar_lea.vmem %s1, 483
    %1007 = vst [vmem:[%s1006] ss:$8 sm:$0xf] %v1005
    %s1008 = scalar_lea.vmem [#allocation0], 992
    %v1009 = vld [vmem:[%s1008] sm:$0xf]
    %s1010 = scalar_lea.vmem %s1, 484
    %1011 = vst [vmem:[%s1010] ss:$8 sm:$0xf] %v1009
    %s1012 = scalar_lea.vmem [#allocation0], 1000
    %v1013 = vld [vmem:[%s1012] sm:$0xf]
    %s1014 = scalar_lea.vmem %s1, 485
    %1015 = vst [vmem:[%s1014] ss:$8 sm:$0xf] %v1013
    %s1016 = scalar_lea.vmem [#allocation0], 1008
    %v1017 = vld [vmem:[%s1016] sm:$0xf]
    %s1018 = scalar_lea.vmem %s1, 486
    %1019 = vst [vmem:[%s1018] ss:$8 sm:$0xf] %v1017
    %s1020 = scalar_lea.vmem [#allocation0], 1016
    %v1021 = vld [vmem:[%s1020] sm:$0xf]
    %s1022 = scalar_lea.vmem %s1, 487
    %1023 = vst [vmem:[%s1022] ss:$8 sm:$0xf] %v1021

// kernel: cnn2_forward.3
$region0: #{cnn2_forward.3}
  #allocation0 [shape = 'u32[]', space=smem, size = 0x4, offset = 0x4, fixed_abs, tag = 'smem constant byte address 0x4 - core index']
  #allocation1 [shape = 'u32[72,128]{1,0:T(1,128)}', space=vmem, size = 0x9000, scoped, tag = 'internal scratch']
  %s0 = inlined_call_operand.vmem [shape: bf16[8,2048], index: 0, kind: input, shape index: {}]
  %s1 = inlined_call_operand.vmem [shape: bf16[2048,64], index: 1, kind: input, shape index: {}]
  %s2 = inlined_call_operand.vmem [shape: f32[1,64], index: 2, kind: input, shape index: {}]
  %s3 = inlined_call_operand.vmem [shape: bf16[64,4], index: 3, kind: input, shape index: {}]
  %s4 = inlined_call_operand.vmem [shape: f32[1,4], index: 4, kind: input, shape index: {}]
  %s5 = inlined_call_operand.vmem [shape: f32[8,4], index: 5, kind: output, shape index: {}]
  %s6 = sld [smem:[#allocation0]]
  $region30: #{cnn2_forward.3} parent=0
    _
  %s8 = ssub.s32 1, %s6
  %s9 = scalar_select 0, %s8, %s6
  // Predicated region
  $region2: #{cnn2_forward.3} parent=0 // pred_check
    _
  $region3: #{cnn2_forward.3} parent=0 // pred_check_branch
    %11 = sbr.rel (0) target = $region5
  $region4: #{cnn2_forward.3} parent=0 // pred_region
    _
  $region5: #{cnn2_forward.3} parent=0 // pred_fallthru
    _
  // Predicated region
  $region6: #{cnn2_forward.3} parent=0 // pred_check
    _
  $region7: #{cnn2_forward.3} parent=0 // pred_check_branch
    %13 = sbr.rel (0) target = $region9
  $region8: #{cnn2_forward.3} parent=0 // pred_region
    _
  $region9: #{cnn2_forward.3} parent=0 // pred_fallthru
    _
  // Predicated region
  $region10: #{cnn2_forward.3} parent=0 // pred_check
    _
  $region11: #{cnn2_forward.3} parent=0 // pred_check_branch
    %15 = sbr.rel (0) target = $region13
  $region12: #{cnn2_forward.3} parent=0 // pred_region
    _
  $region13: #{cnn2_forward.3} parent=0 // pred_fallthru
    _
  // Predicated region
  $region14: #{cnn2_forward.3} parent=0 // pred_check
    _
  $region15: #{cnn2_forward.3} parent=0 // pred_check_branch
    %17 = sbr.rel (0) target = $region17
  $region16: #{cnn2_forward.3} parent=0 // pred_region
    _
  $region17: #{cnn2_forward.3} parent=0 // pred_fallthru
    _
  // Predicated region
  $region18: #{cnn2_forward.3} parent=0 // pred_check
    _
  $region19: #{cnn2_forward.3} parent=0 // pred_check_branch
    %19 = sbr.rel (0) target = $region21
  $region20: #{cnn2_forward.3} parent=0 // pred_region
    _
  $region21: #{cnn2_forward.3} parent=0 // pred_fallthru
    _
  %v21 = vld [vmem:[%s0] sm:$0xff]
  %v22 = vld [vmem:[%s0 + $0x8] sm:$0xff]
  %v23 = vld [vmem:[%s0 + $0x10] sm:$0xff]
  %v24 = vld [vmem:[%s0 + $0x18] sm:$0xff]
  %v25 = vld [vmem:[%s0 + $0x20] sm:$0xff]
  %v26 = vld [vmem:[%s0 + $0x28] sm:$0xff]
  %v27 = vld [vmem:[%s0 + $0x30] sm:$0xff]
  %v28 = vld [vmem:[%s0 + $0x38] sm:$0xff]
  %v29 = vld [vmem:[%s1] sm:$0xf]
  %v30 = vld [vmem:[%s1 + $0x4] sm:$0xf]
  %v31 = vld [vmem:[%s1 + $0x8] sm:$0xf]
  %v32 = vld [vmem:[%s1 + $0xc] sm:$0xf]
  %v33 = vld [vmem:[%s1 + $0x10] sm:$0xf]
  %v34 = vld [vmem:[%s1 + $0x14] sm:$0xf]
  %v35 = vld [vmem:[%s1 + $0x18] sm:$0xf]
  %v36 = vld [vmem:[%s1 + $0x1c] sm:$0xf]
  %v37 = vld [vmem:[%s1 + $0x20] sm:$0xf]
  %v38 = vld [vmem:[%s1 + $0x24] sm:$0xf]
  %v39 = vld [vmem:[%s1 + $0x28] sm:$0xf]
  %v40 = vld [vmem:[%s1 + $0x2c] sm:$0xf]
  %v41 = vld [vmem:[%s1 + $0x30] sm:$0xf]
  %v42 = vld [vmem:[%s1 + $0x34] sm:$0xf]
  %v43 = vld [vmem:[%s1 + $0x38] sm:$0xf]
  %v44 = vld [vmem:[%s1 + $0x3c] sm:$0xf]
  %v45 = vld [vmem:[%s1 + $0x40] sm:$0xf]
  %v46 = vld [vmem:[%s1 + $0x44] sm:$0xf]
  %v47 = vld [vmem:[%s1 + $0x48] sm:$0xf]
  %v48 = vld [vmem:[%s1 + $0x4c] sm:$0xf]
  %v49 = vld [vmem:[%s1 + $0x50] sm:$0xf]
  %v50 = vld [vmem:[%s1 + $0x54] sm:$0xf]
  %v51 = vld [vmem:[%s1 + $0x58] sm:$0xf]
  %v52 = vld [vmem:[%s1 + $0x5c] sm:$0xf]
  %v53 = vld [vmem:[%s1 + $0x60] sm:$0xf]
  %v54 = vld [vmem:[%s1 + $0x64] sm:$0xf]
  %v55 = vld [vmem:[%s1 + $0x68] sm:$0xf]
  %v56 = vld [vmem:[%s1 + $0x6c] sm:$0xf]
  %v57 = vld [vmem:[%s1 + $0x70] sm:$0xf]
  %v58 = vld [vmem:[%s1 + $0x74] sm:$0xf]
  %v59 = vld [vmem:[%s1 + $0x78] sm:$0xf]
  %v60 = vld [vmem:[%s1 + $0x7c] sm:$0xf]
  %v61 = vld [vmem:[%s1 + $0x80] sm:$0xf]
  %v62 = vld [vmem:[%s1 + $0x84] sm:$0xf]
  %v63 = vld [vmem:[%s1 + $0x88] sm:$0xf]
  %v64 = vld [vmem:[%s1 + $0x8c] sm:$0xf]
  %v65 = vld [vmem:[%s1 + $0x90] sm:$0xf]
  %v66 = vld [vmem:[%s1 + $0x94] sm:$0xf]
  %v67 = vld [vmem:[%s1 + $0x98] sm:$0xf]
  %v68 = vld [vmem:[%s1 + $0x9c] sm:$0xf]
  %v69 = vld [vmem:[%s1 + $0xa0] sm:$0xf]
  %v70 = vld [vmem:[%s1 + $0xa4] sm:$0xf]
  %v71 = vld [vmem:[%s1 + $0xa8] sm:$0xf]
  %v72 = vld [vmem:[%s1 + $0xac] sm:$0xf]
  %v73 = vld [vmem:[%s1 + $0xb0] sm:$0xf]
  %v74 = vld [vmem:[%s1 + $0xb4] sm:$0xf]
  %v75 = vld [vmem:[%s1 + $0xb8] sm:$0xf]
  %v76 = vld [vmem:[%s1 + $0xbc] sm:$0xf]
  %v77 = vld [vmem:[%s1 + $0xc0] sm:$0xf]
  %v78 = vld [vmem:[%s1 + $0xc4] sm:$0xf]
  %v79 = vld [vmem:[%s1 + $0xc8] sm:$0xf]
  %v80 = vld [vmem:[%s1 + $0xcc] sm:$0xf]
  %v81 = vld [vmem:[%s1 + $0xd0] sm:$0xf]
  %v82 = vld [vmem:[%s1 + $0xd4] sm:$0xf]
  %v83 = vld [vmem:[%s1 + $0xd8] sm:$0xf]
  %v84 = vld [vmem:[%s1 + $0xdc] sm:$0xf]
  %v85 = vld [vmem:[%s1 + $0xe0] sm:$0xf]
  %v86 = vld [vmem:[%s1 + $0xe4] sm:$0xf]
  %v87 = vld [vmem:[%s1 + $0xe8] sm:$0xf]
  %v88 = vld [vmem:[%s1 + $0xec] sm:$0xf]
  %v89 = vld [vmem:[%s1 + $0xf0] sm:$0xf]
  %v90 = vld [vmem:[%s1 + $0xf4] sm:$0xf]
  %v91 = vld [vmem:[%s1 + $0xf8] sm:$0xf]
  %v92 = vld [vmem:[%s1 + $0xfc] sm:$0xf]
  %v93 = vld [vmem:[%s1 + $0x100] sm:$0xf]
  %v94 = vld [vmem:[%s1 + $0x104] sm:$0xf]
  %v95 = vld [vmem:[%s1 + $0x108] sm:$0xf]
  %v96 = vld [vmem:[%s1 + $0x10c] sm:$0xf]
  %v97 = vld [vmem:[%s1 + $0x110] sm:$0xf]
  %v98 = vld [vmem:[%s1 + $0x114] sm:$0xf]
  %v99 = vld [vmem:[%s1 + $0x118] sm:$0xf]
  %v100 = vld [vmem:[%s1 + $0x11c] sm:$0xf]
  %v101 = vld [vmem:[%s1 + $0x120] sm:$0xf]
  %v102 = vld [vmem:[%s1 + $0x124] sm:$0xf]
  %v103 = vld [vmem:[%s1 + $0x128] sm:$0xf]
  %v104 = vld [vmem:[%s1 + $0x12c] sm:$0xf]
  %v105 = vld [vmem:[%s1 + $0x130] sm:$0xf]
  %v106 = vld [vmem:[%s1 + $0x134] sm:$0xf]
  %v107 = vld [vmem:[%s1 + $0x138] sm:$0xf]
  %v108 = vld [vmem:[%s1 + $0x13c] sm:$0xf]
  %v109 = vld [vmem:[%s1 + $0x140] sm:$0xf]
  %v110 = vld [vmem:[%s1 + $0x144] sm:$0xf]
  %v111 = vld [vmem:[%s1 + $0x148] sm:$0xf]
  %v112 = vld [vmem:[%s1 + $0x14c] sm:$0xf]
  %v113 = vld [vmem:[%s1 + $0x150] sm:$0xf]
  %v114 = vld [vmem:[%s1 + $0x154] sm:$0xf]
  %v115 = vld [vmem:[%s1 + $0x158] sm:$0xf]
  %v116 = vld [vmem:[%s1 + $0x15c] sm:$0xf]
  %v117 = vld [vmem:[%s1 + $0x160] sm:$0xf]
  %v118 = vld [vmem:[%s1 + $0x164] sm:$0xf]
  %v119 = vld [vmem:[%s1 + $0x168] sm:$0xf]
  %v120 = vld [vmem:[%s1 + $0x16c] sm:$0xf]
  %v121 = vld [vmem:[%s1 + $0x170] sm:$0xf]
  %v122 = vld [vmem:[%s1 + $0x174] sm:$0xf]
  %v123 = vld [vmem:[%s1 + $0x178] sm:$0xf]
  %v124 = vld [vmem:[%s1 + $0x17c] sm:$0xf]
  %v125 = vld [vmem:[%s1 + $0x180] sm:$0xf]
  %v126 = vld [vmem:[%s1 + $0x184] sm:$0xf]
  %v127 = vld [vmem:[%s1 + $0x188] sm:$0xf]
  %v128 = vld [vmem:[%s1 + $0x18c] sm:$0xf]
  %v129 = vld [vmem:[%s1 + $0x190] sm:$0xf]
  %v130 = vld [vmem:[%s1 + $0x194] sm:$0xf]
  %v131 = vld [vmem:[%s1 + $0x198] sm:$0xf]
  %v132 = vld [vmem:[%s1 + $0x19c] sm:$0xf]
  %v133 = vld [vmem:[%s1 + $0x1a0] sm:$0xf]
  %v134 = vld [vmem:[%s1 + $0x1a4] sm:$0xf]
  %v135 = vld [vmem:[%s1 + $0x1a8] sm:$0xf]
  %v136 = vld [vmem:[%s1 + $0x1ac] sm:$0xf]
  %v137 = vld [vmem:[%s1 + $0x1b0] sm:$0xf]
  %v138 = vld [vmem:[%s1 + $0x1b4] sm:$0xf]
  %v139 = vld [vmem:[%s1 + $0x1b8] sm:$0xf]
  %v140 = vld [vmem:[%s1 + $0x1bc] sm:$0xf]
  %v141 = vld [vmem:[%s1 + $0x1c0] sm:$0xf]
  %v142 = vld [vmem:[%s1 + $0x1c4] sm:$0xf]
  %v143 = vld [vmem:[%s1 + $0x1c8] sm:$0xf]
  %v144 = vld [vmem:[%s1 + $0x1cc] sm:$0xf]
  %v145 = vld [vmem:[%s1 + $0x1d0] sm:$0xf]
  %v146 = vld [vmem:[%s1 + $0x1d4] sm:$0xf]
  %v147 = vld [vmem:[%s1 + $0x1d8] sm:$0xf]
  %v148 = vld [vmem:[%s1 + $0x1dc] sm:$0xf]
  %v149 = vld [vmem:[%s1 + $0x1e0] sm:$0xf]
  %v150 = vld [vmem:[%s1 + $0x1e4] sm:$0xf]
  %v151 = vld [vmem:[%s1 + $0x1e8] sm:$0xf]
  %v152 = vld [vmem:[%s1 + $0x1ec] sm:$0xf]
  %v153 = vld [vmem:[%s1 + $0x1f0] sm:$0xf]
  %v154 = vld [vmem:[%s1 + $0x1f4] sm:$0xf]
  %v155 = vld [vmem:[%s1 + $0x1f8] sm:$0xf]
  %v156 = vld [vmem:[%s1 + $0x1fc] sm:$0xf]
  %v157 = vld [vmem:[%s1 + $0x200] sm:$0xf]
  %v158 = vld [vmem:[%s1 + $0x204] sm:$0xf]
  %v159 = vld [vmem:[%s1 + $0x208] sm:$0xf]
  %v160 = vld [vmem:[%s1 + $0x20c] sm:$0xf]
  %v161 = vld [vmem:[%s1 + $0x210] sm:$0xf]
  %v162 = vld [vmem:[%s1 + $0x214] sm:$0xf]
  %v163 = vld [vmem:[%s1 + $0x218] sm:$0xf]
  %v164 = vld [vmem:[%s1 + $0x21c] sm:$0xf]
  %v165 = vld [vmem:[%s1 + $0x220] sm:$0xf]
  %v166 = vld [vmem:[%s1 + $0x224] sm:$0xf]
  %v167 = vld [vmem:[%s1 + $0x228] sm:$0xf]
  %v168 = vld [vmem:[%s1 + $0x22c] sm:$0xf]
  %v169 = vld [vmem:[%s1 + $0x230] sm:$0xf]
  %v170 = vld [vmem:[%s1 + $0x234] sm:$0xf]
  %v171 = vld [vmem:[%s1 + $0x238] sm:$0xf]
  %v172 = vld [vmem:[%s1 + $0x23c] sm:$0xf]
  %v173 = vld [vmem:[%s1 + $0x240] sm:$0xf]
  %v174 = vld [vmem:[%s1 + $0x244] sm:$0xf]
  %v175 = vld [vmem:[%s1 + $0x248] sm:$0xf]
  %v176 = vld [vmem:[%s1 + $0x24c] sm:$0xf]
  %v177 = vld [vmem:[%s1 + $0x250] sm:$0xf]
  %v178 = vld [vmem:[%s1 + $0x254] sm:$0xf]
  %v179 = vld [vmem:[%s1 + $0x258] sm:$0xf]
  %v180 = vld [vmem:[%s1 + $0x25c] sm:$0xf]
  %v181 = vld [vmem:[%s1 + $0x260] sm:$0xf]
  %v182 = vld [vmem:[%s1 + $0x264] sm:$0xf]
  %v183 = vld [vmem:[%s1 + $0x268] sm:$0xf]
  %v184 = vld [vmem:[%s1 + $0x26c] sm:$0xf]
  %v185 = vld [vmem:[%s1 + $0x270] sm:$0xf]
  %v186 = vld [vmem:[%s1 + $0x274] sm:$0xf]
  %v187 = vld [vmem:[%s1 + $0x278] sm:$0xf]
  %v188 = vld [vmem:[%s1 + $0x27c] sm:$0xf]
  %v189 = vld [vmem:[%s1 + $0x280] sm:$0xf]
  %v190 = vld [vmem:[%s1 + $0x284] sm:$0xf]
  %v191 = vld [vmem:[%s1 + $0x288] sm:$0xf]
  %v192 = vld [vmem:[%s1 + $0x28c] sm:$0xf]
  %v193 = vld [vmem:[%s1 + $0x290] sm:$0xf]
  %v194 = vld [vmem:[%s1 + $0x294] sm:$0xf]
  %v195 = vld [vmem:[%s1 + $0x298] sm:$0xf]
  %v196 = vld [vmem:[%s1 + $0x29c] sm:$0xf]
  %v197 = vld [vmem:[%s1 + $0x2a0] sm:$0xf]
  %v198 = vld [vmem:[%s1 + $0x2a4] sm:$0xf]
  %v199 = vld [vmem:[%s1 + $0x2a8] sm:$0xf]
  %v200 = vld [vmem:[%s1 + $0x2ac] sm:$0xf]
  %v201 = vld [vmem:[%s1 + $0x2b0] sm:$0xf]
  %v202 = vld [vmem:[%s1 + $0x2b4] sm:$0xf]
  %v203 = vld [vmem:[%s1 + $0x2b8] sm:$0xf]
  %v204 = vld [vmem:[%s1 + $0x2bc] sm:$0xf]
  %v205 = vld [vmem:[%s1 + $0x2c0] sm:$0xf]
  %v206 = vld [vmem:[%s1 + $0x2c4] sm:$0xf]
  %v207 = vld [vmem:[%s1 + $0x2c8] sm:$0xf]
  %v208 = vld [vmem:[%s1 + $0x2cc] sm:$0xf]
  %v209 = vld [vmem:[%s1 + $0x2d0] sm:$0xf]
  %v210 = vld [vmem:[%s1 + $0x2d4] sm:$0xf]
  %v211 = vld [vmem:[%s1 + $0x2d8] sm:$0xf]
  %v212 = vld [vmem:[%s1 + $0x2dc] sm:$0xf]
  %v213 = vld [vmem:[%s1 + $0x2e0] sm:$0xf]
  %v214 = vld [vmem:[%s1 + $0x2e4] sm:$0xf]
  %v215 = vld [vmem:[%s1 + $0x2e8] sm:$0xf]
  %v216 = vld [vmem:[%s1 + $0x2ec] sm:$0xf]
  %v217 = vld [vmem:[%s1 + $0x2f0] sm:$0xf]
  %v218 = vld [vmem:[%s1 + $0x2f4] sm:$0xf]
  %v219 = vld [vmem:[%s1 + $0x2f8] sm:$0xf]
  %v220 = vld [vmem:[%s1 + $0x2fc] sm:$0xf]
  %v221 = vld [vmem:[%s1 + $0x300] sm:$0xf]
  %v222 = vld [vmem:[%s1 + $0x304] sm:$0xf]
  %v223 = vld [vmem:[%s1 + $0x308] sm:$0xf]
  %v224 = vld [vmem:[%s1 + $0x30c] sm:$0xf]
  %v225 = vld [vmem:[%s1 + $0x310] sm:$0xf]
  %v226 = vld [vmem:[%s1 + $0x314] sm:$0xf]
  %v227 = vld [vmem:[%s1 + $0x318] sm:$0xf]
  %v228 = vld [vmem:[%s1 + $0x31c] sm:$0xf]
  %v229 = vld [vmem:[%s1 + $0x320] sm:$0xf]
  %v230 = vld [vmem:[%s1 + $0x324] sm:$0xf]
  %v231 = vld [vmem:[%s1 + $0x328] sm:$0xf]
  %v232 = vld [vmem:[%s1 + $0x32c] sm:$0xf]
  %v233 = vld [vmem:[%s1 + $0x330] sm:$0xf]
  %v234 = vld [vmem:[%s1 + $0x334] sm:$0xf]
  %v235 = vld [vmem:[%s1 + $0x338] sm:$0xf]
  %v236 = vld [vmem:[%s1 + $0x33c] sm:$0xf]
  %v237 = vld [vmem:[%s1 + $0x340] sm:$0xf]
  %v238 = vld [vmem:[%s1 + $0x344] sm:$0xf]
  %v239 = vld [vmem:[%s1 + $0x348] sm:$0xf]
  %v240 = vld [vmem:[%s1 + $0x34c] sm:$0xf]
  %v241 = vld [vmem:[%s1 + $0x350] sm:$0xf]
  %v242 = vld [vmem:[%s1 + $0x354] sm:$0xf]
  %v243 = vld [vmem:[%s1 + $0x358] sm:$0xf]
  %v244 = vld [vmem:[%s1 + $0x35c] sm:$0xf]
  %v245 = vld [vmem:[%s1 + $0x360] sm:$0xf]
  %v246 = vld [vmem:[%s1 + $0x364] sm:$0xf]
  %v247 = vld [vmem:[%s1 + $0x368] sm:$0xf]
  %v248 = vld [vmem:[%s1 + $0x36c] sm:$0xf]
  %v249 = vld [vmem:[%s1 + $0x370] sm:$0xf]
  %v250 = vld [vmem:[%s1 + $0x374] sm:$0xf]
  %v251 = vld [vmem:[%s1 + $0x378] sm:$0xf]
  %v252 = vld [vmem:[%s1 + $0x37c] sm:$0xf]
  %v253 = vld [vmem:[%s1 + $0x380] sm:$0xf]
  %v254 = vld [vmem:[%s1 + $0x384] sm:$0xf]
  %v255 = vld [vmem:[%s1 + $0x388] sm:$0xf]
  %v256 = vld [vmem:[%s1 + $0x38c] sm:$0xf]
  %v257 = vld [vmem:[%s1 + $0x390] sm:$0xf]
  %v258 = vld [vmem:[%s1 + $0x394] sm:$0xf]
  %v259 = vld [vmem:[%s1 + $0x398] sm:$0xf]
  %v260 = vld [vmem:[%s1 + $0x39c] sm:$0xf]
  %v261 = vld [vmem:[%s1 + $0x3a0] sm:$0xf]
  %v262 = vld [vmem:[%s1 + $0x3a4] sm:$0xf]
  %v263 = vld [vmem:[%s1 + $0x3a8] sm:$0xf]
  %v264 = vld [vmem:[%s1 + $0x3ac] sm:$0xf]
  %v265 = vld [vmem:[%s1 + $0x3b0] sm:$0xf]
  %v266 = vld [vmem:[%s1 + $0x3b4] sm:$0xf]
  %v267 = vld [vmem:[%s1 + $0x3b8] sm:$0xf]
  %v268 = vld [vmem:[%s1 + $0x3bc] sm:$0xf]
  %v269 = vld [vmem:[%s1 + $0x3c0] sm:$0xf]
  %v270 = vld [vmem:[%s1 + $0x3c4] sm:$0xf]
  %v271 = vld [vmem:[%s1 + $0x3c8] sm:$0xf]
  %v272 = vld [vmem:[%s1 + $0x3cc] sm:$0xf]
  %v273 = vld [vmem:[%s1 + $0x3d0] sm:$0xf]
  %v274 = vld [vmem:[%s1 + $0x3d4] sm:$0xf]
  %v275 = vld [vmem:[%s1 + $0x3d8] sm:$0xf]
  %v276 = vld [vmem:[%s1 + $0x3dc] sm:$0xf]
  %v277 = vld [vmem:[%s1 + $0x3e0] sm:$0xf]
  %v278 = vld [vmem:[%s1 + $0x3e4] sm:$0xf]
  %v279 = vld [vmem:[%s1 + $0x3e8] sm:$0xf]
  %v280 = vld [vmem:[%s1 + $0x3ec] sm:$0xf]
  %v281 = vld [vmem:[%s1 + $0x3f0] sm:$0xf]
  %v282 = vld [vmem:[%s1 + $0x3f4] sm:$0xf]
  %v283 = vld [vmem:[%s1 + $0x3f8] sm:$0xf]
  %v284 = vld [vmem:[%s1 + $0x3fc] sm:$0xf]
  %v285 = vld [vmem:[%s2] sm:$0x1]
  %v287 = vperm.slane %v285, 0
  %v297 = vunpack.c.l.b16 %v21
  %v298 = vunpack.c.h.b16 %v21
  %v299 = vunpack.c.l.b16 %v22
  %v300 = vunpack.c.h.b16 %v22
  %v301 = vunpack.c.l.b16 %v23
  %v302 = vunpack.c.h.b16 %v23
  %v303 = vunpack.c.l.b16 %v24
  %v304 = vunpack.c.h.b16 %v24
  %v305 = vunpack.c.l.b16 %v25
  %v306 = vunpack.c.h.b16 %v25
  %v307 = vunpack.c.l.b16 %v26
  %v308 = vunpack.c.h.b16 %v26
  %v309 = vunpack.c.l.b16 %v27
  %v310 = vunpack.c.h.b16 %v27
  %v311 = vunpack.c.l.b16 %v28
  %v312 = vunpack.c.h.b16 %v28
  %v313 = vpack.c.b16 %v297, %v297
  %v314 = vpack.c.b16 %v298, %v298
  %v315 = vpack.c.b16 %v299, %v299
  %v316 = vpack.c.b16 %v300, %v300
  %v317 = vpack.c.b16 %v301, %v301
  %v318 = vpack.c.b16 %v302, %v302
  %v319 = vpack.c.b16 %v303, %v303
  %v320 = vpack.c.b16 %v304, %v304
  %v321 = vpack.c.b16 %v305, %v305
  %v322 = vpack.c.b16 %v306, %v306
  %v323 = vpack.c.b16 %v307, %v307
  %v324 = vpack.c.b16 %v308, %v308
  %v325 = vpack.c.b16 %v309, %v309
  %v326 = vpack.c.b16 %v310, %v310
  %v327 = vpack.c.b16 %v311, %v311
  %v328 = vpack.c.b16 %v312, %v312
  %v601 = vunpack.c.l.b16 %v29
  %v602 = vunpack.c.l.b16 %v30
  %v603 = vunpack.c.l.b16 %v31
  %v604 = vunpack.c.l.b16 %v32
  %v605 = vunpack.c.l.b16 %v33
  %v606 = vunpack.c.l.b16 %v34
  %v607 = vunpack.c.l.b16 %v35
  %v608 = vunpack.c.l.b16 %v36
  %v609 = vunpack.c.l.b16 %v37
  %v610 = vunpack.c.l.b16 %v38
  %v611 = vunpack.c.l.b16 %v39
  %v612 = vunpack.c.l.b16 %v40
  %v613 = vunpack.c.l.b16 %v41
  %v614 = vunpack.c.l.b16 %v42
  %v615 = vunpack.c.l.b16 %v43
  %v616 = vunpack.c.l.b16 %v44
  %v617 = vunpack.c.l.b16 %v45
  %v618 = vunpack.c.l.b16 %v46
  %v619 = vunpack.c.l.b16 %v47
  %v620 = vunpack.c.l.b16 %v48
  %v621 = vunpack.c.l.b16 %v49
  %v622 = vunpack.c.l.b16 %v50
  %v623 = vunpack.c.l.b16 %v51
  %v624 = vunpack.c.l.b16 %v52
  %v625 = vunpack.c.l.b16 %v53
  %v626 = vunpack.c.l.b16 %v54
  %v627 = vunpack.c.l.b16 %v55
  %v628 = vunpack.c.l.b16 %v56
  %v629 = vunpack.c.l.b16 %v57
  %v630 = vunpack.c.l.b16 %v58
  %v631 = vunpack.c.l.b16 %v59
  %v632 = vunpack.c.l.b16 %v60
  %v633 = vunpack.c.l.b16 %v61
  %v634 = vunpack.c.l.b16 %v62
  %v635 = vunpack.c.l.b16 %v63
  %v636 = vunpack.c.l.b16 %v64
  %v637 = vunpack.c.l.b16 %v65
  %v638 = vunpack.c.l.b16 %v66
  %v639 = vunpack.c.l.b16 %v67
  %v640 = vunpack.c.l.b16 %v68
  %v641 = vunpack.c.l.b16 %v69
  %v642 = vunpack.c.l.b16 %v70
  %v643 = vunpack.c.l.b16 %v71
  %v644 = vunpack.c.l.b16 %v72
  %v645 = vunpack.c.l.b16 %v73
  %v646 = vunpack.c.l.b16 %v74
  %v647 = vunpack.c.l.b16 %v75
  %v648 = vunpack.c.l.b16 %v76
  %v649 = vunpack.c.l.b16 %v77
  %v650 = vunpack.c.l.b16 %v78
  %v651 = vunpack.c.l.b16 %v79
  %v652 = vunpack.c.l.b16 %v80
  %v653 = vunpack.c.l.b16 %v81
  %v654 = vunpack.c.l.b16 %v82
  %v655 = vunpack.c.l.b16 %v83
  %v656 = vunpack.c.l.b16 %v84
  %v657 = vunpack.c.l.b16 %v85
  %v658 = vunpack.c.l.b16 %v86
  %v659 = vunpack.c.l.b16 %v87
  %v660 = vunpack.c.l.b16 %v88
  %v661 = vunpack.c.l.b16 %v89
  %v662 = vunpack.c.l.b16 %v90
  %v663 = vunpack.c.l.b16 %v91
  %v664 = vunpack.c.l.b16 %v92
  %v665 = vunpack.c.l.b16 %v93
  %v666 = vunpack.c.l.b16 %v94
  %v667 = vunpack.c.l.b16 %v95
  %v668 = vunpack.c.l.b16 %v96
  %v669 = vunpack.c.l.b16 %v97
  %v670 = vunpack.c.l.b16 %v98
  %v671 = vunpack.c.l.b16 %v99
  %v672 = vunpack.c.l.b16 %v100
  %v673 = vunpack.c.l.b16 %v101
  %v674 = vunpack.c.l.b16 %v102
  %v675 = vunpack.c.l.b16 %v103
  %v676 = vunpack.c.l.b16 %v104
  %v677 = vunpack.c.l.b16 %v105
  %v678 = vunpack.c.l.b16 %v106
  %v679 = vunpack.c.l.b16 %v107
  %v680 = vunpack.c.l.b16 %v108
  %v681 = vunpack.c.l.b16 %v109
  %v682 = vunpack.c.l.b16 %v110
  %v683 = vunpack.c.l.b16 %v111
  %v684 = vunpack.c.l.b16 %v112
  %v685 = vunpack.c.l.b16 %v113
  %v686 = vunpack.c.l.b16 %v114
  %v687 = vunpack.c.l.b16 %v115
  %v688 = vunpack.c.l.b16 %v116
  %v689 = vunpack.c.l.b16 %v117
  %v690 = vunpack.c.l.b16 %v118
  %v691 = vunpack.c.l.b16 %v119
  %v692 = vunpack.c.l.b16 %v120
  %v693 = vunpack.c.l.b16 %v121
  %v694 = vunpack.c.l.b16 %v122
  %v695 = vunpack.c.l.b16 %v123
  %v696 = vunpack.c.l.b16 %v124
  %v697 = vunpack.c.l.b16 %v125
  %v698 = vunpack.c.l.b16 %v126
  %v699 = vunpack.c.l.b16 %v127
  %v700 = vunpack.c.l.b16 %v128
  %v701 = vunpack.c.l.b16 %v129
  %v702 = vunpack.c.l.b16 %v130
  %v703 = vunpack.c.l.b16 %v131
  %v704 = vunpack.c.l.b16 %v132
  %v705 = vunpack.c.l.b16 %v133
  %v706 = vunpack.c.l.b16 %v134
  %v707 = vunpack.c.l.b16 %v135
  %v708 = vunpack.c.l.b16 %v136
  %v709 = vunpack.c.l.b16 %v137
  %v710 = vunpack.c.l.b16 %v138
  %v711 = vunpack.c.l.b16 %v139
  %v712 = vunpack.c.l.b16 %v140
  %v713 = vunpack.c.l.b16 %v141
  %v714 = vunpack.c.l.b16 %v142
  %v715 = vunpack.c.l.b16 %v143
  %v716 = vunpack.c.l.b16 %v144
  %v717 = vunpack.c.l.b16 %v145
  %v718 = vunpack.c.l.b16 %v146
  %v719 = vunpack.c.l.b16 %v147
  %v720 = vunpack.c.l.b16 %v148
  %v721 = vunpack.c.l.b16 %v149
  %v722 = vunpack.c.l.b16 %v150
  %v723 = vunpack.c.l.b16 %v151
  %v724 = vunpack.c.l.b16 %v152
  %v725 = vunpack.c.l.b16 %v153
  %v726 = vunpack.c.l.b16 %v154
  %v727 = vunpack.c.l.b16 %v155
  %v728 = vunpack.c.l.b16 %v156
  %v729 = vunpack.c.l.b16 %v157
  %v730 = vunpack.c.l.b16 %v158
  %v731 = vunpack.c.l.b16 %v159
  %v732 = vunpack.c.l.b16 %v160
  %v733 = vunpack.c.l.b16 %v161
  %v734 = vunpack.c.l.b16 %v162
  %v735 = vunpack.c.l.b16 %v163
  %v736 = vunpack.c.l.b16 %v164
  %v737 = vunpack.c.l.b16 %v165
  %v738 = vunpack.c.l.b16 %v166
  %v739 = vunpack.c.l.b16 %v167
  %v740 = vunpack.c.l.b16 %v168
  %v741 = vunpack.c.l.b16 %v169
  %v742 = vunpack.c.l.b16 %v170
  %v743 = vunpack.c.l.b16 %v171
  %v744 = vunpack.c.l.b16 %v172
  %v745 = vunpack.c.l.b16 %v173
  %v746 = vunpack.c.l.b16 %v174
  %v747 = vunpack.c.l.b16 %v175
  %v748 = vunpack.c.l.b16 %v176
  %v749 = vunpack.c.l.b16 %v177
  %v750 = vunpack.c.l.b16 %v178
  %v751 = vunpack.c.l.b16 %v179
  %v752 = vunpack.c.l.b16 %v180
  %v753 = vunpack.c.l.b16 %v181
  %v754 = vunpack.c.l.b16 %v182
  %v755 = vunpack.c.l.b16 %v183
  %v756 = vunpack.c.l.b16 %v184
  %v757 = vunpack.c.l.b16 %v185
  %v758 = vunpack.c.l.b16 %v186
  %v759 = vunpack.c.l.b16 %v187
  %v760 = vunpack.c.l.b16 %v188
  %v761 = vunpack.c.l.b16 %v189
  %v762 = vunpack.c.l.b16 %v190
  %v763 = vunpack.c.l.b16 %v191
  %v764 = vunpack.c.l.b16 %v192
  %v765 = vunpack.c.l.b16 %v193
  %v766 = vunpack.c.l.b16 %v194
  %v767 = vunpack.c.l.b16 %v195
  %v768 = vunpack.c.l.b16 %v196
  %v769 = vunpack.c.l.b16 %v197
  %v770 = vunpack.c.l.b16 %v198
  %v771 = vunpack.c.l.b16 %v199
  %v772 = vunpack.c.l.b16 %v200
  %v773 = vunpack.c.l.b16 %v201
  %v774 = vunpack.c.l.b16 %v202
  %v775 = vunpack.c.l.b16 %v203
  %v776 = vunpack.c.l.b16 %v204
  %v777 = vunpack.c.l.b16 %v205
  %v778 = vunpack.c.l.b16 %v206
  %v779 = vunpack.c.l.b16 %v207
  %v780 = vunpack.c.l.b16 %v208
  %v781 = vunpack.c.l.b16 %v209
  %v782 = vunpack.c.l.b16 %v210
  %v783 = vunpack.c.l.b16 %v211
  %v784 = vunpack.c.l.b16 %v212
  %v785 = vunpack.c.l.b16 %v213
  %v786 = vunpack.c.l.b16 %v214
  %v787 = vunpack.c.l.b16 %v215
  %v788 = vunpack.c.l.b16 %v216
  %v789 = vunpack.c.l.b16 %v217
  %v790 = vunpack.c.l.b16 %v218
  %v791 = vunpack.c.l.b16 %v219
  %v792 = vunpack.c.l.b16 %v220
  %v793 = vunpack.c.l.b16 %v221
  %v794 = vunpack.c.l.b16 %v222
  %v795 = vunpack.c.l.b16 %v223
  %v796 = vunpack.c.l.b16 %v224
  %v797 = vunpack.c.l.b16 %v225
  %v798 = vunpack.c.l.b16 %v226
  %v799 = vunpack.c.l.b16 %v227
  %v800 = vunpack.c.l.b16 %v228
  %v801 = vunpack.c.l.b16 %v229
  %v802 = vunpack.c.l.b16 %v230
  %v803 = vunpack.c.l.b16 %v231
  %v804 = vunpack.c.l.b16 %v232
  %v805 = vunpack.c.l.b16 %v233
  %v806 = vunpack.c.l.b16 %v234
  %v807 = vunpack.c.l.b16 %v235
  %v808 = vunpack.c.l.b16 %v236
  %v809 = vunpack.c.l.b16 %v237
  %v810 = vunpack.c.l.b16 %v238
  %v811 = vunpack.c.l.b16 %v239
  %v812 = vunpack.c.l.b16 %v240
  %v813 = vunpack.c.l.b16 %v241
  %v814 = vunpack.c.l.b16 %v242
  %v815 = vunpack.c.l.b16 %v243
  %v816 = vunpack.c.l.b16 %v244
  %v817 = vunpack.c.l.b16 %v245
  %v818 = vunpack.c.l.b16 %v246
  %v819 = vunpack.c.l.b16 %v247
  %v820 = vunpack.c.l.b16 %v248
  %v821 = vunpack.c.l.b16 %v249
  %v822 = vunpack.c.l.b16 %v250
  %v823 = vunpack.c.l.b16 %v251
  %v824 = vunpack.c.l.b16 %v252
  %v825 = vunpack.c.l.b16 %v253
  %v826 = vunpack.c.l.b16 %v254
  %v827 = vunpack.c.l.b16 %v255
  %v828 = vunpack.c.l.b16 %v256
  %v829 = vunpack.c.l.b16 %v257
  %v830 = vunpack.c.l.b16 %v258
  %v831 = vunpack.c.l.b16 %v259
  %v832 = vunpack.c.l.b16 %v260
  %v833 = vunpack.c.l.b16 %v261
  %v834 = vunpack.c.l.b16 %v262
  %v835 = vunpack.c.l.b16 %v263
  %v836 = vunpack.c.l.b16 %v264
  %v837 = vunpack.c.l.b16 %v265
  %v838 = vunpack.c.l.b16 %v266
  %v839 = vunpack.c.l.b16 %v267
  %v840 = vunpack.c.l.b16 %v268
  %v841 = vunpack.c.l.b16 %v269
  %v842 = vunpack.c.l.b16 %v270
  %v843 = vunpack.c.l.b16 %v271
  %v844 = vunpack.c.l.b16 %v272
  %v845 = vunpack.c.l.b16 %v273
  %v846 = vunpack.c.l.b16 %v274
  %v847 = vunpack.c.l.b16 %v275
  %v848 = vunpack.c.l.b16 %v276
  %v849 = vunpack.c.l.b16 %v277
  %v850 = vunpack.c.l.b16 %v278
  %v851 = vunpack.c.l.b16 %v279
  %v852 = vunpack.c.l.b16 %v280
  %v853 = vunpack.c.l.b16 %v281
  %v854 = vunpack.c.l.b16 %v282
  %v855 = vunpack.c.l.b16 %v283
  %v856 = vunpack.c.l.b16 %v284
  %v857 = vpack.c.b16 %v602, %v601
  %v858 = vpack.c.b16 %v604, %v603
  %v859 = vpack.c.b16 %v606, %v605
  %v860 = vpack.c.b16 %v608, %v607
  %v861 = vpack.c.b16 %v610, %v609
  %v862 = vpack.c.b16 %v612, %v611
  %v863 = vpack.c.b16 %v614, %v613
  %v864 = vpack.c.b16 %v616, %v615
  %v865 = vpack.c.b16 %v618, %v617
  %v866 = vpack.c.b16 %v620, %v619
  %v867 = vpack.c.b16 %v622, %v621
  %v868 = vpack.c.b16 %v624, %v623
  %v869 = vpack.c.b16 %v626, %v625
  %v870 = vpack.c.b16 %v628, %v627
  %v871 = vpack.c.b16 %v630, %v629
  %v872 = vpack.c.b16 %v632, %v631
  %v873 = vpack.c.b16 %v634, %v633
  %v874 = vpack.c.b16 %v636, %v635
  %v875 = vpack.c.b16 %v638, %v637
  %v876 = vpack.c.b16 %v640, %v639
  %v877 = vpack.c.b16 %v642, %v641
  %v878 = vpack.c.b16 %v644, %v643
  %v879 = vpack.c.b16 %v646, %v645
  %v880 = vpack.c.b16 %v648, %v647
  %v881 = vpack.c.b16 %v650, %v649
  %v882 = vpack.c.b16 %v652, %v651
  %v883 = vpack.c.b16 %v654, %v653
  %v884 = vpack.c.b16 %v656, %v655
  %v885 = vpack.c.b16 %v658, %v657
  %v886 = vpack.c.b16 %v660, %v659
  %v887 = vpack.c.b16 %v662, %v661
  %v888 = vpack.c.b16 %v664, %v663
  %v889 = vpack.c.b16 %v666, %v665
  %v890 = vpack.c.b16 %v668, %v667
  %v891 = vpack.c.b16 %v670, %v669
  %v892 = vpack.c.b16 %v672, %v671
  %v893 = vpack.c.b16 %v674, %v673
  %v894 = vpack.c.b16 %v676, %v675
  %v895 = vpack.c.b16 %v678, %v677
  %v896 = vpack.c.b16 %v680, %v679
  %v897 = vpack.c.b16 %v682, %v681
  %v898 = vpack.c.b16 %v684, %v683
  %v899 = vpack.c.b16 %v686, %v685
  %v900 = vpack.c.b16 %v688, %v687
  %v901 = vpack.c.b16 %v690, %v689
  %v902 = vpack.c.b16 %v692, %v691
  %v903 = vpack.c.b16 %v694, %v693
  %v904 = vpack.c.b16 %v696, %v695
  %v905 = vpack.c.b16 %v698, %v697
  %v906 = vpack.c.b16 %v700, %v699
  %v907 = vpack.c.b16 %v702, %v701
  %v908 = vpack.c.b16 %v704, %v703
  %v909 = vpack.c.b16 %v706, %v705
  %v910 = vpack.c.b16 %v708, %v707
  %v911 = vpack.c.b16 %v710, %v709
  %v912 = vpack.c.b16 %v712, %v711
  %v913 = vpack.c.b16 %v714, %v713
  %v914 = vpack.c.b16 %v716, %v715
  %v915 = vpack.c.b16 %v718, %v717
  %v916 = vpack.c.b16 %v720, %v719
  %v917 = vpack.c.b16 %v722, %v721
  %v918 = vpack.c.b16 %v724, %v723
  %v919 = vpack.c.b16 %v726, %v725
  %v920 = vpack.c.b16 %v728, %v727
  %v921 = vpack.c.b16 %v730, %v729
  %v922 = vpack.c.b16 %v732, %v731
  %v923 = vpack.c.b16 %v734, %v733
  %v924 = vpack.c.b16 %v736, %v735
  %v925 = vpack.c.b16 %v738, %v737
  %v926 = vpack.c.b16 %v740, %v739
  %v927 = vpack.c.b16 %v742, %v741
  %v928 = vpack.c.b16 %v744, %v743
  %v929 = vpack.c.b16 %v746, %v745
  %v930 = vpack.c.b16 %v748, %v747
  %v931 = vpack.c.b16 %v750, %v749
  %v932 = vpack.c.b16 %v752, %v751
  %v933 = vpack.c.b16 %v754, %v753
  %v934 = vpack.c.b16 %v756, %v755
  %v935 = vpack.c.b16 %v758, %v757
  %v936 = vpack.c.b16 %v760, %v759
  %v937 = vpack.c.b16 %v762, %v761
  %v938 = vpack.c.b16 %v764, %v763
  %v939 = vpack.c.b16 %v766, %v765
  %v940 = vpack.c.b16 %v768, %v767
  %v941 = vpack.c.b16 %v770, %v769
  %v942 = vpack.c.b16 %v772, %v771
  %v943 = vpack.c.b16 %v774, %v773
  %v944 = vpack.c.b16 %v776, %v775
  %v945 = vpack.c.b16 %v778, %v777
  %v946 = vpack.c.b16 %v780, %v779
  %v947 = vpack.c.b16 %v782, %v781
  %v948 = vpack.c.b16 %v784, %v783
  %v949 = vpack.c.b16 %v786, %v785
  %v950 = vpack.c.b16 %v788, %v787
  %v951 = vpack.c.b16 %v790, %v789
  %v952 = vpack.c.b16 %v792, %v791
  %v953 = vpack.c.b16 %v794, %v793
  %v954 = vpack.c.b16 %v796, %v795
  %v955 = vpack.c.b16 %v798, %v797
  %v956 = vpack.c.b16 %v800, %v799
  %v957 = vpack.c.b16 %v802, %v801
  %v958 = vpack.c.b16 %v804, %v803
  %v959 = vpack.c.b16 %v806, %v805
  %v960 = vpack.c.b16 %v808, %v807
  %v961 = vpack.c.b16 %v810, %v809
  %v962 = vpack.c.b16 %v812, %v811
  %v963 = vpack.c.b16 %v814, %v813
  %v964 = vpack.c.b16 %v816, %v815
  %v965 = vpack.c.b16 %v818, %v817
  %v966 = vpack.c.b16 %v820, %v819
  %v967 = vpack.c.b16 %v822, %v821
  %v968 = vpack.c.b16 %v824, %v823
  %v969 = vpack.c.b16 %v826, %v825
  %v970 = vpack.c.b16 %v828, %v827
  %v971 = vpack.c.b16 %v830, %v829
  %v972 = vpack.c.b16 %v832, %v831
  %v973 = vpack.c.b16 %v834, %v833
  %v974 = vpack.c.b16 %v836, %v835
  %v975 = vpack.c.b16 %v838, %v837
  %v976 = vpack.c.b16 %v840, %v839
  %v977 = vpack.c.b16 %v842, %v841
  %v978 = vpack.c.b16 %v844, %v843
  %v979 = vpack.c.b16 %v846, %v845
  %v980 = vpack.c.b16 %v848, %v847
  %v981 = vpack.c.b16 %v850, %v849
  %v982 = vpack.c.b16 %v852, %v851
  %v983 = vpack.c.b16 %v854, %v853
  %v984 = vpack.c.b16 %v856, %v855
  %1113 = vmatpush.bf16.msra.mxu0 %v864
  %1114 = vmatpush.bf16.msra.mxu0 %v863
  %1115 = vmatpush.bf16.msra.mxu0 %v862
  %1116 = vmatpush.bf16.msra.mxu0 %v861
  %1117 = vmatpush.bf16.msra.mxu0 %v860
  %1118 = vmatpush.bf16.msra.mxu0 %v859
  %1119 = vmatpush.bf16.msra.mxu0 %v858
  %1120 = vmatpush.bf16.msra.mxu0 %v857
  %1121 = vmatmul.bf16.gmra.mxu0 %v313
  %v1122 = vpop.f32.mrf.mxu0
  %v1123 = vadd.f32 %v287, %v1122
  %v1124 = vpop.f32.mrf.mxu0
  %1125 = vdwg.mxu0
  %1126 = vmatpush.bf16.msra.mxu0 %v872
  %1127 = vmatpush.bf16.msra.mxu0 %v871
  %1128 = vmatpush.bf16.msra.mxu0 %v870
  %1129 = vmatpush.bf16.msra.mxu0 %v869
  %1130 = vmatpush.bf16.msra.mxu0 %v868
  %1131 = vmatpush.bf16.msra.mxu0 %v867
  %1132 = vmatpush.bf16.msra.mxu0 %v866
  %1133 = vmatpush.bf16.msra.mxu0 %v865
  %1134 = vmatmul.bf16.gmra.mxu0 %v314
  %v1135 = vpop.f32.mrf.mxu0
  %v1136 = vadd.f32 %v1123, %v1135
  %v1137 = vpop.f32.mrf.mxu0
  %1138 = vdwg.mxu0
  %1139 = vmatpush.bf16.msra.mxu0 %v880
  %1140 = vmatpush.bf16.msra.mxu0 %v879
  %1141 = vmatpush.bf16.msra.mxu0 %v878
  %1142 = vmatpush.bf16.msra.mxu0 %v877
  %1143 = vmatpush.bf16.msra.mxu0 %v876
  %1144 = vmatpush.bf16.msra.mxu0 %v875
  %1145 = vmatpush.bf16.msra.mxu0 %v874
  %1146 = vmatpush.bf16.msra.mxu0 %v873
  %1147 = vmatmul.bf16.gmra.mxu0 %v315
  %v1148 = vpop.f32.mrf.mxu0
  %v1149 = vadd.f32 %v1136, %v1148
  %v1150 = vpop.f32.mrf.mxu0
  %1151 = vdwg.mxu0
  %1152 = vmatpush.bf16.msra.mxu0 %v888
  %1153 = vmatpush.bf16.msra.mxu0 %v887
  %1154 = vmatpush.bf16.msra.mxu0 %v886
  %1155 = vmatpush.bf16.msra.mxu0 %v885
  %1156 = vmatpush.bf16.msra.mxu0 %v884
  %1157 = vmatpush.bf16.msra.mxu0 %v883
  %1158 = vmatpush.bf16.msra.mxu0 %v882
  %1159 = vmatpush.bf16.msra.mxu0 %v881
  %1160 = vmatmul.bf16.gmra.mxu0 %v316
  %v1161 = vpop.f32.mrf.mxu0
  %v1162 = vadd.f32 %v1149, %v1161
  %v1163 = vpop.f32.mrf.mxu0
  %1164 = vdwg.mxu0
  %1165 = vmatpush.bf16.msra.mxu0 %v896
  %1166 = vmatpush.bf16.msra.mxu0 %v895
  %1167 = vmatpush.bf16.msra.mxu0 %v894
  %1168 = vmatpush.bf16.msra.mxu0 %v893
  %1169 = vmatpush.bf16.msra.mxu0 %v892
  %1170 = vmatpush.bf16.msra.mxu0 %v891
  %1171 = vmatpush.bf16.msra.mxu0 %v890
  %1172 = vmatpush.bf16.msra.mxu0 %v889
  %1173 = vmatmul.bf16.gmra.mxu0 %v317
  %v1174 = vpop.f32.mrf.mxu0
  %v1175 = vadd.f32 %v1162, %v1174
  %v1176 = vpop.f32.mrf.mxu0
  %1177 = vdwg.mxu0
  %1178 = vmatpush.bf16.msra.mxu0 %v904
  %1179 = vmatpush.bf16.msra.mxu0 %v903
  %1180 = vmatpush.bf16.msra.mxu0 %v902
  %1181 = vmatpush.bf16.msra.mxu0 %v901
  %1182 = vmatpush.bf16.msra.mxu0 %v900
  %1183 = vmatpush.bf16.msra.mxu0 %v899
  %1184 = vmatpush.bf16.msra.mxu0 %v898
  %1185 = vmatpush.bf16.msra.mxu0 %v897
  %1186 = vmatmul.bf16.gmra.mxu0 %v318
  %v1187 = vpop.f32.mrf.mxu0
  %v1188 = vadd.f32 %v1175, %v1187
  %v1189 = vpop.f32.mrf.mxu0
  %1190 = vdwg.mxu0
  %1191 = vmatpush.bf16.msra.mxu0 %v912
  %1192 = vmatpush.bf16.msra.mxu0 %v911
  %1193 = vmatpush.bf16.msra.mxu0 %v910
  %1194 = vmatpush.bf16.msra.mxu0 %v909
  %1195 = vmatpush.bf16.msra.mxu0 %v908
  %1196 = vmatpush.bf16.msra.mxu0 %v907
  %1197 = vmatpush.bf16.msra.mxu0 %v906
  %1198 = vmatpush.bf16.msra.mxu0 %v905
  %1199 = vmatmul.bf16.gmra.mxu0 %v319
  %v1200 = vpop.f32.mrf.mxu0
  %v1201 = vadd.f32 %v1188, %v1200
  %v1202 = vpop.f32.mrf.mxu0
  %1203 = vdwg.mxu0
  %1204 = vmatpush.bf16.msra.mxu0 %v920
  %1205 = vmatpush.bf16.msra.mxu0 %v919
  %1206 = vmatpush.bf16.msra.mxu0 %v918
  %1207 = vmatpush.bf16.msra.mxu0 %v917
  %1208 = vmatpush.bf16.msra.mxu0 %v916
  %1209 = vmatpush.bf16.msra.mxu0 %v915
  %1210 = vmatpush.bf16.msra.mxu0 %v914
  %1211 = vmatpush.bf16.msra.mxu0 %v913
  %1212 = vmatmul.bf16.gmra.mxu0 %v320
  %v1213 = vpop.f32.mrf.mxu0
  %v1214 = vadd.f32 %v1201, %v1213
  %v1215 = vpop.f32.mrf.mxu0
  %1216 = vdwg.mxu0
  %1217 = vmatpush.bf16.msra.mxu0 %v928
  %1218 = vmatpush.bf16.msra.mxu0 %v927
  %1219 = vmatpush.bf16.msra.mxu0 %v926
  %1220 = vmatpush.bf16.msra.mxu0 %v925
  %1221 = vmatpush.bf16.msra.mxu0 %v924
  %1222 = vmatpush.bf16.msra.mxu0 %v923
  %1223 = vmatpush.bf16.msra.mxu0 %v922
  %1224 = vmatpush.bf16.msra.mxu0 %v921
  %1225 = vmatmul.bf16.gmra.mxu0 %v321
  %v1226 = vpop.f32.mrf.mxu0
  %v1227 = vadd.f32 %v1214, %v1226
  %v1228 = vpop.f32.mrf.mxu0
  %1229 = vdwg.mxu0
  %1230 = vmatpush.bf16.msra.mxu0 %v936
  %1231 = vmatpush.bf16.msra.mxu0 %v935
  %1232 = vmatpush.bf16.msra.mxu0 %v934
  %1233 = vmatpush.bf16.msra.mxu0 %v933
  %1234 = vmatpush.bf16.msra.mxu0 %v932
  %1235 = vmatpush.bf16.msra.mxu0 %v931
  %1236 = vmatpush.bf16.msra.mxu0 %v930
  %1237 = vmatpush.bf16.msra.mxu0 %v929
  %1238 = vmatmul.bf16.gmra.mxu0 %v322
  %v1239 = vpop.f32.mrf.mxu0
  %v1240 = vadd.f32 %v1227, %v1239
  %v1241 = vpop.f32.mrf.mxu0
  %1242 = vdwg.mxu0
  %1243 = vmatpush.bf16.msra.mxu0 %v944
  %1244 = vmatpush.bf16.msra.mxu0 %v943
  %1245 = vmatpush.bf16.msra.mxu0 %v942
  %1246 = vmatpush.bf16.msra.mxu0 %v941
  %1247 = vmatpush.bf16.msra.mxu0 %v940
  %1248 = vmatpush.bf16.msra.mxu0 %v939
  %1249 = vmatpush.bf16.msra.mxu0 %v938
  %1250 = vmatpush.bf16.msra.mxu0 %v937
  %1251 = vmatmul.bf16.gmra.mxu0 %v323
  %v1252 = vpop.f32.mrf.mxu0
  %v1253 = vadd.f32 %v1240, %v1252
  %v1254 = vpop.f32.mrf.mxu0
  %1255 = vdwg.mxu0
  %1256 = vmatpush.bf16.msra.mxu0 %v952
  %1257 = vmatpush.bf16.msra.mxu0 %v951
  %1258 = vmatpush.bf16.msra.mxu0 %v950
  %1259 = vmatpush.bf16.msra.mxu0 %v949
  %1260 = vmatpush.bf16.msra.mxu0 %v948
  %1261 = vmatpush.bf16.msra.mxu0 %v947
  %1262 = vmatpush.bf16.msra.mxu0 %v946
  %1263 = vmatpush.bf16.msra.mxu0 %v945
  %1264 = vmatmul.bf16.gmra.mxu0 %v324
  %v1265 = vpop.f32.mrf.mxu0
  %v1266 = vadd.f32 %v1253, %v1265
  %v1267 = vpop.f32.mrf.mxu0
  %1268 = vdwg.mxu0
  %1269 = vmatpush.bf16.msra.mxu0 %v960
  %1270 = vmatpush.bf16.msra.mxu0 %v959
  %1271 = vmatpush.bf16.msra.mxu0 %v958
  %1272 = vmatpush.bf16.msra.mxu0 %v957
  %1273 = vmatpush.bf16.msra.mxu0 %v956
  %1274 = vmatpush.bf16.msra.mxu0 %v955
  %1275 = vmatpush.bf16.msra.mxu0 %v954
  %1276 = vmatpush.bf16.msra.mxu0 %v953
  %1277 = vmatmul.bf16.gmra.mxu0 %v325
  %v1278 = vpop.f32.mrf.mxu0
  %v1279 = vadd.f32 %v1266, %v1278
  %v1280 = vpop.f32.mrf.mxu0
  %1281 = vdwg.mxu0
  %1282 = vmatpush.bf16.msra.mxu0 %v968
  %1283 = vmatpush.bf16.msra.mxu0 %v967
  %1284 = vmatpush.bf16.msra.mxu0 %v966
  %1285 = vmatpush.bf16.msra.mxu0 %v965
  %1286 = vmatpush.bf16.msra.mxu0 %v964
  %1287 = vmatpush.bf16.msra.mxu0 %v963
  %1288 = vmatpush.bf16.msra.mxu0 %v962
  %1289 = vmatpush.bf16.msra.mxu0 %v961
  %1290 = vmatmul.bf16.gmra.mxu0 %v326
  %v1291 = vpop.f32.mrf.mxu0
  %v1292 = vadd.f32 %v1279, %v1291
  %v1293 = vpop.f32.mrf.mxu0
  %1294 = vdwg.mxu0
  %1295 = vmatpush.bf16.msra.mxu0 %v976
  %1296 = vmatpush.bf16.msra.mxu0 %v975
  %1297 = vmatpush.bf16.msra.mxu0 %v974
  %1298 = vmatpush.bf16.msra.mxu0 %v973
  %1299 = vmatpush.bf16.msra.mxu0 %v972
  %1300 = vmatpush.bf16.msra.mxu0 %v971
  %1301 = vmatpush.bf16.msra.mxu0 %v970
  %1302 = vmatpush.bf16.msra.mxu0 %v969
  %1303 = vmatmul.bf16.gmra.mxu0 %v327
  %v1304 = vpop.f32.mrf.mxu0
  %v1305 = vadd.f32 %v1292, %v1304
  %v1306 = vpop.f32.mrf.mxu0
  %1307 = vdwg.mxu0
  %1308 = vmatpush.bf16.msra.mxu0 %v984
  %1309 = vmatpush.bf16.msra.mxu0 %v983
  %1310 = vmatpush.bf16.msra.mxu0 %v982
  %1311 = vmatpush.bf16.msra.mxu0 %v981
  %1312 = vmatpush.bf16.msra.mxu0 %v980
  %1313 = vmatpush.bf16.msra.mxu0 %v979
  %1314 = vmatpush.bf16.msra.mxu0 %v978
  %1315 = vmatpush.bf16.msra.mxu0 %v977
  %1316 = vmatmul.bf16.gmra.mxu0 %v328
  %v1317 = vpop.f32.mrf.mxu0
  %v1318 = vadd.f32 %v1305, %v1317
  %v1319 = vpop.f32.mrf.mxu0
  %1320 = vdwg.mxu0
  %v1321 = vmax.f32 %v1318, 0.0
  %v1322 = vpack.c.bf16 %v1321, %v1321
  %v1323 = vld [vmem:[%s3] sm:$0xf]
  %v1324 = vld [vmem:[%s3 + $0x4] sm:$0xf]
  %v1325 = vld [vmem:[%s3 + $0x8] sm:$0xf]
  %v1326 = vld [vmem:[%s3 + $0xc] sm:$0xf]
  %v1327 = vld [vmem:[%s3 + $0x10] sm:$0xf]
  %v1328 = vld [vmem:[%s3 + $0x14] sm:$0xf]
  %v1329 = vld [vmem:[%s3 + $0x18] sm:$0xf]
  %v1330 = vld [vmem:[%s3 + $0x1c] sm:$0xf]
  %v1331 = vld [vmem:[%s4] sm:$0x1]
  %v1333 = vperm.slane %v1331, 0
  %v1343 = vunpack.c.l.b16 %v1323
  %v1344 = vunpack.c.l.b16 %v1324
  %v1345 = vunpack.c.l.b16 %v1325
  %v1346 = vunpack.c.l.b16 %v1326
  %v1347 = vunpack.c.l.b16 %v1327
  %v1348 = vunpack.c.l.b16 %v1328
  %v1349 = vunpack.c.l.b16 %v1329
  %v1350 = vunpack.c.l.b16 %v1330
  %v1351 = vpack.c.b16 %v1344, %v1343
  %v1352 = vpack.c.b16 %v1346, %v1345
  %v1353 = vpack.c.b16 %v1348, %v1347
  %v1354 = vpack.c.b16 %v1350, %v1349
  %vm1359 = vcmask 523264
  %v1361 = vsel %vm1359, %v1322, 0
  %1363 = vmatpush.bf16.msra.mxu0 0
  %1364 = vmatpush.bf16.msra.mxu0 0
  %1365 = vmatpush.bf16.msra.mxu0 0
  %1366 = vmatpush.bf16.msra.mxu0 0
  %1367 = vmatpush.bf16.msra.mxu0 %v1354
  %1368 = vmatpush.bf16.msra.mxu0 %v1353
  %1369 = vmatpush.bf16.msra.mxu0 %v1352
  %1370 = vmatpush.bf16.msra.mxu0 %v1351
  %1371 = vmatmul.bf16.gmra.mxu0 %v1361
  %v1372 = vpop.f32.mrf.mxu0
  %v1373 = vadd.f32 %v1333, %v1372
  %v1374 = vpop.f32.mrf.mxu0
  %1375 = vdwg.mxu0
  %vm1376 = vcmask 31744
  %1377 = vst.msk [vmem:[%s5] sm:$0xff] %vm1376, %v1373
  // Predicated region
  $region22: #{cnn2_forward.3} parent=0 // pred_check
    _
  $region23: #{cnn2_forward.3} parent=0 // pred_check_branch
    %1379 = sbr.rel (0) target = $region25
  $region24: #{cnn2_forward.3} parent=0 // pred_region
    _
  $region25: #{cnn2_forward.3} parent=0 // pred_fallthru
    _
  // Predicated region
  $region26: #{cnn2_forward.3} parent=0 // pred_check
    _
  $region27: #{cnn2_forward.3} parent=0 // pred_check_branch
    %1381 = sbr.rel (0) target = $region29
  $region28: #{cnn2_forward.3} parent=0 // pred_region
    _
  $region29: #{cnn2_forward.3} parent=0 // pred_fallthru
    _

// kernel: cnn2_forward.2
$region0: #{cnn2_forward.2}
  #allocation0 [shape = 'u32[]', space=smem, size = 0x4, offset = 0x4, fixed_abs, tag = 'smem constant byte address 0x4 - core index']
  #allocation1 [shape = 'u32[72,128]{1,0:T(1,128)}', space=vmem, size = 0x9000, scoped, tag = 'internal scratch']
  %s0 = inlined_call_operand.vmem [shape: f32[2,1024], index: 0, kind: input, shape index: {}]
  %s1 = inlined_call_operand.vmem [shape: f32[96,2], index: 1, kind: input, shape index: {}]
  %s2 = inlined_call_operand.vmem [shape: bf16[2,96,32], index: 2, kind: input, shape index: {}]
  %s3 = inlined_call_operand.vmem [shape: f32[32,3], index: 3, kind: input, shape index: {}]
  %s4 = inlined_call_operand.vmem [shape: f32[4,32,512], index: 4, kind: input, shape index: {}]
  %s5 = inlined_call_operand.vmem [shape: f32[2,32,64], index: 5, kind: input, shape index: {}]
  %s6 = inlined_call_operand.vmem [shape: bf16[128,64], index: 6, kind: input, shape index: {}]
  %s7 = inlined_call_operand.vmem [shape: bf16[32,512], index: 7, kind: output, shape index: {}]
  %s8 = sld [smem:[#allocation0]]
  $region95: #{cnn2_forward.2} parent=0
    _
  %s10 = ssub.s32 1, %s8
  %s11 = scalar_select 0, %s10, %s8
  $region1: #{cnn2_forward.2} parent=0
    #allocation2 [shape = 'u8[32768]{0}', space=vmem, size = 0x8000, scoped, tag = 'output window, operand 0']
    loop: start=0, step=1, limit=4
    $region2: #{cnn2_forward.2} parent=1 // loop_pre_header
      _
    $region3: #{cnn2_forward.2} parent=1 // loop_header
      %s13 = sphi 0, %s17
      %p14 = scmp.ge.s32.totalorder %s13, 4
      %s23 = sphi 0, %s25
      %s26 = sphi 0, %s23
      %s27 = sphi 0, %s26
      %s43 = sphi 0, %s27
      %s47 = sphi 0, %s47
      %s49 = sphi 0, %s47
      %s50 = sphi 0, %s49
      %s64 = sphi 0, %s50
      %s68 = sphi 0, %s68
      %s70 = sphi 0, %s68
      %s71 = sphi 0, %s70
      %s85 = sphi 0, %s71
      %s89 = sphi 0, %s89
      %s91 = sphi 0, %s89
      %s92 = sphi 0, %s91
      %s106 = sphi 0, %s92
      %s110 = sphi 0, %s110
      %s112 = sphi 0, %s110
      %s113 = sphi 0, %s112
      %s127 = sphi 0, %s113
      %s131 = sphi 0, %s131
      %s133 = sphi 0, %s131
      %s134 = sphi 0, %s133
      %s148 = sphi 0, %s134
      %s152 = sphi 0, %s152
      %s154 = sphi 0, %s152
      %s155 = sphi 0, %s154
      %s169 = sphi 0, %s155
      %s175 = sphi 0, %s177
      %s178 = sphi 0, %s175
      %s179 = sphi 0, %s178
      %s195 = sphi 0, %s179
    $region4: #{cnn2_forward.2} parent=1 // loop_header_branch
      %16 = sbr.rel (%p14) target = $region8
    $region5: #{cnn2_forward.2} parent=1 // loop_body
      %s18 = ssub.s32 %s13, 1
      %s19 = ssub.s32 %s13, 2
      %s20 = sadd.s32 %s13, 1
      %s21 = ssub.s32 %s13, %s20
      %p22 = scmp.eq.s32.totalorder %s21, 0
      %s24 = sadd.s32 %s23, 1
      %s25 = scalar_select %p22, %s23, %s24
      %p28 = pneg %p22
      %p29 = scmp.eq.s32.totalorder %s13, 1
      %p30 = por %p28, %p29
      %p31 = scmp.ne.s32.totalorder %s23, %s26
      %p32 = scmp.eq.s32.totalorder %s13, 0
      %p33 = por %p31, %p32
      %p34 = scmp.ne.s32.totalorder %s23, %s26
      %p35 = scmp.eq.s32.totalorder %s18, 1
      %p36 = por %p34, %p35
      %p37 = scmp.ne.s32.totalorder %s26, %s27
      %p38 = scmp.eq.s32.totalorder %s18, 0
      %p39 = por %p37, %p38
      %p40 = scmp.ne.s32.totalorder %s26, %s27
      %p41 = scmp.eq.s32.totalorder %s19, 1
      %p42 = por %p40, %p41
      %p44 = scmp.ne.s32.totalorder %s27, %s43
      %p45 = scmp.eq.s32.totalorder %s19, 0
      %p46 = por %p44, %p45
      %s48 = sadd.s32 %s47, 1
      %p51 = scmp.eq.s32.totalorder %s13, 1
      %p52 = scmp.ne.s32.totalorder %s47, %s49
      %p53 = scmp.eq.s32.totalorder %s13, 0
      %p54 = por %p52, %p53
      %p55 = scmp.ne.s32.totalorder %s47, %s49
      %p56 = scmp.eq.s32.totalorder %s18, 1
      %p57 = por %p55, %p56
      %p58 = scmp.ne.s32.totalorder %s49, %s50
      %p59 = scmp.eq.s32.totalorder %s18, 0
      %p60 = por %p58, %p59
      %p61 = scmp.ne.s32.totalorder %s49, %s50
      %p62 = scmp.eq.s32.totalorder %s19, 1
      %p63 = por %p61, %p62
      %p65 = scmp.ne.s32.totalorder %s50, %s64
      %p66 = scmp.eq.s32.totalorder %s19, 0
      %p67 = por %p65, %p66
      %s69 = sadd.s32 %s68, 1
      %p72 = scmp.eq.s32.totalorder %s13, 1
      %p73 = scmp.ne.s32.totalorder %s68, %s70
      %p74 = scmp.eq.s32.totalorder %s13, 0
      %p75 = por %p73, %p74
      %p76 = scmp.ne.s32.totalorder %s68, %s70
      %p77 = scmp.eq.s32.totalorder %s18, 1
      %p78 = por %p76, %p77
      %p79 = scmp.ne.s32.totalorder %s70, %s71
      %p80 = scmp.eq.s32.totalorder %s18, 0
      %p81 = por %p79, %p80
      %p82 = scmp.ne.s32.totalorder %s70, %s71
      %p83 = scmp.eq.s32.totalorder %s19, 1
      %p84 = por %p82, %p83
      %p86 = scmp.ne.s32.totalorder %s71, %s85
      %p87 = scmp.eq.s32.totalorder %s19, 0
      %p88 = por %p86, %p87
      %s90 = sadd.s32 %s89, 1
      %p93 = scmp.eq.s32.totalorder %s13, 1
      %p94 = scmp.ne.s32.totalorder %s89, %s91
      %p95 = scmp.eq.s32.totalorder %s13, 0
      %p96 = por %p94, %p95
      %p97 = scmp.ne.s32.totalorder %s89, %s91
      %p98 = scmp.eq.s32.totalorder %s18, 1
      %p99 = por %p97, %p98
      %p100 = scmp.ne.s32.totalorder %s91, %s92
      %p101 = scmp.eq.s32.totalorder %s18, 0
      %p102 = por %p100, %p101
      %p103 = scmp.ne.s32.totalorder %s91, %s92
      %p104 = scmp.eq.s32.totalorder %s19, 1
      %p105 = por %p103, %p104
      %p107 = scmp.ne.s32.totalorder %s92, %s106
      %p108 = scmp.eq.s32.totalorder %s19, 0
      %p109 = por %p107, %p108
      %s111 = sadd.s32 %s110, 1
      %p114 = scmp.eq.s32.totalorder %s13, 1
      %p115 = scmp.ne.s32.totalorder %s110, %s112
      %p116 = scmp.eq.s32.totalorder %s13, 0
      %p117 = por %p115, %p116
      %p118 = scmp.ne.s32.totalorder %s110, %s112
      %p119 = scmp.eq.s32.totalorder %s18, 1
      %p120 = por %p118, %p119
      %p121 = scmp.ne.s32.totalorder %s112, %s113
      %p122 = scmp.eq.s32.totalorder %s18, 0
      %p123 = por %p121, %p122
      %p124 = scmp.ne.s32.totalorder %s112, %s113
      %p125 = scmp.eq.s32.totalorder %s19, 1
      %p126 = por %p124, %p125
      %p128 = scmp.ne.s32.totalorder %s113, %s127
      %p129 = scmp.eq.s32.totalorder %s19, 0
      %p130 = por %p128, %p129
      %s132 = sadd.s32 %s131, 1
      %p135 = scmp.eq.s32.totalorder %s13, 1
      %p136 = scmp.ne.s32.totalorder %s131, %s133
      %p137 = scmp.eq.s32.totalorder %s13, 0
      %p138 = por %p136, %p137
      %p139 = scmp.ne.s32.totalorder %s131, %s133
      %p140 = scmp.eq.s32.totalorder %s18, 1
      %p141 = por %p139, %p140
      %p142 = scmp.ne.s32.totalorder %s133, %s134
      %p143 = scmp.eq.s32.totalorder %s18, 0
      %p144 = por %p142, %p143
      %p145 = scmp.ne.s32.totalorder %s133, %s134
      %p146 = scmp.eq.s32.totalorder %s19, 1
      %p147 = por %p145, %p146
      %p149 = scmp.ne.s32.totalorder %s134, %s148
      %p150 = scmp.eq.s32.totalorder %s19, 0
      %p151 = por %p149, %p150
      %s153 = sadd.s32 %s152, 1
      %p156 = scmp.eq.s32.totalorder %s13, 1
      %p157 = scmp.ne.s32.totalorder %s152, %s154
      %p158 = scmp.eq.s32.totalorder %s13, 0
      %p159 = por %p157, %p158
      %p160 = scmp.ne.s32.totalorder %s152, %s154
      %p161 = scmp.eq.s32.totalorder %s18, 1
      %p162 = por %p160, %p161
      %p163 = scmp.ne.s32.totalorder %s154, %s155
      %p164 = scmp.eq.s32.totalorder %s18, 0
      %p165 = por %p163, %p164
      %p166 = scmp.ne.s32.totalorder %s154, %s155
      %p167 = scmp.eq.s32.totalorder %s19, 1
      %p168 = por %p166, %p167
      %p170 = scmp.ne.s32.totalorder %s155, %s169
      %p171 = scmp.eq.s32.totalorder %s19, 0
      %p172 = por %p170, %p171
      %s173 = ssub.s32 %s13, %s20
      %p174 = scmp.eq.s32.totalorder %s173, 0
      %s176 = sadd.s32 %s175, 1
      %s177 = scalar_select %p174, %s175, %s176
      %p180 = pneg %p174
      %p181 = scmp.eq.s32.totalorder %s13, 1
      %p182 = por %p180, %p181
      %p183 = scmp.ne.s32.totalorder %s175, %s178
      %p184 = scmp.eq.s32.totalorder %s13, 0
      %p185 = por %p183, %p184
      %p186 = scmp.ne.s32.totalorder %s175, %s178
      %p187 = scmp.eq.s32.totalorder %s18, 1
      %p188 = por %p186, %p187
      %p189 = scmp.ne.s32.totalorder %s178, %s179
      %p190 = scmp.eq.s32.totalorder %s18, 0
      %p191 = por %p189, %p190
      %p192 = scmp.ne.s32.totalorder %s178, %s179
      %p193 = scmp.eq.s32.totalorder %s19, 1
      %p194 = por %p192, %p193
      %p196 = scmp.ne.s32.totalorder %s179, %s195
      %p197 = scmp.eq.s32.totalorder %s19, 0
      %p198 = por %p196, %p197
      %p199 = scmp.le.s32.totalorder 1, %s13
      %p200 = scmp.lt.s32.totalorder %s13, 3
      %p201 = pnand %p199, %p200
      %p202 = pneg %p201
      // Predicated region
      $region9: #{cnn2_forward.2} parent=5 // pred_check
        _
      $region10: #{cnn2_forward.2} parent=5 // pred_check_branch
        %204 = sbr.rel (%p201) target = $region12
      $region11: #{cnn2_forward.2} parent=5 // pred_region
        %s205 = ssub.s32 %s13, 1
        // Predicated region
        $region13: #{cnn2_forward.2} parent=11 // pred_check
          %p206 = pneg %p60
        $region14: #{cnn2_forward.2} parent=11 // pred_check_branch
          %208 = sbr.rel (%p206) target = $region16
        $region15: #{cnn2_forward.2} parent=11 // pred_region
          _
        $region16: #{cnn2_forward.2} parent=11 // pred_fallthru
          _
        // Predicated region
        $region17: #{cnn2_forward.2} parent=11 // pred_check
          %p209 = pneg %p81
        $region18: #{cnn2_forward.2} parent=11 // pred_check_branch
          %211 = sbr.rel (%p209) target = $region20
        $region19: #{cnn2_forward.2} parent=11 // pred_region
          _
        $region20: #{cnn2_forward.2} parent=11 // pred_fallthru
          _
        // Predicated region
        $region21: #{cnn2_forward.2} parent=11 // pred_check
          %p212 = pneg %p102
        $region22: #{cnn2_forward.2} parent=11 // pred_check_branch
          %214 = sbr.rel (%p212) target = $region24
        $region23: #{cnn2_forward.2} parent=11 // pred_region
          _
        $region24: #{cnn2_forward.2} parent=11 // pred_fallthru
          _
        // Predicated region
        $region25: #{cnn2_forward.2} parent=11 // pred_check
          %p215 = pneg %p123
        $region26: #{cnn2_forward.2} parent=11 // pred_check_branch
          %217 = sbr.rel (%p215) target = $region28
        $region27: #{cnn2_forward.2} parent=11 // pred_region
          _
        $region28: #{cnn2_forward.2} parent=11 // pred_fallthru
          _
        // Predicated region
        $region29: #{cnn2_forward.2} parent=11 // pred_check
          %p218 = pneg %p144
        $region30: #{cnn2_forward.2} parent=11 // pred_check_branch
          %220 = sbr.rel (%p218) target = $region32
        $region31: #{cnn2_forward.2} parent=11 // pred_region
          _
        $region32: #{cnn2_forward.2} parent=11 // pred_fallthru
          _
        // Predicated region
        $region33: #{cnn2_forward.2} parent=11 // pred_check
          %p221 = pneg %p165
        $region34: #{cnn2_forward.2} parent=11 // pred_check_branch
          %223 = sbr.rel (%p221) target = $region36
        $region35: #{cnn2_forward.2} parent=11 // pred_region
          _
        $region36: #{cnn2_forward.2} parent=11 // pred_fallthru
          _
      $region12: #{cnn2_forward.2} parent=5 // pred_fallthru
        _
      %p224 = scmp.lt.s32.totalorder %s13, 2
      // Predicated region
      $region37: #{cnn2_forward.2} parent=5 // pred_check
        %p225 = pneg %p224
      $region38: #{cnn2_forward.2} parent=5 // pred_check_branch
        %227 = sbr.rel (%p225) target = $region40
      $region39: #{cnn2_forward.2} parent=5 // pred_region
        // Predicated region
        $region41: #{cnn2_forward.2} parent=39 // pred_check
          %p228 = pneg %p33
        $region42: #{cnn2_forward.2} parent=39 // pred_check_branch
          %230 = sbr.rel (%p228) target = $region44
        $region43: #{cnn2_forward.2} parent=39 // pred_region
          %s231 = smul.u32 4, %s13
          %p232 = scmp.lt.s32.totalorder %s231, 7
          %s233 = scalar_select %p232, %s231, 7
          %s234 = smul.addr %s233, 2
          %s235 = scalar_lea.vmem %s0, %s234
          %s236 = smul.u32 4, %s13
        $region44: #{cnn2_forward.2} parent=39 // pred_fallthru
          _
      $region40: #{cnn2_forward.2} parent=5 // pred_fallthru
        _
      %p237 = scmp.le.s32.totalorder 1, %s13
      %p238 = scmp.lt.s32.totalorder %s13, 3
      %p239 = pnand %p237, %p238
      %p240 = pneg %p239
      // Predicated region
      $region45: #{cnn2_forward.2} parent=5 // pred_check
        _
      $region46: #{cnn2_forward.2} parent=5 // pred_check_branch
        %242 = sbr.rel (%p239) target = $region48
      $region47: #{cnn2_forward.2} parent=5 // pred_region
        %s243 = ssub.s32 %s13, 1
        %s244 = smul.u32 4, %s18
        %p245 = scmp.lt.s32.totalorder %s244, 7
        %s246 = scalar_select %p245, %s244, 7
        %s247 = smul.addr %s246, 2
        %s248 = scalar_lea.vmem %s0, %s247
        %p249 = pneg %p39
        %p250 = pneg %p36
        %p251 = pneg %p60
        %p252 = pneg %p57
        %p253 = pneg %p81
        %p254 = pneg %p78
        %p255 = pneg %p102
        %p256 = pneg %p99
        %p257 = pneg %p123
        %p258 = pneg %p120
        %p259 = pneg %p144
        %p260 = pneg %p141
        %p261 = pneg %p165
        %p262 = pneg %p162
        %p263 = pneg %p191
        %p264 = pneg %p188
        %s265 = sand.u32 %s178, 1
        %s266 = sand.u32 %s178, 1
        %s267 = smul.addr %s266, 32
        %s268 = scalar_lea.vmem [#allocation2], %s267
        %s269 = smul.u32 4, %s18
        %p270 = scmp.lt.s32.totalorder %s269, 7
        %s271 = scalar_select %p270, %s269, 7
        %s272 = smul.addr %s271, 2
        %s273 = scalar_lea.vmem %s0, %s272
        %s274 = smul.u32 4, %s18
        %s275 = smul.u32 2, %s18
        %v277 = vlaneseq
        %v278 = vand.u32 %v277, 127
        %v279 = vadd.s32 %v278, 128
        %v280 = vadd.s32 %v278, 256
        %v281 = vadd.s32 %v278, 384
        %v282 = vand.u32 %v278, 127
        %v283 = vand.u32 %v279, 127
        %v284 = vand.u32 %v280, 127
        %v285 = vand.u32 %v281, 127
        %vm286 = vcmp.ne.s32.totalorder %v282, 0
        %vm287 = vcmp.ne.s32.totalorder %v283, 0
        %vm288 = vcmp.ne.s32.totalorder %v284, 0
        %vm289 = vcmp.ne.s32.totalorder %v285, 0
        %v290 = vsel %vm286, 1, 0
        %v291 = vsel %vm287, 1, 0
        %v292 = vsel %vm288, 1, 0
        %v293 = vsel %vm289, 1, 0
        %v294 = vcvt.s32.f32 %v290
        %v295 = vcvt.s32.f32 %v291
        %v296 = vcvt.s32.f32 %v292
        %v297 = vcvt.s32.f32 %v293
        %vm298 = vcmp.ne.s32.totalorder %v282, 127
        %vm299 = vcmp.ne.s32.totalorder %v283, 127
        %vm300 = vcmp.ne.s32.totalorder %v284, 127
        %vm301 = vcmp.ne.s32.totalorder %v285, 127
        %v302 = vsel %vm298, 1, 0
        %v303 = vsel %vm299, 1, 0
        %v304 = vsel %vm300, 1, 0
        %v305 = vsel %vm301, 1, 0
        %v306 = vcvt.s32.f32 %v302
        %v307 = vcvt.s32.f32 %v303
        %v308 = vcvt.s32.f32 %v304
        %v309 = vcvt.s32.f32 %v305
        %v310 = vld [vmem:[%s3] sm:$0xff]
        %v311 = vld [vmem:[%s3 + $0x8] sm:$0xff]
        %v312 = vld [vmem:[%s3 + $0x10] sm:$0xff]
        %v313 = vld [vmem:[%s3 + $0x18] sm:$0xff]
        %v314 = vld [vmem:[%s1] sm:$0xff]
        %v315 = vld [vmem:[%s1 + $0x8] sm:$0xff]
        %v316 = vld [vmem:[%s1 + $0x10] sm:$0xff]
        %v317 = vld [vmem:[%s1 + $0x18] sm:$0xff]
        %v318 = vld [vmem:[%s1 + $0x20] sm:$0xff]
        %v319 = vld [vmem:[%s1 + $0x28] sm:$0xff]
        %v320 = vld [vmem:[%s1 + $0x30] sm:$0xff]
        %v321 = vld [vmem:[%s1 + $0x38] sm:$0xff]
        %v322 = vld [vmem:[%s1 + $0x40] sm:$0xff]
        %v323 = vld [vmem:[%s1 + $0x48] sm:$0xff]
        %v324 = vld [vmem:[%s1 + $0x50] sm:$0xff]
        %v325 = vld [vmem:[%s1 + $0x58] sm:$0xff]
        %v326 = vld [vmem:[%s273] sm:$0xff]
        %328 = vset.pattern.permute.xlu0 0
        %329 = vperm.xlu0 %328, %v314
        %v330 = vpop.permute.xlu0 %329
        %333 = vset.pattern.permute.xlu0 0
        %334 = vperm.xlu0 %333, %v315
        %v335 = vpop.permute.xlu0 %334
        %338 = vset.pattern.permute.xlu0 0
        %339 = vperm.xlu0 %338, %v316
        %v340 = vpop.permute.xlu0 %339
        %343 = vset.pattern.permute.xlu0 0
        %344 = vperm.xlu0 %343, %v317
        %v345 = vpop.permute.xlu0 %344
        %348 = vset.pattern.permute.xlu0 0
        %349 = vperm.xlu0 %348, %v318
        %v350 = vpop.permute.xlu0 %349
        %353 = vset.pattern.permute.xlu0 0
        %354 = vperm.xlu0 %353, %v319
        %v355 = vpop.permute.xlu0 %354
        %358 = vset.pattern.permute.xlu0 0
        %359 = vperm.xlu0 %358, %v320
        %v360 = vpop.permute.xlu0 %359
        %363 = vset.pattern.permute.xlu0 0
        %364 = vperm.xlu0 %363, %v321
        %v365 = vpop.permute.xlu0 %364
        %368 = vset.pattern.permute.xlu0 0
        %369 = vperm.xlu0 %368, %v322
        %v370 = vpop.permute.xlu0 %369
        %373 = vset.pattern.permute.xlu0 0
        %374 = vperm.xlu0 %373, %v323
        %v375 = vpop.permute.xlu0 %374
        %378 = vset.pattern.permute.xlu0 0
        %379 = vperm.xlu0 %378, %v324
        %v380 = vpop.permute.xlu0 %379
        %383 = vset.pattern.permute.xlu0 0
        %384 = vperm.xlu0 %383, %v325
        %v385 = vpop.permute.xlu0 %384
        %v388 = vperm.slane %v326, 0
        %v389 = vperm.slane %v326, 2
        %v390 = vperm.slane %v326, 4
        %v391 = vperm.slane %v326, 6
        %v396 = vperm.slane %v388, 0
        %v397 = vperm.slane %v389, 0
        %v398 = vperm.slane %v390, 0
        %v399 = vperm.slane %v391, 0
        %v400 = vmul.f32 %v330, %v396
        %v401 = vmul.f32 %v330, %v397
        %v402 = vmul.f32 %v330, %v398
        %v403 = vmul.f32 %v330, %v399
        %v404 = vmul.f32 %v335, %v396
        %v405 = vmul.f32 %v335, %v397
        %v406 = vmul.f32 %v335, %v398
        %v407 = vmul.f32 %v335, %v399
        %v408 = vmul.f32 %v340, %v396
        %v409 = vmul.f32 %v340, %v397
        %v410 = vmul.f32 %v340, %v398
        %v411 = vmul.f32 %v340, %v399
        %v412 = vmul.f32 %v345, %v396
        %v413 = vmul.f32 %v345, %v397
        %v414 = vmul.f32 %v345, %v398
        %v415 = vmul.f32 %v345, %v399
        %v416 = vmul.f32 %v350, %v396
        %v417 = vmul.f32 %v350, %v397
        %v418 = vmul.f32 %v350, %v398
        %v419 = vmul.f32 %v350, %v399
        %v420 = vmul.f32 %v355, %v396
        %v421 = vmul.f32 %v355, %v397
        %v422 = vmul.f32 %v355, %v398
        %v423 = vmul.f32 %v355, %v399
        %v424 = vmul.f32 %v360, %v396
        %v425 = vmul.f32 %v360, %v397
        %v426 = vmul.f32 %v360, %v398
        %v427 = vmul.f32 %v360, %v399
        %v428 = vmul.f32 %v365, %v396
        %v429 = vmul.f32 %v365, %v397
        %v430 = vmul.f32 %v365, %v398
        %v431 = vmul.f32 %v365, %v399
        %v432 = vmul.f32 %v370, %v396
        %v433 = vmul.f32 %v370, %v397
        %v434 = vmul.f32 %v370, %v398
        %v435 = vmul.f32 %v370, %v399
        %v436 = vmul.f32 %v375, %v396
        %v437 = vmul.f32 %v375, %v397
        %v438 = vmul.f32 %v375, %v398
        %v439 = vmul.f32 %v375, %v399
        %v440 = vmul.f32 %v380, %v396
        %v441 = vmul.f32 %v380, %v397
        %v442 = vmul.f32 %v380, %v398
        %v443 = vmul.f32 %v380, %v399
        %v444 = vmul.f32 %v385, %v396
        %v445 = vmul.f32 %v385, %v397
        %v446 = vmul.f32 %v385, %v398
        %v447 = vmul.f32 %v385, %v399
        %448 = vset.pattern.permute.xlu0 1
        %449 = vperm.xlu0 %448, %v314
        %v450 = vpop.permute.xlu0 %449
        %452 = vset.pattern.permute.xlu0 1
        %453 = vperm.xlu0 %452, %v315
        %v454 = vpop.permute.xlu0 %453
        %456 = vset.pattern.permute.xlu0 1
        %457 = vperm.xlu0 %456, %v316
        %v458 = vpop.permute.xlu0 %457
        %460 = vset.pattern.permute.xlu0 1
        %461 = vperm.xlu0 %460, %v317
        %v462 = vpop.permute.xlu0 %461
        %464 = vset.pattern.permute.xlu0 1
        %465 = vperm.xlu0 %464, %v318
        %v466 = vpop.permute.xlu0 %465
        %468 = vset.pattern.permute.xlu0 1
        %469 = vperm.xlu0 %468, %v319
        %v470 = vpop.permute.xlu0 %469
        %472 = vset.pattern.permute.xlu0 1
        %473 = vperm.xlu0 %472, %v320
        %v474 = vpop.permute.xlu0 %473
        %476 = vset.pattern.permute.xlu0 1
        %477 = vperm.xlu0 %476, %v321
        %v478 = vpop.permute.xlu0 %477
        %480 = vset.pattern.permute.xlu0 1
        %481 = vperm.xlu0 %480, %v322
        %v482 = vpop.permute.xlu0 %481
        %484 = vset.pattern.permute.xlu0 1
        %485 = vperm.xlu0 %484, %v323
        %v486 = vpop.permute.xlu0 %485
        %488 = vset.pattern.permute.xlu0 1
        %489 = vperm.xlu0 %488, %v324
        %v490 = vpop.permute.xlu0 %489
        %492 = vset.pattern.permute.xlu0 1
        %493 = vperm.xlu0 %492, %v325
        %v494 = vpop.permute.xlu0 %493
        %v496 = vperm.slane %v326, 1
        %v497 = vperm.slane %v326, 3
        %v498 = vperm.slane %v326, 5
        %v499 = vperm.slane %v326, 7
        %v504 = vperm.slane %v496, 1
        %v505 = vperm.slane %v497, 1
        %v506 = vperm.slane %v498, 1
        %v507 = vperm.slane %v499, 1
        %v508 = vmul.f32 %v450, %v504
        %v509 = vmul.f32 %v450, %v505
        %v510 = vmul.f32 %v450, %v506
        %v511 = vmul.f32 %v450, %v507
        %v512 = vmul.f32 %v454, %v504
        %v513 = vmul.f32 %v454, %v505
        %v514 = vmul.f32 %v454, %v506
        %v515 = vmul.f32 %v454, %v507
        %v516 = vmul.f32 %v458, %v504
        %v517 = vmul.f32 %v458, %v505
        %v518 = vmul.f32 %v458, %v506
        %v519 = vmul.f32 %v458, %v507
        %v520 = vmul.f32 %v462, %v504
        %v521 = vmul.f32 %v462, %v505
        %v522 = vmul.f32 %v462, %v506
        %v523 = vmul.f32 %v462, %v507
        %v524 = vmul.f32 %v466, %v504
        %v525 = vmul.f32 %v466, %v505
        %v526 = vmul.f32 %v466, %v506
        %v527 = vmul.f32 %v466, %v507
        %v528 = vmul.f32 %v470, %v504
        %v529 = vmul.f32 %v470, %v505
        %v530 = vmul.f32 %v470, %v506
        %v531 = vmul.f32 %v470, %v507
        %v532 = vmul.f32 %v474, %v504
        %v533 = vmul.f32 %v474, %v505
        %v534 = vmul.f32 %v474, %v506
        %v535 = vmul.f32 %v474, %v507
        %v536 = vmul.f32 %v478, %v504
        %v537 = vmul.f32 %v478, %v505
        %v538 = vmul.f32 %v478, %v506
        %v539 = vmul.f32 %v478, %v507
        %v540 = vmul.f32 %v482, %v504
        %v541 = vmul.f32 %v482, %v505
        %v542 = vmul.f32 %v482, %v506
        %v543 = vmul.f32 %v482, %v507
        %v544 = vmul.f32 %v486, %v504
        %v545 = vmul.f32 %v486, %v505
        %v546 = vmul.f32 %v486, %v506
        %v547 = vmul.f32 %v486, %v507
        %v548 = vmul.f32 %v490, %v504
        %v549 = vmul.f32 %v490, %v505
        %v550 = vmul.f32 %v490, %v506
        %v551 = vmul.f32 %v490, %v507
        %v552 = vmul.f32 %v494, %v504
        %v553 = vmul.f32 %v494, %v505
        %v554 = vmul.f32 %v494, %v506
        %v555 = vmul.f32 %v494, %v507
        %v556 = vadd.f32 %v400, %v508
        %v557 = vadd.f32 %v401, %v509
        %v558 = vadd.f32 %v402, %v510
        %v559 = vadd.f32 %v403, %v511
        %v560 = vadd.f32 %v404, %v512
        %v561 = vadd.f32 %v405, %v513
        %v562 = vadd.f32 %v406, %v514
        %v563 = vadd.f32 %v407, %v515
        %v564 = vadd.f32 %v408, %v516
        %v565 = vadd.f32 %v409, %v517
        %v566 = vadd.f32 %v410, %v518
        %v567 = vadd.f32 %v411, %v519
        %v568 = vadd.f32 %v412, %v520
        %v569 = vadd.f32 %v413, %v521
        %v570 = vadd.f32 %v414, %v522
        %v571 = vadd.f32 %v415, %v523
        %v572 = vadd.f32 %v416, %v524
        %v573 = vadd.f32 %v417, %v525
        %v574 = vadd.f32 %v418, %v526
        %v575 = vadd.f32 %v419, %v527
        %v576 = vadd.f32 %v420, %v528
        %v577 = vadd.f32 %v421, %v529
        %v578 = vadd.f32 %v422, %v530
        %v579 = vadd.f32 %v423, %v531
        %v580 = vadd.f32 %v424, %v532
        %v581 = vadd.f32 %v425, %v533
        %v582 = vadd.f32 %v426, %v534
        %v583 = vadd.f32 %v427, %v535
        %v584 = vadd.f32 %v428, %v536
        %v585 = vadd.f32 %v429, %v537
        %v586 = vadd.f32 %v430, %v538
        %v587 = vadd.f32 %v431, %v539
        %v588 = vadd.f32 %v432, %v540
        %v589 = vadd.f32 %v433, %v541
        %v590 = vadd.f32 %v434, %v542
        %v591 = vadd.f32 %v435, %v543
        %v592 = vadd.f32 %v436, %v544
        %v593 = vadd.f32 %v437, %v545
        %v594 = vadd.f32 %v438, %v546
        %v595 = vadd.f32 %v439, %v547
        %v596 = vadd.f32 %v440, %v548
        %v597 = vadd.f32 %v441, %v549
        %v598 = vadd.f32 %v442, %v550
        %v599 = vadd.f32 %v443, %v551
        %v600 = vadd.f32 %v444, %v552
        %v601 = vadd.f32 %v445, %v553
        %v602 = vadd.f32 %v446, %v554
        %v603 = vadd.f32 %v447, %v555
        %604 = vrot.lane.b32.xlu0 %v556, 1
        %v605 = vpop.permute.xlu0 %604
        %606 = vrot.lane.b32.xlu0 %v560, 1
        %v607 = vpop.permute.xlu0 %606
        %608 = vrot.lane.b32.xlu0 %v564, 1
        %v609 = vpop.permute.xlu0 %608
        %610 = vrot.lane.b32.xlu0 %v568, 1
        %v611 = vpop.permute.xlu0 %610
        %612 = vrot.lane.b32.xlu0 %v557, 1
        %v613 = vpop.permute.xlu0 %612
        %614 = vrot.lane.b32.xlu0 %v561, 1
        %v615 = vpop.permute.xlu0 %614
        %616 = vrot.lane.b32.xlu0 %v565, 1
        %v617 = vpop.permute.xlu0 %616
        %618 = vrot.lane.b32.xlu0 %v569, 1
        %v619 = vpop.permute.xlu0 %618
        %620 = vrot.lane.b32.xlu0 %v558, 1
        %v621 = vpop.permute.xlu0 %620
        %622 = vrot.lane.b32.xlu0 %v562, 1
        %v623 = vpop.permute.xlu0 %622
        %624 = vrot.lane.b32.xlu0 %v566, 1
        %v625 = vpop.permute.xlu0 %624
        %626 = vrot.lane.b32.xlu0 %v570, 1
        %v627 = vpop.permute.xlu0 %626
        %628 = vrot.lane.b32.xlu0 %v559, 1
        %v629 = vpop.permute.xlu0 %628
        %630 = vrot.lane.b32.xlu0 %v563, 1
        %v631 = vpop.permute.xlu0 %630
        %632 = vrot.lane.b32.xlu0 %v567, 1
        %v633 = vpop.permute.xlu0 %632
        %634 = vrot.lane.b32.xlu0 %v571, 1
        %v635 = vpop.permute.xlu0 %634
        %vm636 = vcmp.lt.s32.totalorder %v278, 1
        %v637 = vsel %vm636, %v621, %v629
        %v638 = vsel %vm636, %v623, %v631
        %v639 = vsel %vm636, %v625, %v633
        %v640 = vsel %vm636, %v627, %v635
        %v641 = vsel %vm636, %v613, %v621
        %v642 = vsel %vm636, %v615, %v623
        %v643 = vsel %vm636, %v617, %v625
        %v644 = vsel %vm636, %v619, %v627
        %v645 = vsel %vm636, %v605, %v613
        %v646 = vsel %vm636, %v607, %v615
        %v647 = vsel %vm636, %v609, %v617
        %v648 = vsel %vm636, %v611, %v619
        %v649 = vsel %vm636, %v629, %v605
        %v650 = vsel %vm636, %v631, %v607
        %v651 = vsel %vm636, %v633, %v609
        %v652 = vsel %vm636, %v635, %v611
        %v653 = vmul.f32 %v649, %v294
        %v654 = vmul.f32 %v645, %v295
        %v655 = vmul.f32 %v641, %v296
        %v656 = vmul.f32 %v637, %v297
        %v657 = vmul.f32 %v650, %v294
        %v658 = vmul.f32 %v646, %v295
        %v659 = vmul.f32 %v642, %v296
        %v660 = vmul.f32 %v638, %v297
        %v661 = vmul.f32 %v651, %v294
        %v662 = vmul.f32 %v647, %v295
        %v663 = vmul.f32 %v643, %v296
        %v664 = vmul.f32 %v639, %v297
        %v665 = vmul.f32 %v652, %v294
        %v666 = vmul.f32 %v648, %v295
        %v667 = vmul.f32 %v644, %v296
        %v668 = vmul.f32 %v640, %v297
        %v669 = vadd.f32 %v572, %v653
        %v670 = vadd.f32 %v573, %v654
        %v671 = vadd.f32 %v574, %v655
        %v672 = vadd.f32 %v575, %v656
        %v673 = vadd.f32 %v576, %v657
        %v674 = vadd.f32 %v577, %v658
        %v675 = vadd.f32 %v578, %v659
        %v676 = vadd.f32 %v579, %v660
        %v677 = vadd.f32 %v580, %v661
        %v678 = vadd.f32 %v581, %v662
        %v679 = vadd.f32 %v582, %v663
        %v680 = vadd.f32 %v583, %v664
        %v681 = vadd.f32 %v584, %v665
        %v682 = vadd.f32 %v585, %v666
        %v683 = vadd.f32 %v586, %v667
        %v684 = vadd.f32 %v587, %v668
        %685 = vrot.lane.b32.xlu0 %v588, 127
        %v686 = vpop.permute.xlu0 %685
        %687 = vrot.lane.b32.xlu0 %v592, 127
        %v688 = vpop.permute.xlu0 %687
        %689 = vrot.lane.b32.xlu0 %v596, 127
        %v690 = vpop.permute.xlu0 %689
        %691 = vrot.lane.b32.xlu0 %v600, 127
        %v692 = vpop.permute.xlu0 %691
        %693 = vrot.lane.b32.xlu0 %v589, 127
        %v694 = vpop.permute.xlu0 %693
        %695 = vrot.lane.b32.xlu0 %v593, 127
        %v696 = vpop.permute.xlu0 %695
        %697 = vrot.lane.b32.xlu0 %v597, 127
        %v698 = vpop.permute.xlu0 %697
        %699 = vrot.lane.b32.xlu0 %v601, 127
        %v700 = vpop.permute.xlu0 %699
        %701 = vrot.lane.b32.xlu0 %v590, 127
        %v702 = vpop.permute.xlu0 %701
        %703 = vrot.lane.b32.xlu0 %v594, 127
        %v704 = vpop.permute.xlu0 %703
        %705 = vrot.lane.b32.xlu0 %v598, 127
        %v706 = vpop.permute.xlu0 %705
        %707 = vrot.lane.b32.xlu0 %v602, 127
        %v708 = vpop.permute.xlu0 %707
        %709 = vrot.lane.b32.xlu0 %v591, 127
        %v710 = vpop.permute.xlu0 %709
        %711 = vrot.lane.b32.xlu0 %v595, 127
        %v712 = vpop.permute.xlu0 %711
        %713 = vrot.lane.b32.xlu0 %v599, 127
        %v714 = vpop.permute.xlu0 %713
        %715 = vrot.lane.b32.xlu0 %v603, 127
        %v716 = vpop.permute.xlu0 %715
        %vm717 = vcmp.lt.s32.totalorder %v278, 127
        %v718 = vsel %vm717, %v702, %v710
        %v719 = vsel %vm717, %v704, %v712
        %v720 = vsel %vm717, %v706, %v714
        %v721 = vsel %vm717, %v708, %v716
        %v722 = vsel %vm717, %v694, %v702
        %v723 = vsel %vm717, %v696, %v704
        %v724 = vsel %vm717, %v698, %v706
        %v725 = vsel %vm717, %v700, %v708
        %v726 = vsel %vm717, %v686, %v694
        %v727 = vsel %vm717, %v688, %v696
        %v728 = vsel %vm717, %v690, %v698
        %v729 = vsel %vm717, %v692, %v700
        %v730 = vsel %vm717, %v710, %v686
        %v731 = vsel %vm717, %v712, %v688
        %v732 = vsel %vm717, %v714, %v690
        %v733 = vsel %vm717, %v716, %v692
        %v734 = vmul.f32 %v726, %v306
        %v735 = vmul.f32 %v722, %v307
        %v736 = vmul.f32 %v718, %v308
        %v737 = vmul.f32 %v730, %v309
        %v738 = vmul.f32 %v727, %v306
        %v739 = vmul.f32 %v723, %v307
        %v740 = vmul.f32 %v719, %v308
        %v741 = vmul.f32 %v731, %v309
        %v742 = vmul.f32 %v728, %v306
        %v743 = vmul.f32 %v724, %v307
        %v744 = vmul.f32 %v720, %v308
        %v745 = vmul.f32 %v732, %v309
        %v746 = vmul.f32 %v729, %v306
        %v747 = vmul.f32 %v725, %v307
        %v748 = vmul.f32 %v721, %v308
        %v749 = vmul.f32 %v733, %v309
        %v750 = vadd.f32 %v669, %v734
        %v751 = vadd.f32 %v670, %v735
        %v752 = vadd.f32 %v671, %v736
        %v753 = vadd.f32 %v672, %v737
        %v754 = vadd.f32 %v673, %v738
        %v755 = vadd.f32 %v674, %v739
        %v756 = vadd.f32 %v675, %v740
        %v757 = vadd.f32 %v676, %v741
        %v758 = vadd.f32 %v677, %v742
        %v759 = vadd.f32 %v678, %v743
        %v760 = vadd.f32 %v679, %v744
        %v761 = vadd.f32 %v680, %v745
        %v762 = vadd.f32 %v681, %v746
        %v763 = vadd.f32 %v682, %v747
        %v764 = vadd.f32 %v683, %v748
        %v765 = vadd.f32 %v684, %v749
        %767 = vset.pattern.permute.xlu0 0
        %768 = vperm.xlu0 %767, %v310
        %v769 = vpop.permute.xlu0 %768
        %772 = vset.pattern.permute.xlu0 0
        %773 = vperm.xlu0 %772, %v311
        %v774 = vpop.permute.xlu0 %773
        %777 = vset.pattern.permute.xlu0 0
        %778 = vperm.xlu0 %777, %v312
        %v779 = vpop.permute.xlu0 %778
        %782 = vset.pattern.permute.xlu0 0
        %783 = vperm.xlu0 %782, %v313
        %v784 = vpop.permute.xlu0 %783
        %v786 = vadd.f32 %v750, %v769
        %v787 = vadd.f32 %v751, %v769
        %v788 = vadd.f32 %v752, %v769
        %v789 = vadd.f32 %v753, %v769
        %v790 = vadd.f32 %v754, %v774
        %v791 = vadd.f32 %v755, %v774
        %v792 = vadd.f32 %v756, %v774
        %v793 = vadd.f32 %v757, %v774
        %v794 = vadd.f32 %v758, %v779
        %v795 = vadd.f32 %v759, %v779
        %v796 = vadd.f32 %v760, %v779
        %v797 = vadd.f32 %v761, %v779
        %v798 = vadd.f32 %v762, %v784
        %v799 = vadd.f32 %v763, %v784
        %v800 = vadd.f32 %v764, %v784
        %v801 = vadd.f32 %v765, %v784
        %v802 = vmax.f32 %v786, 0.0
        %v803 = vmax.f32 %v787, 0.0
        %v804 = vmax.f32 %v788, 0.0
        %v805 = vmax.f32 %v789, 0.0
        %v806 = vmax.f32 %v790, 0.0
        %v807 = vmax.f32 %v791, 0.0
        %v808 = vmax.f32 %v792, 0.0
        %v809 = vmax.f32 %v793, 0.0
        %v810 = vmax.f32 %v794, 0.0
        %v811 = vmax.f32 %v795, 0.0
        %v812 = vmax.f32 %v796, 0.0
        %v813 = vmax.f32 %v797, 0.0
        %v814 = vmax.f32 %v798, 0.0
        %v815 = vmax.f32 %v799, 0.0
        %v816 = vmax.f32 %v800, 0.0
        %v817 = vmax.f32 %v801, 0.0
        %v818 = vld [vmem:[%s4] sm:$0xff]
        %v819 = vld [vmem:[%s4 + $0x8] sm:$0xff]
        %v820 = vld [vmem:[%s4 + $0x10] sm:$0xff]
        %v821 = vld [vmem:[%s4 + $0x18] sm:$0xff]
        %v822 = vld [vmem:[%s4 + $0x20] sm:$0xff]
        %v823 = vld [vmem:[%s4 + $0x28] sm:$0xff]
        %v824 = vld [vmem:[%s4 + $0x30] sm:$0xff]
        %v825 = vld [vmem:[%s4 + $0x38] sm:$0xff]
        %v826 = vld [vmem:[%s4 + $0x40] sm:$0xff]
        %v827 = vld [vmem:[%s4 + $0x48] sm:$0xff]
        %v828 = vld [vmem:[%s4 + $0x50] sm:$0xff]
        %v829 = vld [vmem:[%s4 + $0x58] sm:$0xff]
        %v830 = vld [vmem:[%s4 + $0x60] sm:$0xff]
        %v831 = vld [vmem:[%s4 + $0x68] sm:$0xff]
        %v832 = vld [vmem:[%s4 + $0x70] sm:$0xff]
        %v833 = vld [vmem:[%s4 + $0x78] sm:$0xff]
        %s834 = scalar_lea.vmem %s4, 128
        %v835 = vld [vmem:[%s834] sm:$0xff]
        %v836 = vld [vmem:[%s834 + $0x8] sm:$0xff]
        %v837 = vld [vmem:[%s834 + $0x10] sm:$0xff]
        %v838 = vld [vmem:[%s834 + $0x18] sm:$0xff]
        %v839 = vld [vmem:[%s834 + $0x20] sm:$0xff]
        %v840 = vld [vmem:[%s834 + $0x28] sm:$0xff]
        %v841 = vld [vmem:[%s834 + $0x30] sm:$0xff]
        %v842 = vld [vmem:[%s834 + $0x38] sm:$0xff]
        %v843 = vld [vmem:[%s834 + $0x40] sm:$0xff]
        %v844 = vld [vmem:[%s834 + $0x48] sm:$0xff]
        %v845 = vld [vmem:[%s834 + $0x50] sm:$0xff]
        %v846 = vld [vmem:[%s834 + $0x58] sm:$0xff]
        %v847 = vld [vmem:[%s834 + $0x60] sm:$0xff]
        %v848 = vld [vmem:[%s834 + $0x68] sm:$0xff]
        %v849 = vld [vmem:[%s834 + $0x70] sm:$0xff]
        %v850 = vld [vmem:[%s834 + $0x78] sm:$0xff]
        %v851 = vmul.f32 %v802, %v802
        %v852 = vmul.f32 %v803, %v803
        %v853 = vmul.f32 %v804, %v804
        %v854 = vmul.f32 %v805, %v805
        %v855 = vmul.f32 %v806, %v806
        %v856 = vmul.f32 %v807, %v807
        %v857 = vmul.f32 %v808, %v808
        %v858 = vmul.f32 %v809, %v809
        %v859 = vmul.f32 %v810, %v810
        %v860 = vmul.f32 %v811, %v811
        %v861 = vmul.f32 %v812, %v812
        %v862 = vmul.f32 %v813, %v813
        %v863 = vmul.f32 %v814, %v814
        %v864 = vmul.f32 %v815, %v815
        %v865 = vmul.f32 %v816, %v816
        %v866 = vmul.f32 %v817, %v817
        %v867 = vadd.f32 %v802, %v806
        %v868 = vadd.f32 %v867, %v810
        %v869 = vadd.f32 %v868, %v814
        %870 = vadd.xlane.f32.xlu0 %v869
        %v871 = vpop.xlane.xlu0 %870
        %v872 = vrot.slane %v871, 4
        %v873 = vadd.f32 %v871, %v872
        %v874 = vrot.slane %v873, 2
        %v875 = vadd.f32 %v873, %v874
        %v876 = vrot.slane %v875, 1
        %v877 = vadd.f32 %v875, %v876
        %s878 = vtos %v877
        %v879 = vrcp.pop 4096.0
        %v880 = vmul.f32 4096.0, %v879
        %v881 = vsub.f32 1.0, %v880
        %v882 = vmul.f32 %v879, %v881
        %v883 = vadd.f32 %v879, %v882
        %vm884 = vweird.f32 %v879
        %v885 = vsel %vm884, %v879, %v883
        %s886 = vtos %v885
        %s887 = smul.f32 %s878, %s886
        %v888 = vadd.f32 %v851, %v855
        %v889 = vadd.f32 %v888, %v859
        %v890 = vadd.f32 %v889, %v863
        %891 = vadd.xlane.f32.xlu0 %v890
        %v892 = vpop.xlane.xlu0 %891
        %v893 = vrot.slane %v892, 4
        %v894 = vadd.f32 %v892, %v893
        %v895 = vrot.slane %v894, 2
        %v896 = vadd.f32 %v894, %v895
        %v897 = vrot.slane %v896, 1
        %v898 = vadd.f32 %v896, %v897
        %s899 = vtos %v898
        %v900 = vrcp.pop 4096.0
        %v901 = vmul.f32 4096.0, %v900
        %v902 = vsub.f32 1.0, %v901
        %v903 = vmul.f32 %v900, %v902
        %v904 = vadd.f32 %v900, %v903
        %vm905 = vweird.f32 %v900
        %v906 = vsel %vm905, %v900, %v904
        %s907 = vtos %v906
        %s908 = smul.f32 %s899, %s907
        %s909 = smul.f32 %s887, %s887
        %s910 = ssub.f32 %s908, %s909
        %s911 = sadd.f32 %s910, 1e-05
        %v912 = vstv %s911
        %v913 = vrsqrt.pop %v912
        %v914 = vmul.f32 %v913, %v912
        %v915 = vmul.f32 %v914, %v913
        %v916 = vmul.f32 0.5, %v915
        %v917 = vsub.f32 1.5, %v916
        %v918 = vmul.f32 %v913, %v917
        %vm919 = vweird.f32 %v912
        %vm920 = vweird.f32 %v913
        %vm921 = vmor %vm919, %vm920
        %v922 = vsel %vm921, %v913, %v918
        %s923 = vtos %v922
        %v924 = vstv %s887
        %v925 = vstv %s923
        %v926 = vadd.f32 %v803, %v807
        %v927 = vadd.f32 %v926, %v811
        %v928 = vadd.f32 %v927, %v815
        %929 = vadd.xlane.f32.xlu0 %v928
        %v930 = vpop.xlane.xlu0 %929
        %v931 = vrot.slane %v930, 4
        %v932 = vadd.f32 %v930, %v931
        %v933 = vrot.slane %v932, 2
        %v934 = vadd.f32 %v932, %v933
        %v935 = vrot.slane %v934, 1
        %v936 = vadd.f32 %v934, %v935
        %s937 = vtos %v936
        %v938 = vrcp.pop 4096.0
        %v939 = vmul.f32 4096.0, %v938
        %v940 = vsub.f32 1.0, %v939
        %v941 = vmul.f32 %v938, %v940
        %v942 = vadd.f32 %v938, %v941
        %vm943 = vweird.f32 %v938
        %v944 = vsel %vm943, %v938, %v942
        %s945 = vtos %v944
        %s946 = smul.f32 %s937, %s945
        %v947 = vadd.f32 %v852, %v856
        %v948 = vadd.f32 %v947, %v860
        %v949 = vadd.f32 %v948, %v864
        %950 = vadd.xlane.f32.xlu0 %v949
        %v951 = vpop.xlane.xlu0 %950
        %v952 = vrot.slane %v951, 4
        %v953 = vadd.f32 %v951, %v952
        %v954 = vrot.slane %v953, 2
        %v955 = vadd.f32 %v953, %v954
        %v956 = vrot.slane %v955, 1
        %v957 = vadd.f32 %v955, %v956
        %s958 = vtos %v957
        %v959 = vrcp.pop 4096.0
        %v960 = vmul.f32 4096.0, %v959
        %v961 = vsub.f32 1.0, %v960
        %v962 = vmul.f32 %v959, %v961
        %v963 = vadd.f32 %v959, %v962
        %vm964 = vweird.f32 %v959
        %v965 = vsel %vm964, %v959, %v963
        %s966 = vtos %v965
        %s967 = smul.f32 %s958, %s966
        %s968 = smul.f32 %s946, %s946
        %s969 = ssub.f32 %s967, %s968
        %s970 = sadd.f32 %s969, 1e-05
        %v971 = vstv %s970
        %v972 = vrsqrt.pop %v971
        %v973 = vmul.f32 %v972, %v971
        %v974 = vmul.f32 %v973, %v972
        %v975 = vmul.f32 0.5, %v974
        %v976 = vsub.f32 1.5, %v975
        %v977 = vmul.f32 %v972, %v976
        %vm978 = vweird.f32 %v971
        %vm979 = vweird.f32 %v972
        %vm980 = vmor %vm978, %vm979
        %v981 = vsel %vm980, %v972, %v977
        %s982 = vtos %v981
        %v983 = vstv %s946
        %v984 = vstv %s982
        %v985 = vadd.f32 %v804, %v808
        %v986 = vadd.f32 %v985, %v812
        %v987 = vadd.f32 %v986, %v816
        %988 = vadd.xlane.f32.xlu0 %v987
        %v989 = vpop.xlane.xlu0 %988
        %v990 = vrot.slane %v989, 4
        %v991 = vadd.f32 %v989, %v990
        %v992 = vrot.slane %v991, 2
        %v993 = vadd.f32 %v991, %v992
        %v994 = vrot.slane %v993, 1
        %v995 = vadd.f32 %v993, %v994
        %s996 = vtos %v995
        %v997 = vrcp.pop 4096.0
        %v998 = vmul.f32 4096.0, %v997
        %v999 = vsub.f32 1.0, %v998
        %v1000 = vmul.f32 %v997, %v999
        %v1001 = vadd.f32 %v997, %v1000
        %vm1002 = vweird.f32 %v997
        %v1003 = vsel %vm1002, %v997, %v1001
        %s1004 = vtos %v1003
        %s1005 = smul.f32 %s996, %s1004
        %v1006 = vadd.f32 %v853, %v857
        %v1007 = vadd.f32 %v1006, %v861
        %v1008 = vadd.f32 %v1007, %v865
        %1009 = vadd.xlane.f32.xlu0 %v1008
        %v1010 = vpop.xlane.xlu0 %1009
        %v1011 = vrot.slane %v1010, 4
        %v1012 = vadd.f32 %v1010, %v1011
        %v1013 = vrot.slane %v1012, 2
        %v1014 = vadd.f32 %v1012, %v1013
        %v1015 = vrot.slane %v1014, 1
        %v1016 = vadd.f32 %v1014, %v1015
        %s1017 = vtos %v1016
        %v1018 = vrcp.pop 4096.0
        %v1019 = vmul.f32 4096.0, %v1018
        %v1020 = vsub.f32 1.0, %v1019
        %v1021 = vmul.f32 %v1018, %v1020
        %v1022 = vadd.f32 %v1018, %v1021
        %vm1023 = vweird.f32 %v1018
        %v1024 = vsel %vm1023, %v1018, %v1022
        %s1025 = vtos %v1024
        %s1026 = smul.f32 %s1017, %s1025
        %s1027 = smul.f32 %s1005, %s1005
        %s1028 = ssub.f32 %s1026, %s1027
        %s1029 = sadd.f32 %s1028, 1e-05
        %v1030 = vstv %s1029
        %v1031 = vrsqrt.pop %v1030
        %v1032 = vmul.f32 %v1031, %v1030
        %v1033 = vmul.f32 %v1032, %v1031
        %v1034 = vmul.f32 0.5, %v1033
        %v1035 = vsub.f32 1.5, %v1034
        %v1036 = vmul.f32 %v1031, %v1035
        %vm1037 = vweird.f32 %v1030
        %vm1038 = vweird.f32 %v1031
        %vm1039 = vmor %vm1037, %vm1038
        %v1040 = vsel %vm1039, %v1031, %v1036
        %s1041 = vtos %v1040
        %v1042 = vstv %s1005
        %v1043 = vstv %s1041
        %v1044 = vadd.f32 %v805, %v809
        %v1045 = vadd.f32 %v1044, %v813
        %v1046 = vadd.f32 %v1045, %v817
        %1047 = vadd.xlane.f32.xlu0 %v1046
        %v1048 = vpop.xlane.xlu0 %1047
        %v1049 = vrot.slane %v1048, 4
        %v1050 = vadd.f32 %v1048, %v1049
        %v1051 = vrot.slane %v1050, 2
        %v1052 = vadd.f32 %v1050, %v1051
        %v1053 = vrot.slane %v1052, 1
        %v1054 = vadd.f32 %v1052, %v1053
        %s1055 = vtos %v1054
        %v1056 = vrcp.pop 4096.0
        %v1057 = vmul.f32 4096.0, %v1056
        %v1058 = vsub.f32 1.0, %v1057
        %v1059 = vmul.f32 %v1056, %v1058
        %v1060 = vadd.f32 %v1056, %v1059
        %vm1061 = vweird.f32 %v1056
        %v1062 = vsel %vm1061, %v1056, %v1060
        %s1063 = vtos %v1062
        %s1064 = smul.f32 %s1055, %s1063
        %v1065 = vadd.f32 %v854, %v858
        %v1066 = vadd.f32 %v1065, %v862
        %v1067 = vadd.f32 %v1066, %v866
        %1068 = vadd.xlane.f32.xlu0 %v1067
        %v1069 = vpop.xlane.xlu0 %1068
        %v1070 = vrot.slane %v1069, 4
        %v1071 = vadd.f32 %v1069, %v1070
        %v1072 = vrot.slane %v1071, 2
        %v1073 = vadd.f32 %v1071, %v1072
        %v1074 = vrot.slane %v1073, 1
        %v1075 = vadd.f32 %v1073, %v1074
        %s1076 = vtos %v1075
        %v1077 = vrcp.pop 4096.0
        %v1078 = vmul.f32 4096.0, %v1077
        %v1079 = vsub.f32 1.0, %v1078
        %v1080 = vmul.f32 %v1077, %v1079
        %v1081 = vadd.f32 %v1077, %v1080
        %vm1082 = vweird.f32 %v1077
        %v1083 = vsel %vm1082, %v1077, %v1081
        %s1084 = vtos %v1083
        %s1085 = smul.f32 %s1076, %s1084
        %s1086 = smul.f32 %s1064, %s1064
        %s1087 = ssub.f32 %s1085, %s1086
        %s1088 = sadd.f32 %s1087, 1e-05
        %v1089 = vstv %s1088
        %v1090 = vrsqrt.pop %v1089
        %v1091 = vmul.f32 %v1090, %v1089
        %v1092 = vmul.f32 %v1091, %v1090
        %v1093 = vmul.f32 0.5, %v1092
        %v1094 = vsub.f32 1.5, %v1093
        %v1095 = vmul.f32 %v1090, %v1094
        %vm1096 = vweird.f32 %v1089
        %vm1097 = vweird.f32 %v1090
        %vm1098 = vmor %vm1096, %vm1097
        %v1099 = vsel %vm1098, %v1090, %v1095
        %s1100 = vtos %v1099
        %v1101 = vstv %s1064
        %v1102 = vstv %s1100
        %v1103 = vperm.slane %v924, 0
        %v1104 = vperm.slane %v983, 0
        %v1105 = vperm.slane %v1042, 0
        %v1106 = vperm.slane %v1101, 0
        %v1107 = vsub.f32 %v802, %v1103
        %v1108 = vsub.f32 %v803, %v1104
        %v1109 = vsub.f32 %v804, %v1105
        %v1110 = vsub.f32 %v805, %v1106
        %v1111 = vsub.f32 %v806, %v1103
        %v1112 = vsub.f32 %v807, %v1104
        %v1113 = vsub.f32 %v808, %v1105
        %v1114 = vsub.f32 %v809, %v1106
        %v1115 = vsub.f32 %v810, %v1103
        %v1116 = vsub.f32 %v811, %v1104
        %v1117 = vsub.f32 %v812, %v1105
        %v1118 = vsub.f32 %v813, %v1106
        %v1119 = vsub.f32 %v814, %v1103
        %v1120 = vsub.f32 %v815, %v1104
        %v1121 = vsub.f32 %v816, %v1105
        %v1122 = vsub.f32 %v817, %v1106
        %v1123 = vperm.slane %v925, 0
        %v1124 = vperm.slane %v984, 0
        %v1125 = vperm.slane %v1043, 0
        %v1126 = vperm.slane %v1102, 0
        %v1127 = vmul.f32 %v1107, %v1123
        %v1128 = vmul.f32 %v1108, %v1124
        %v1129 = vmul.f32 %v1109, %v1125
        %v1130 = vmul.f32 %v1110, %v1126
        %v1131 = vmul.f32 %v1111, %v1123
        %v1132 = vmul.f32 %v1112, %v1124
        %v1133 = vmul.f32 %v1113, %v1125
        %v1134 = vmul.f32 %v1114, %v1126
        %v1135 = vmul.f32 %v1115, %v1123
        %v1136 = vmul.f32 %v1116, %v1124
        %v1137 = vmul.f32 %v1117, %v1125
        %v1138 = vmul.f32 %v1118, %v1126
        %v1139 = vmul.f32 %v1119, %v1123
        %v1140 = vmul.f32 %v1120, %v1124
        %v1141 = vmul.f32 %v1121, %v1125
        %v1142 = vmul.f32 %v1122, %v1126
        %v1143 = vmul.f32 %v1127, %v818
        %v1144 = vmul.f32 %v1128, %v819
        %v1145 = vmul.f32 %v1129, %v820
        %v1146 = vmul.f32 %v1130, %v821
        %v1147 = vmul.f32 %v1131, %v822
        %v1148 = vmul.f32 %v1132, %v823
        %v1149 = vmul.f32 %v1133, %v824
        %v1150 = vmul.f32 %v1134, %v825
        %v1151 = vmul.f32 %v1135, %v826
        %v1152 = vmul.f32 %v1136, %v827
        %v1153 = vmul.f32 %v1137, %v828
        %v1154 = vmul.f32 %v1138, %v829
        %v1155 = vmul.f32 %v1139, %v830
        %v1156 = vmul.f32 %v1140, %v831
        %v1157 = vmul.f32 %v1141, %v832
        %v1158 = vmul.f32 %v1142, %v833
        %v1159 = vadd.f32 %v1143, %v835
        %v1160 = vadd.f32 %v1144, %v836
        %v1161 = vadd.f32 %v1145, %v837
        %v1162 = vadd.f32 %v1146, %v838
        %v1163 = vadd.f32 %v1147, %v839
        %v1164 = vadd.f32 %v1148, %v840
        %v1165 = vadd.f32 %v1149, %v841
        %v1166 = vadd.f32 %v1150, %v842
        %v1167 = vadd.f32 %v1151, %v843
        %v1168 = vadd.f32 %v1152, %v844
        %v1169 = vadd.f32 %v1153, %v845
        %v1170 = vadd.f32 %v1154, %v846
        %v1171 = vadd.f32 %v1155, %v847
        %v1172 = vadd.f32 %v1156, %v848
        %v1173 = vadd.f32 %v1157, %v849
        %v1174 = vadd.f32 %v1158, %v850
        %v1175 = vld [vmem:[%s2] sm:$0xf]
        %v1176 = vld [vmem:[%s2 + $0x4] sm:$0xf]
        %v1177 = vld [vmem:[%s2 + $0x8] sm:$0xf]
        %v1178 = vld [vmem:[%s2 + $0xc] sm:$0xf]
        %v1179 = vld [vmem:[%s2 + $0x10] sm:$0xf]
        %v1180 = vld [vmem:[%s2 + $0x14] sm:$0xf]
        %v1181 = vld [vmem:[%s2 + $0x18] sm:$0xf]
        %v1182 = vld [vmem:[%s2 + $0x1c] sm:$0xf]
        %v1183 = vld [vmem:[%s2 + $0x20] sm:$0xf]
        %v1184 = vld [vmem:[%s2 + $0x24] sm:$0xf]
        %v1185 = vld [vmem:[%s2 + $0x28] sm:$0xf]
        %v1186 = vld [vmem:[%s2 + $0x2c] sm:$0xf]
        %v1187 = vpack.c.bf16 %v1163, %v1159
        %v1188 = vpack.c.bf16 %v1164, %v1160
        %v1189 = vpack.c.bf16 %v1165, %v1161
        %v1190 = vpack.c.bf16 %v1166, %v1162
        %v1191 = vpack.c.bf16 %v1171, %v1167
        %v1192 = vpack.c.bf16 %v1172, %v1168
        %v1193 = vpack.c.bf16 %v1173, %v1169
        %v1194 = vpack.c.bf16 %v1174, %v1170
        %v1207 = vunpack.c.l.b16 %v1175
        %v1208 = vunpack.c.l.b16 %v1176
        %v1209 = vunpack.c.l.b16 %v1177
        %v1210 = vunpack.c.l.b16 %v1178
        %v1211 = vunpack.c.l.b16 %v1179
        %v1212 = vunpack.c.l.b16 %v1180
        %v1213 = vunpack.c.l.b16 %v1181
        %v1214 = vunpack.c.l.b16 %v1182
        %v1215 = vunpack.c.l.b16 %v1183
        %v1216 = vunpack.c.l.b16 %v1184
        %v1217 = vunpack.c.l.b16 %v1185
        %v1218 = vunpack.c.l.b16 %v1186
        %v1219 = vpack.c.b16 %v1208, %v1207
        %v1220 = vpack.c.b16 %v1210, %v1209
        %v1221 = vpack.c.b16 %v1212, %v1211
        %v1222 = vpack.c.b16 %v1214, %v1213
        %v1223 = vpack.c.b16 %v1216, %v1215
        %v1224 = vpack.c.b16 %v1218, %v1217
        %vm1225 = vcmask 261120
        %v1227 = vsel %vm1225, %v1219, 0
        %v1230 = vsel %vm1225, %v1220, 0
        %v1233 = vsel %vm1225, %v1221, 0
        %v1236 = vsel %vm1225, %v1222, 0
        %v1239 = vsel %vm1225, %v1223, 0
        %v1242 = vsel %vm1225, %v1224, 0
        %1244 = vmatpush.bf16.msra.mxu0 0
        %1245 = vmatpush.bf16.msra.mxu0 0
        %1246 = vmatpush.bf16.msra.mxu0 0
        %1247 = vmatpush.bf16.msra.mxu0 0
        %1248 = vmatpush.bf16.msra.mxu0 0
        %1249 = vmatpush.bf16.msra.mxu0 0
        %1250 = vmatpush.bf16.msra.mxu0 %v1191
        %1251 = vmatpush.bf16.msra.mxu0 %v1187
        %1252 = vmatmul.bf16.gmra.mxu0 %v1227
        %v1253 = vpop.f32.mrf.mxu0
        %v1254 = vadd.f32 0.0, %v1253
        %v1255 = vpop.f32.mrf.mxu0
        %v1256 = vadd.f32 0.0, %v1255
        %1257 = vmatmul.bf16.gmra.mxu0 %v1230
        %v1258 = vpop.f32.mrf.mxu0
        %v1259 = vadd.f32 0.0, %v1258
        %v1260 = vpop.f32.mrf.mxu0
        %v1261 = vadd.f32 0.0, %v1260
        %1262 = vmatmul.bf16.gmra.mxu0 %v1233
        %v1263 = vpop.f32.mrf.mxu0
        %v1264 = vadd.f32 0.0, %v1263
        %v1265 = vpop.f32.mrf.mxu0
        %v1266 = vadd.f32 0.0, %v1265
        %1267 = vmatmul.bf16.gmra.mxu0 %v1236
        %v1268 = vpop.f32.mrf.mxu0
        %v1269 = vadd.f32 0.0, %v1268
        %v1270 = vpop.f32.mrf.mxu0
        %v1271 = vadd.f32 0.0, %v1270
        %1272 = vmatmul.bf16.gmra.mxu0 %v1239
        %v1273 = vpop.f32.mrf.mxu0
        %v1274 = vadd.f32 0.0, %v1273
        %v1275 = vpop.f32.mrf.mxu0
        %v1276 = vadd.f32 0.0, %v1275
        %1277 = vmatmul.bf16.gmra.mxu0 %v1242
        %v1278 = vpop.f32.mrf.mxu0
        %v1279 = vadd.f32 0.0, %v1278
        %v1280 = vpop.f32.mrf.mxu0
        %v1281 = vadd.f32 0.0, %v1280
        %1282 = vdwg.mxu0
        %1283 = vmatpush.bf16.msra.mxu0 0
        %1284 = vmatpush.bf16.msra.mxu0 0
        %1285 = vmatpush.bf16.msra.mxu0 0
        %1286 = vmatpush.bf16.msra.mxu0 0
        %1287 = vmatpush.bf16.msra.mxu0 0
        %1288 = vmatpush.bf16.msra.mxu0 0
        %1289 = vmatpush.bf16.msra.mxu0 %v1192
        %1290 = vmatpush.bf16.msra.mxu0 %v1188
        %1291 = vmatmul.bf16.gmra.mxu0 %v1227
        %v1292 = vpop.f32.mrf.mxu0
        %v1293 = vadd.f32 0.0, %v1292
        %v1294 = vpop.f32.mrf.mxu0
        %v1295 = vadd.f32 0.0, %v1294
        %1296 = vmatmul.bf16.gmra.mxu0 %v1230
        %v1297 = vpop.f32.mrf.mxu0
        %v1298 = vadd.f32 0.0, %v1297
        %v1299 = vpop.f32.mrf.mxu0
        %v1300 = vadd.f32 0.0, %v1299
        %1301 = vmatmul.bf16.gmra.mxu0 %v1233
        %v1302 = vpop.f32.mrf.mxu0
        %v1303 = vadd.f32 0.0, %v1302
        %v1304 = vpop.f32.mrf.mxu0
        %v1305 = vadd.f32 0.0, %v1304
        %1306 = vmatmul.bf16.gmra.mxu0 %v1236
        %v1307 = vpop.f32.mrf.mxu0
        %v1308 = vadd.f32 0.0, %v1307
        %v1309 = vpop.f32.mrf.mxu0
        %v1310 = vadd.f32 0.0, %v1309
        %1311 = vmatmul.bf16.gmra.mxu0 %v1239
        %v1312 = vpop.f32.mrf.mxu0
        %v1313 = vadd.f32 0.0, %v1312
        %v1314 = vpop.f32.mrf.mxu0
        %v1315 = vadd.f32 0.0, %v1314
        %1316 = vmatmul.bf16.gmra.mxu0 %v1242
        %v1317 = vpop.f32.mrf.mxu0
        %v1318 = vadd.f32 0.0, %v1317
        %v1319 = vpop.f32.mrf.mxu0
        %v1320 = vadd.f32 0.0, %v1319
        %1321 = vdwg.mxu0
        %1322 = vmatpush.bf16.msra.mxu0 0
        %1323 = vmatpush.bf16.msra.mxu0 0
        %1324 = vmatpush.bf16.msra.mxu0 0
        %1325 = vmatpush.bf16.msra.mxu0 0
        %1326 = vmatpush.bf16.msra.mxu0 0
        %1327 = vmatpush.bf16.msra.mxu0 0
        %1328 = vmatpush.bf16.msra.mxu0 %v1193
        %1329 = vmatpush.bf16.msra.mxu0 %v1189
        %1330 = vmatmul.bf16.gmra.mxu0 %v1227
        %v1331 = vpop.f32.mrf.mxu0
        %v1332 = vadd.f32 0.0, %v1331
        %v1333 = vpop.f32.mrf.mxu0
        %v1334 = vadd.f32 0.0, %v1333
        %1335 = vmatmul.bf16.gmra.mxu0 %v1230
        %v1336 = vpop.f32.mrf.mxu0
        %v1337 = vadd.f32 0.0, %v1336
        %v1338 = vpop.f32.mrf.mxu0
        %v1339 = vadd.f32 0.0, %v1338
        %1340 = vmatmul.bf16.gmra.mxu0 %v1233
        %v1341 = vpop.f32.mrf.mxu0
        %v1342 = vadd.f32 0.0, %v1341
        %v1343 = vpop.f32.mrf.mxu0
        %v1344 = vadd.f32 0.0, %v1343
        %1345 = vmatmul.bf16.gmra.mxu0 %v1236
        %v1346 = vpop.f32.mrf.mxu0
        %v1347 = vadd.f32 0.0, %v1346
        %v1348 = vpop.f32.mrf.mxu0
        %v1349 = vadd.f32 0.0, %v1348
        %1350 = vmatmul.bf16.gmra.mxu0 %v1239
        %v1351 = vpop.f32.mrf.mxu0
        %v1352 = vadd.f32 0.0, %v1351
        %v1353 = vpop.f32.mrf.mxu0
        %v1354 = vadd.f32 0.0, %v1353
        %1355 = vmatmul.bf16.gmra.mxu0 %v1242
        %v1356 = vpop.f32.mrf.mxu0
        %v1357 = vadd.f32 0.0, %v1356
        %v1358 = vpop.f32.mrf.mxu0
        %v1359 = vadd.f32 0.0, %v1358
        %1360 = vdwg.mxu0
        %1361 = vmatpush.bf16.msra.mxu0 0
        %1362 = vmatpush.bf16.msra.mxu0 0
        %1363 = vmatpush.bf16.msra.mxu0 0
        %1364 = vmatpush.bf16.msra.mxu0 0
        %1365 = vmatpush.bf16.msra.mxu0 0
        %1366 = vmatpush.bf16.msra.mxu0 0
        %1367 = vmatpush.bf16.msra.mxu0 %v1194
        %1368 = vmatpush.bf16.msra.mxu0 %v1190
        %1369 = vmatmul.bf16.gmra.mxu0 %v1227
        %v1370 = vpop.f32.mrf.mxu0
        %v1371 = vadd.f32 0.0, %v1370
        %v1372 = vpop.f32.mrf.mxu0
        %v1373 = vadd.f32 0.0, %v1372
        %1374 = vmatmul.bf16.gmra.mxu0 %v1230
        %v1375 = vpop.f32.mrf.mxu0
        %v1376 = vadd.f32 0.0, %v1375
        %v1377 = vpop.f32.mrf.mxu0
        %v1378 = vadd.f32 0.0, %v1377
        %1379 = vmatmul.bf16.gmra.mxu0 %v1233
        %v1380 = vpop.f32.mrf.mxu0
        %v1381 = vadd.f32 0.0, %v1380
        %v1382 = vpop.f32.mrf.mxu0
        %v1383 = vadd.f32 0.0, %v1382
        %1384 = vmatmul.bf16.gmra.mxu0 %v1236
        %v1385 = vpop.f32.mrf.mxu0
        %v1386 = vadd.f32 0.0, %v1385
        %v1387 = vpop.f32.mrf.mxu0
        %v1388 = vadd.f32 0.0, %v1387
        %1389 = vmatmul.bf16.gmra.mxu0 %v1239
        %v1390 = vpop.f32.mrf.mxu0
        %v1391 = vadd.f32 0.0, %v1390
        %v1392 = vpop.f32.mrf.mxu0
        %v1393 = vadd.f32 0.0, %v1392
        %1394 = vmatmul.bf16.gmra.mxu0 %v1242
        %v1395 = vpop.f32.mrf.mxu0
        %v1396 = vadd.f32 0.0, %v1395
        %v1397 = vpop.f32.mrf.mxu0
        %v1398 = vadd.f32 0.0, %v1397
        %1399 = vdwg.mxu0
        %1400 = vrot.lane.b32.xlu0 %v1254, 1
        %v1401 = vpop.permute.xlu0 %1400
        %1402 = vrot.lane.b32.xlu0 %v1256, 1
        %v1403 = vpop.permute.xlu0 %1402
        %1404 = vrot.lane.b32.xlu0 %v1259, 1
        %v1405 = vpop.permute.xlu0 %1404
        %1406 = vrot.lane.b32.xlu0 %v1261, 1
        %v1407 = vpop.permute.xlu0 %1406
        %1408 = vrot.lane.b32.xlu0 %v1293, 1
        %v1409 = vpop.permute.xlu0 %1408
        %1410 = vrot.lane.b32.xlu0 %v1295, 1
        %v1411 = vpop.permute.xlu0 %1410
        %1412 = vrot.lane.b32.xlu0 %v1298, 1
        %v1413 = vpop.permute.xlu0 %1412
        %1414 = vrot.lane.b32.xlu0 %v1300, 1
        %v1415 = vpop.permute.xlu0 %1414
        %1416 = vrot.lane.b32.xlu0 %v1332, 1
        %v1417 = vpop.permute.xlu0 %1416
        %1418 = vrot.lane.b32.xlu0 %v1334, 1
        %v1419 = vpop.permute.xlu0 %1418
        %1420 = vrot.lane.b32.xlu0 %v1337, 1
        %v1421 = vpop.permute.xlu0 %1420
        %1422 = vrot.lane.b32.xlu0 %v1339, 1
        %v1423 = vpop.permute.xlu0 %1422
        %1424 = vrot.lane.b32.xlu0 %v1371, 1
        %v1425 = vpop.permute.xlu0 %1424
        %1426 = vrot.lane.b32.xlu0 %v1373, 1
        %v1427 = vpop.permute.xlu0 %1426
        %1428 = vrot.lane.b32.xlu0 %v1376, 1
        %v1429 = vpop.permute.xlu0 %1428
        %1430 = vrot.lane.b32.xlu0 %v1378, 1
        %v1431 = vpop.permute.xlu0 %1430
        %v1432 = vsel %vm636, %v1417, %v1425
        %v1433 = vsel %vm636, %v1419, %v1427
        %v1434 = vsel %vm636, %v1421, %v1429
        %v1435 = vsel %vm636, %v1423, %v1431
        %v1436 = vsel %vm636, %v1409, %v1417
        %v1437 = vsel %vm636, %v1411, %v1419
        %v1438 = vsel %vm636, %v1413, %v1421
        %v1439 = vsel %vm636, %v1415, %v1423
        %v1440 = vsel %vm636, %v1401, %v1409
        %v1441 = vsel %vm636, %v1403, %v1411
        %v1442 = vsel %vm636, %v1405, %v1413
        %v1443 = vsel %vm636, %v1407, %v1415
        %v1444 = vsel %vm636, %v1425, %v1401
        %v1445 = vsel %vm636, %v1427, %v1403
        %v1446 = vsel %vm636, %v1429, %v1405
        %v1447 = vsel %vm636, %v1431, %v1407
        %v1448 = vmul.f32 %v1444, %v294
        %v1449 = vmul.f32 %v1440, %v295
        %v1450 = vmul.f32 %v1436, %v296
        %v1451 = vmul.f32 %v1432, %v297
        %v1452 = vmul.f32 %v1445, %v294
        %v1453 = vmul.f32 %v1441, %v295
        %v1454 = vmul.f32 %v1437, %v296
        %v1455 = vmul.f32 %v1433, %v297
        %v1456 = vmul.f32 %v1446, %v294
        %v1457 = vmul.f32 %v1442, %v295
        %v1458 = vmul.f32 %v1438, %v296
        %v1459 = vmul.f32 %v1434, %v297
        %v1460 = vmul.f32 %v1447, %v294
        %v1461 = vmul.f32 %v1443, %v295
        %v1462 = vmul.f32 %v1439, %v296
        %v1463 = vmul.f32 %v1435, %v297
        %v1464 = vadd.f32 %v1264, %v1448
        %v1465 = vadd.f32 %v1303, %v1449
        %v1466 = vadd.f32 %v1342, %v1450
        %v1467 = vadd.f32 %v1381, %v1451
        %v1468 = vadd.f32 %v1266, %v1452
        %v1469 = vadd.f32 %v1305, %v1453
        %v1470 = vadd.f32 %v1344, %v1454
        %v1471 = vadd.f32 %v1383, %v1455
        %v1472 = vadd.f32 %v1269, %v1456
        %v1473 = vadd.f32 %v1308, %v1457
        %v1474 = vadd.f32 %v1347, %v1458
        %v1475 = vadd.f32 %v1386, %v1459
        %v1476 = vadd.f32 %v1271, %v1460
        %v1477 = vadd.f32 %v1310, %v1461
        %v1478 = vadd.f32 %v1349, %v1462
        %v1479 = vadd.f32 %v1388, %v1463
        %1480 = vrot.lane.b32.xlu0 %v1274, 127
        %v1481 = vpop.permute.xlu0 %1480
        %1482 = vrot.lane.b32.xlu0 %v1276, 127
        %v1483 = vpop.permute.xlu0 %1482
        %1484 = vrot.lane.b32.xlu0 %v1279, 127
        %v1485 = vpop.permute.xlu0 %1484
        %1486 = vrot.lane.b32.xlu0 %v1281, 127
        %v1487 = vpop.permute.xlu0 %1486
        %1488 = vrot.lane.b32.xlu0 %v1313, 127
        %v1489 = vpop.permute.xlu0 %1488
        %1490 = vrot.lane.b32.xlu0 %v1315, 127
        %v1491 = vpop.permute.xlu0 %1490
        %1492 = vrot.lane.b32.xlu0 %v1318, 127
        %v1493 = vpop.permute.xlu0 %1492
        %1494 = vrot.lane.b32.xlu0 %v1320, 127
        %v1495 = vpop.permute.xlu0 %1494
        %1496 = vrot.lane.b32.xlu0 %v1352, 127
        %v1497 = vpop.permute.xlu0 %1496
        %1498 = vrot.lane.b32.xlu0 %v1354, 127
        %v1499 = vpop.permute.xlu0 %1498
        %1500 = vrot.lane.b32.xlu0 %v1357, 127
        %v1501 = vpop.permute.xlu0 %1500
        %1502 = vrot.lane.b32.xlu0 %v1359, 127
        %v1503 = vpop.permute.xlu0 %1502
        %1504 = vrot.lane.b32.xlu0 %v1391, 127
        %v1505 = vpop.permute.xlu0 %1504
        %1506 = vrot.lane.b32.xlu0 %v1393, 127
        %v1507 = vpop.permute.xlu0 %1506
        %1508 = vrot.lane.b32.xlu0 %v1396, 127
        %v1509 = vpop.permute.xlu0 %1508
        %1510 = vrot.lane.b32.xlu0 %v1398, 127
        %v1511 = vpop.permute.xlu0 %1510
        %v1512 = vsel %vm717, %v1497, %v1505
        %v1513 = vsel %vm717, %v1499, %v1507
        %v1514 = vsel %vm717, %v1501, %v1509
        %v1515 = vsel %vm717, %v1503, %v1511
        %v1516 = vsel %vm717, %v1489, %v1497
        %v1517 = vsel %vm717, %v1491, %v1499
        %v1518 = vsel %vm717, %v1493, %v1501
        %v1519 = vsel %vm717, %v1495, %v1503
        %v1520 = vsel %vm717, %v1481, %v1489
        %v1521 = vsel %vm717, %v1483, %v1491
        %v1522 = vsel %vm717, %v1485, %v1493
        %v1523 = vsel %vm717, %v1487, %v1495
        %v1524 = vsel %vm717, %v1505, %v1481
        %v1525 = vsel %vm717, %v1507, %v1483
        %v1526 = vsel %vm717, %v1509, %v1485
        %v1527 = vsel %vm717, %v1511, %v1487
        %v1528 = vmul.f32 %v1520, %v306
        %v1529 = vmul.f32 %v1516, %v307
        %v1530 = vmul.f32 %v1512, %v308
        %v1531 = vmul.f32 %v1524, %v309
        %v1532 = vmul.f32 %v1521, %v306
        %v1533 = vmul.f32 %v1517, %v307
        %v1534 = vmul.f32 %v1513, %v308
        %v1535 = vmul.f32 %v1525, %v309
        %v1536 = vmul.f32 %v1522, %v306
        %v1537 = vmul.f32 %v1518, %v307
        %v1538 = vmul.f32 %v1514, %v308
        %v1539 = vmul.f32 %v1526, %v309
        %v1540 = vmul.f32 %v1523, %v306
        %v1541 = vmul.f32 %v1519, %v307
        %v1542 = vmul.f32 %v1515, %v308
        %v1543 = vmul.f32 %v1527, %v309
        %v1544 = vadd.f32 %v1464, %v1528
        %v1545 = vadd.f32 %v1465, %v1529
        %v1546 = vadd.f32 %v1466, %v1530
        %v1547 = vadd.f32 %v1467, %v1531
        %v1548 = vadd.f32 %v1468, %v1532
        %v1549 = vadd.f32 %v1469, %v1533
        %v1550 = vadd.f32 %v1470, %v1534
        %v1551 = vadd.f32 %v1471, %v1535
        %v1552 = vadd.f32 %v1472, %v1536
        %v1553 = vadd.f32 %v1473, %v1537
        %v1554 = vadd.f32 %v1474, %v1538
        %v1555 = vadd.f32 %v1475, %v1539
        %v1556 = vadd.f32 %v1476, %v1540
        %v1557 = vadd.f32 %v1477, %v1541
        %v1558 = vadd.f32 %v1478, %v1542
        %v1559 = vadd.f32 %v1479, %v1543
        %1560 = vset.pattern.permute.xlu0 1
        %1561 = vperm.xlu0 %1560, %v310
        %v1562 = vpop.permute.xlu0 %1561
        %1564 = vset.pattern.permute.xlu0 1
        %1565 = vperm.xlu0 %1564, %v311
        %v1566 = vpop.permute.xlu0 %1565
        %1568 = vset.pattern.permute.xlu0 1
        %1569 = vperm.xlu0 %1568, %v312
        %v1570 = vpop.permute.xlu0 %1569
        %1572 = vset.pattern.permute.xlu0 1
        %1573 = vperm.xlu0 %1572, %v313
        %v1574 = vpop.permute.xlu0 %1573
        %v1576 = vadd.f32 %v1544, %v1562
        %v1577 = vadd.f32 %v1545, %v1562
        %v1578 = vadd.f32 %v1546, %v1562
        %v1579 = vadd.f32 %v1547, %v1562
        %v1580 = vadd.f32 %v1548, %v1566
        %v1581 = vadd.f32 %v1549, %v1566
        %v1582 = vadd.f32 %v1550, %v1566
        %v1583 = vadd.f32 %v1551, %v1566
        %v1584 = vadd.f32 %v1552, %v1570
        %v1585 = vadd.f32 %v1553, %v1570
        %v1586 = vadd.f32 %v1554, %v1570
        %v1587 = vadd.f32 %v1555, %v1570
        %v1588 = vadd.f32 %v1556, %v1574
        %v1589 = vadd.f32 %v1557, %v1574
        %v1590 = vadd.f32 %v1558, %v1574
        %v1591 = vadd.f32 %v1559, %v1574
        %v1592 = vmax.f32 %v1576, 0.0
        %v1593 = vmax.f32 %v1577, 0.0
        %v1594 = vmax.f32 %v1578, 0.0
        %v1595 = vmax.f32 %v1579, 0.0
        %v1596 = vmax.f32 %v1580, 0.0
        %v1597 = vmax.f32 %v1581, 0.0
        %v1598 = vmax.f32 %v1582, 0.0
        %v1599 = vmax.f32 %v1583, 0.0
        %v1600 = vmax.f32 %v1584, 0.0
        %v1601 = vmax.f32 %v1585, 0.0
        %v1602 = vmax.f32 %v1586, 0.0
        %v1603 = vmax.f32 %v1587, 0.0
        %v1604 = vmax.f32 %v1588, 0.0
        %v1605 = vmax.f32 %v1589, 0.0
        %v1606 = vmax.f32 %v1590, 0.0
        %v1607 = vmax.f32 %v1591, 0.0
        %s1608 = scalar_lea.vmem %s4, 256
        %v1609 = vld [vmem:[%s1608] sm:$0xff]
        %v1610 = vld [vmem:[%s1608 + $0x8] sm:$0xff]
        %v1611 = vld [vmem:[%s1608 + $0x10] sm:$0xff]
        %v1612 = vld [vmem:[%s1608 + $0x18] sm:$0xff]
        %v1613 = vld [vmem:[%s1608 + $0x20] sm:$0xff]
        %v1614 = vld [vmem:[%s1608 + $0x28] sm:$0xff]
        %v1615 = vld [vmem:[%s1608 + $0x30] sm:$0xff]
        %v1616 = vld [vmem:[%s1608 + $0x38] sm:$0xff]
        %v1617 = vld [vmem:[%s1608 + $0x40] sm:$0xff]
        %v1618 = vld [vmem:[%s1608 + $0x48] sm:$0xff]
        %v1619 = vld [vmem:[%s1608 + $0x50] sm:$0xff]
        %v1620 = vld [vmem:[%s1608 + $0x58] sm:$0xff]
        %v1621 = vld [vmem:[%s1608 + $0x60] sm:$0xff]
        %v1622 = vld [vmem:[%s1608 + $0x68] sm:$0xff]
        %v1623 = vld [vmem:[%s1608 + $0x70] sm:$0xff]
        %v1624 = vld [vmem:[%s1608 + $0x78] sm:$0xff]
        %s1625 = scalar_lea.vmem %s4, 384
        %v1626 = vld [vmem:[%s1625] sm:$0xff]
        %v1627 = vld [vmem:[%s1625 + $0x8] sm:$0xff]
        %v1628 = vld [vmem:[%s1625 + $0x10] sm:$0xff]
        %v1629 = vld [vmem:[%s1625 + $0x18] sm:$0xff]
        %v1630 = vld [vmem:[%s1625 + $0x20] sm:$0xff]
        %v1631 = vld [vmem:[%s1625 + $0x28] sm:$0xff]
        %v1632 = vld [vmem:[%s1625 + $0x30] sm:$0xff]
        %v1633 = vld [vmem:[%s1625 + $0x38] sm:$0xff]
        %v1634 = vld [vmem:[%s1625 + $0x40] sm:$0xff]
        %v1635 = vld [vmem:[%s1625 + $0x48] sm:$0xff]
        %v1636 = vld [vmem:[%s1625 + $0x50] sm:$0xff]
        %v1637 = vld [vmem:[%s1625 + $0x58] sm:$0xff]
        %v1638 = vld [vmem:[%s1625 + $0x60] sm:$0xff]
        %v1639 = vld [vmem:[%s1625 + $0x68] sm:$0xff]
        %v1640 = vld [vmem:[%s1625 + $0x70] sm:$0xff]
        %v1641 = vld [vmem:[%s1625 + $0x78] sm:$0xff]
        %v1642 = vmul.f32 %v1592, %v1592
        %v1643 = vmul.f32 %v1593, %v1593
        %v1644 = vmul.f32 %v1594, %v1594
        %v1645 = vmul.f32 %v1595, %v1595
        %v1646 = vmul.f32 %v1596, %v1596
        %v1647 = vmul.f32 %v1597, %v1597
        %v1648 = vmul.f32 %v1598, %v1598
        %v1649 = vmul.f32 %v1599, %v1599
        %v1650 = vmul.f32 %v1600, %v1600
        %v1651 = vmul.f32 %v1601, %v1601
        %v1652 = vmul.f32 %v1602, %v1602
        %v1653 = vmul.f32 %v1603, %v1603
        %v1654 = vmul.f32 %v1604, %v1604
        %v1655 = vmul.f32 %v1605, %v1605
        %v1656 = vmul.f32 %v1606, %v1606
        %v1657 = vmul.f32 %v1607, %v1607
        %v1658 = vadd.f32 %v1592, %v1596
        %v1659 = vadd.f32 %v1658, %v1600
        %v1660 = vadd.f32 %v1659, %v1604
        %1661 = vadd.xlane.f32.xlu0 %v1660
        %v1662 = vpop.xlane.xlu0 %1661
        %v1663 = vrot.slane %v1662, 4
        %v1664 = vadd.f32 %v1662, %v1663
        %v1665 = vrot.slane %v1664, 2
        %v1666 = vadd.f32 %v1664, %v1665
        %v1667 = vrot.slane %v1666, 1
        %v1668 = vadd.f32 %v1666, %v1667
        %s1669 = vtos %v1668
        %v1670 = vrcp.pop 4096.0
        %v1671 = vmul.f32 4096.0, %v1670
        %v1672 = vsub.f32 1.0, %v1671
        %v1673 = vmul.f32 %v1670, %v1672
        %v1674 = vadd.f32 %v1670, %v1673
        %vm1675 = vweird.f32 %v1670
        %v1676 = vsel %vm1675, %v1670, %v1674
        %s1677 = vtos %v1676
        %s1678 = smul.f32 %s1669, %s1677
        %v1679 = vadd.f32 %v1642, %v1646
        %v1680 = vadd.f32 %v1679, %v1650
        %v1681 = vadd.f32 %v1680, %v1654
        %1682 = vadd.xlane.f32.xlu0 %v1681
        %v1683 = vpop.xlane.xlu0 %1682
        %v1684 = vrot.slane %v1683, 4
        %v1685 = vadd.f32 %v1683, %v1684
        %v1686 = vrot.slane %v1685, 2
        %v1687 = vadd.f32 %v1685, %v1686
        %v1688 = vrot.slane %v1687, 1
        %v1689 = vadd.f32 %v1687, %v1688
        %s1690 = vtos %v1689
        %v1691 = vrcp.pop 4096.0
        %v1692 = vmul.f32 4096.0, %v1691
        %v1693 = vsub.f32 1.0, %v1692
        %v1694 = vmul.f32 %v1691, %v1693
        %v1695 = vadd.f32 %v1691, %v1694
        %vm1696 = vweird.f32 %v1691
        %v1697 = vsel %vm1696, %v1691, %v1695
        %s1698 = vtos %v1697
        %s1699 = smul.f32 %s1690, %s1698
        %s1700 = smul.f32 %s1678, %s1678
        %s1701 = ssub.f32 %s1699, %s1700
        %s1702 = sadd.f32 %s1701, 1e-05
        %v1703 = vstv %s1702
        %v1704 = vrsqrt.pop %v1703
        %v1705 = vmul.f32 %v1704, %v1703
        %v1706 = vmul.f32 %v1705, %v1704
        %v1707 = vmul.f32 0.5, %v1706
        %v1708 = vsub.f32 1.5, %v1707
        %v1709 = vmul.f32 %v1704, %v1708
        %vm1710 = vweird.f32 %v1703
        %vm1711 = vweird.f32 %v1704
        %vm1712 = vmor %vm1710, %vm1711
        %v1713 = vsel %vm1712, %v1704, %v1709
        %s1714 = vtos %v1713
        %v1715 = vstv %s1678
        %v1716 = vstv %s1714
        %v1717 = vadd.f32 %v1593, %v1597
        %v1718 = vadd.f32 %v1717, %v1601
        %v1719 = vadd.f32 %v1718, %v1605
        %1720 = vadd.xlane.f32.xlu0 %v1719
        %v1721 = vpop.xlane.xlu0 %1720
        %v1722 = vrot.slane %v1721, 4
        %v1723 = vadd.f32 %v1721, %v1722
        %v1724 = vrot.slane %v1723, 2
        %v1725 = vadd.f32 %v1723, %v1724
        %v1726 = vrot.slane %v1725, 1
        %v1727 = vadd.f32 %v1725, %v1726
        %s1728 = vtos %v1727
        %v1729 = vrcp.pop 4096.0
        %v1730 = vmul.f32 4096.0, %v1729
        %v1731 = vsub.f32 1.0, %v1730
        %v1732 = vmul.f32 %v1729, %v1731
        %v1733 = vadd.f32 %v1729, %v1732
        %vm1734 = vweird.f32 %v1729
        %v1735 = vsel %vm1734, %v1729, %v1733
        %s1736 = vtos %v1735
        %s1737 = smul.f32 %s1728, %s1736
        %v1738 = vadd.f32 %v1643, %v1647
        %v1739 = vadd.f32 %v1738, %v1651
        %v1740 = vadd.f32 %v1739, %v1655
        %1741 = vadd.xlane.f32.xlu0 %v1740
        %v1742 = vpop.xlane.xlu0 %1741
        %v1743 = vrot.slane %v1742, 4
        %v1744 = vadd.f32 %v1742, %v1743
        %v1745 = vrot.slane %v1744, 2
        %v1746 = vadd.f32 %v1744, %v1745
        %v1747 = vrot.slane %v1746, 1
        %v1748 = vadd.f32 %v1746, %v1747
        %s1749 = vtos %v1748
        %v1750 = vrcp.pop 4096.0
        %v1751 = vmul.f32 4096.0, %v1750
        %v1752 = vsub.f32 1.0, %v1751
        %v1753 = vmul.f32 %v1750, %v1752
        %v1754 = vadd.f32 %v1750, %v1753
        %vm1755 = vweird.f32 %v1750
        %v1756 = vsel %vm1755, %v1750, %v1754
        %s1757 = vtos %v1756
        %s1758 = smul.f32 %s1749, %s1757
        %s1759 = smul.f32 %s1737, %s1737
        %s1760 = ssub.f32 %s1758, %s1759
        %s1761 = sadd.f32 %s1760, 1e-05
        %v1762 = vstv %s1761
        %v1763 = vrsqrt.pop %v1762
        %v1764 = vmul.f32 %v1763, %v1762
        %v1765 = vmul.f32 %v1764, %v1763
        %v1766 = vmul.f32 0.5, %v1765
        %v1767 = vsub.f32 1.5, %v1766
        %v1768 = vmul.f32 %v1763, %v1767
        %vm1769 = vweird.f32 %v1762
        %vm1770 = vweird.f32 %v1763
        %vm1771 = vmor %vm1769, %vm1770
        %v1772 = vsel %vm1771, %v1763, %v1768
        %s1773 = vtos %v1772
        %v1774 = vstv %s1737
        %v1775 = vstv %s1773
        %v1776 = vadd.f32 %v1594, %v1598
        %v1777 = vadd.f32 %v1776, %v1602
        %v1778 = vadd.f32 %v1777, %v1606
        %1779 = vadd.xlane.f32.xlu0 %v1778
        %v1780 = vpop.xlane.xlu0 %1779
        %v1781 = vrot.slane %v1780, 4
        %v1782 = vadd.f32 %v1780, %v1781
        %v1783 = vrot.slane %v1782, 2
        %v1784 = vadd.f32 %v1782, %v1783
        %v1785 = vrot.slane %v1784, 1
        %v1786 = vadd.f32 %v1784, %v1785
        %s1787 = vtos %v1786
        %v1788 = vrcp.pop 4096.0
        %v1789 = vmul.f32 4096.0, %v1788
        %v1790 = vsub.f32 1.0, %v1789
        %v1791 = vmul.f32 %v1788, %v1790
        %v1792 = vadd.f32 %v1788, %v1791
        %vm1793 = vweird.f32 %v1788
        %v1794 = vsel %vm1793, %v1788, %v1792
        %s1795 = vtos %v1794
        %s1796 = smul.f32 %s1787, %s1795
        %v1797 = vadd.f32 %v1644, %v1648
        %v1798 = vadd.f32 %v1797, %v1652
        %v1799 = vadd.f32 %v1798, %v1656
        %1800 = vadd.xlane.f32.xlu0 %v1799
        %v1801 = vpop.xlane.xlu0 %1800
        %v1802 = vrot.slane %v1801, 4
        %v1803 = vadd.f32 %v1801, %v1802
        %v1804 = vrot.slane %v1803, 2
        %v1805 = vadd.f32 %v1803, %v1804
        %v1806 = vrot.slane %v1805, 1
        %v1807 = vadd.f32 %v1805, %v1806
        %s1808 = vtos %v1807
        %v1809 = vrcp.pop 4096.0
        %v1810 = vmul.f32 4096.0, %v1809
        %v1811 = vsub.f32 1.0, %v1810
        %v1812 = vmul.f32 %v1809, %v1811
        %v1813 = vadd.f32 %v1809, %v1812
        %vm1814 = vweird.f32 %v1809
        %v1815 = vsel %vm1814, %v1809, %v1813
        %s1816 = vtos %v1815
        %s1817 = smul.f32 %s1808, %s1816
        %s1818 = smul.f32 %s1796, %s1796
        %s1819 = ssub.f32 %s1817, %s1818
        %s1820 = sadd.f32 %s1819, 1e-05
        %v1821 = vstv %s1820
        %v1822 = vrsqrt.pop %v1821
        %v1823 = vmul.f32 %v1822, %v1821
        %v1824 = vmul.f32 %v1823, %v1822
        %v1825 = vmul.f32 0.5, %v1824
        %v1826 = vsub.f32 1.5, %v1825
        %v1827 = vmul.f32 %v1822, %v1826
        %vm1828 = vweird.f32 %v1821
        %vm1829 = vweird.f32 %v1822
        %vm1830 = vmor %vm1828, %vm1829
        %v1831 = vsel %vm1830, %v1822, %v1827
        %s1832 = vtos %v1831
        %v1833 = vstv %s1796
        %v1834 = vstv %s1832
        %v1835 = vadd.f32 %v1595, %v1599
        %v1836 = vadd.f32 %v1835, %v1603
        %v1837 = vadd.f32 %v1836, %v1607
        %1838 = vadd.xlane.f32.xlu0 %v1837
        %v1839 = vpop.xlane.xlu0 %1838
        %v1840 = vrot.slane %v1839, 4
        %v1841 = vadd.f32 %v1839, %v1840
        %v1842 = vrot.slane %v1841, 2
        %v1843 = vadd.f32 %v1841, %v1842
        %v1844 = vrot.slane %v1843, 1
        %v1845 = vadd.f32 %v1843, %v1844
        %s1846 = vtos %v1845
        %v1847 = vrcp.pop 4096.0
        %v1848 = vmul.f32 4096.0, %v1847
        %v1849 = vsub.f32 1.0, %v1848
        %v1850 = vmul.f32 %v1847, %v1849
        %v1851 = vadd.f32 %v1847, %v1850
        %vm1852 = vweird.f32 %v1847
        %v1853 = vsel %vm1852, %v1847, %v1851
        %s1854 = vtos %v1853
        %s1855 = smul.f32 %s1846, %s1854
        %v1856 = vadd.f32 %v1645, %v1649
        %v1857 = vadd.f32 %v1856, %v1653
        %v1858 = vadd.f32 %v1857, %v1657
        %1859 = vadd.xlane.f32.xlu0 %v1858
        %v1860 = vpop.xlane.xlu0 %1859
        %v1861 = vrot.slane %v1860, 4
        %v1862 = vadd.f32 %v1860, %v1861
        %v1863 = vrot.slane %v1862, 2
        %v1864 = vadd.f32 %v1862, %v1863
        %v1865 = vrot.slane %v1864, 1
        %v1866 = vadd.f32 %v1864, %v1865
        %s1867 = vtos %v1866
        %v1868 = vrcp.pop 4096.0
        %v1869 = vmul.f32 4096.0, %v1868
        %v1870 = vsub.f32 1.0, %v1869
        %v1871 = vmul.f32 %v1868, %v1870
        %v1872 = vadd.f32 %v1868, %v1871
        %vm1873 = vweird.f32 %v1868
        %v1874 = vsel %vm1873, %v1868, %v1872
        %s1875 = vtos %v1874
        %s1876 = smul.f32 %s1867, %s1875
        %s1877 = smul.f32 %s1855, %s1855
        %s1878 = ssub.f32 %s1876, %s1877
        %s1879 = sadd.f32 %s1878, 1e-05
        %v1880 = vstv %s1879
        %v1881 = vrsqrt.pop %v1880
        %v1882 = vmul.f32 %v1881, %v1880
        %v1883 = vmul.f32 %v1882, %v1881
        %v1884 = vmul.f32 0.5, %v1883
        %v1885 = vsub.f32 1.5, %v1884
        %v1886 = vmul.f32 %v1881, %v1885
        %vm1887 = vweird.f32 %v1880
        %vm1888 = vweird.f32 %v1881
        %vm1889 = vmor %vm1887, %vm1888
        %v1890 = vsel %vm1889, %v1881, %v1886
        %s1891 = vtos %v1890
        %v1892 = vstv %s1855
        %v1893 = vstv %s1891
        %v1894 = vperm.slane %v1715, 0
        %v1895 = vperm.slane %v1774, 0
        %v1896 = vperm.slane %v1833, 0
        %v1897 = vperm.slane %v1892, 0
        %v1898 = vsub.f32 %v1592, %v1894
        %v1899 = vsub.f32 %v1593, %v1895
        %v1900 = vsub.f32 %v1594, %v1896
        %v1901 = vsub.f32 %v1595, %v1897
        %v1902 = vsub.f32 %v1596, %v1894
        %v1903 = vsub.f32 %v1597, %v1895
        %v1904 = vsub.f32 %v1598, %v1896
        %v1905 = vsub.f32 %v1599, %v1897
        %v1906 = vsub.f32 %v1600, %v1894
        %v1907 = vsub.f32 %v1601, %v1895
        %v1908 = vsub.f32 %v1602, %v1896
        %v1909 = vsub.f32 %v1603, %v1897
        %v1910 = vsub.f32 %v1604, %v1894
        %v1911 = vsub.f32 %v1605, %v1895
        %v1912 = vsub.f32 %v1606, %v1896
        %v1913 = vsub.f32 %v1607, %v1897
        %v1914 = vperm.slane %v1716, 0
        %v1915 = vperm.slane %v1775, 0
        %v1916 = vperm.slane %v1834, 0
        %v1917 = vperm.slane %v1893, 0
        %v1918 = vmul.f32 %v1898, %v1914
        %v1919 = vmul.f32 %v1899, %v1915
        %v1920 = vmul.f32 %v1900, %v1916
        %v1921 = vmul.f32 %v1901, %v1917
        %v1922 = vmul.f32 %v1902, %v1914
        %v1923 = vmul.f32 %v1903, %v1915
        %v1924 = vmul.f32 %v1904, %v1916
        %v1925 = vmul.f32 %v1905, %v1917
        %v1926 = vmul.f32 %v1906, %v1914
        %v1927 = vmul.f32 %v1907, %v1915
        %v1928 = vmul.f32 %v1908, %v1916
        %v1929 = vmul.f32 %v1909, %v1917
        %v1930 = vmul.f32 %v1910, %v1914
        %v1931 = vmul.f32 %v1911, %v1915
        %v1932 = vmul.f32 %v1912, %v1916
        %v1933 = vmul.f32 %v1913, %v1917
        %v1934 = vmul.f32 %v1918, %v1609
        %v1935 = vmul.f32 %v1919, %v1610
        %v1936 = vmul.f32 %v1920, %v1611
        %v1937 = vmul.f32 %v1921, %v1612
        %v1938 = vmul.f32 %v1922, %v1613
        %v1939 = vmul.f32 %v1923, %v1614
        %v1940 = vmul.f32 %v1924, %v1615
        %v1941 = vmul.f32 %v1925, %v1616
        %v1942 = vmul.f32 %v1926, %v1617
        %v1943 = vmul.f32 %v1927, %v1618
        %v1944 = vmul.f32 %v1928, %v1619
        %v1945 = vmul.f32 %v1929, %v1620
        %v1946 = vmul.f32 %v1930, %v1621
        %v1947 = vmul.f32 %v1931, %v1622
        %v1948 = vmul.f32 %v1932, %v1623
        %v1949 = vmul.f32 %v1933, %v1624
        %v1950 = vadd.f32 %v1934, %v1626
        %v1951 = vadd.f32 %v1935, %v1627
        %v1952 = vadd.f32 %v1936, %v1628
        %v1953 = vadd.f32 %v1937, %v1629
        %v1954 = vadd.f32 %v1938, %v1630
        %v1955 = vadd.f32 %v1939, %v1631
        %v1956 = vadd.f32 %v1940, %v1632
        %v1957 = vadd.f32 %v1941, %v1633
        %v1958 = vadd.f32 %v1942, %v1634
        %v1959 = vadd.f32 %v1943, %v1635
        %v1960 = vadd.f32 %v1944, %v1636
        %v1961 = vadd.f32 %v1945, %v1637
        %v1962 = vadd.f32 %v1946, %v1638
        %v1963 = vadd.f32 %v1947, %v1639
        %v1964 = vadd.f32 %v1948, %v1640
        %v1965 = vadd.f32 %v1949, %v1641
        %s1966 = scalar_lea.vmem %s2, 48
        %v1967 = vld [vmem:[%s1966] sm:$0xf]
        %v1968 = vld [vmem:[%s1966 + $0x4] sm:$0xf]
        %v1969 = vld [vmem:[%s1966 + $0x8] sm:$0xf]
        %v1970 = vld [vmem:[%s1966 + $0xc] sm:$0xf]
        %v1971 = vld [vmem:[%s1966 + $0x10] sm:$0xf]
        %v1972 = vld [vmem:[%s1966 + $0x14] sm:$0xf]
        %v1973 = vld [vmem:[%s1966 + $0x18] sm:$0xf]
        %v1974 = vld [vmem:[%s1966 + $0x1c] sm:$0xf]
        %v1975 = vld [vmem:[%s1966 + $0x20] sm:$0xf]
        %v1976 = vld [vmem:[%s1966 + $0x24] sm:$0xf]
        %v1977 = vld [vmem:[%s1966 + $0x28] sm:$0xf]
        %v1978 = vld [vmem:[%s1966 + $0x2c] sm:$0xf]
        %v1979 = vpack.c.bf16 %v1954, %v1950
        %v1980 = vpack.c.bf16 %v1955, %v1951
        %v1981 = vpack.c.bf16 %v1956, %v1952
        %v1982 = vpack.c.bf16 %v1957, %v1953
        %v1983 = vpack.c.bf16 %v1962, %v1958
        %v1984 = vpack.c.bf16 %v1963, %v1959
        %v1985 = vpack.c.bf16 %v1964, %v1960
        %v1986 = vpack.c.bf16 %v1965, %v1961
        %v1999 = vunpack.c.l.b16 %v1967
        %v2000 = vunpack.c.l.b16 %v1968
        %v2001 = vunpack.c.l.b16 %v1969
        %v2002 = vunpack.c.l.b16 %v1970
        %v2003 = vunpack.c.l.b16 %v1971
        %v2004 = vunpack.c.l.b16 %v1972
        %v2005 = vunpack.c.l.b16 %v1973
        %v2006 = vunpack.c.l.b16 %v1974
        %v2007 = vunpack.c.l.b16 %v1975
        %v2008 = vunpack.c.l.b16 %v1976
        %v2009 = vunpack.c.l.b16 %v1977
        %v2010 = vunpack.c.l.b16 %v1978
        %v2011 = vpack.c.b16 %v2000, %v1999
        %v2012 = vpack.c.b16 %v2002, %v2001
        %v2013 = vpack.c.b16 %v2004, %v2003
        %v2014 = vpack.c.b16 %v2006, %v2005
        %v2015 = vpack.c.b16 %v2008, %v2007
        %v2016 = vpack.c.b16 %v2010, %v2009
        %v2018 = vsel %vm1225, %v2011, 0
        %v2021 = vsel %vm1225, %v2012, 0
        %v2024 = vsel %vm1225, %v2013, 0
        %v2027 = vsel %vm1225, %v2014, 0
        %v2030 = vsel %vm1225, %v2015, 0
        %v2033 = vsel %vm1225, %v2016, 0
        %2035 = vmatpush.bf16.msra.mxu0 0
        %2036 = vmatpush.bf16.msra.mxu0 0
        %2037 = vmatpush.bf16.msra.mxu0 0
        %2038 = vmatpush.bf16.msra.mxu0 0
        %2039 = vmatpush.bf16.msra.mxu0 0
        %2040 = vmatpush.bf16.msra.mxu0 0
        %2041 = vmatpush.bf16.msra.mxu0 %v1983
        %2042 = vmatpush.bf16.msra.mxu0 %v1979
        %2043 = vmatmul.bf16.gmra.mxu0 %v2018
        %v2044 = vpop.f32.mrf.mxu0
        %v2045 = vadd.f32 0.0, %v2044
        %v2046 = vpop.f32.mrf.mxu0
        %v2047 = vadd.f32 0.0, %v2046
        %2048 = vmatmul.bf16.gmra.mxu0 %v2021
        %v2049 = vpop.f32.mrf.mxu0
        %v2050 = vadd.f32 0.0, %v2049
        %v2051 = vpop.f32.mrf.mxu0
        %v2052 = vadd.f32 0.0, %v2051
        %2053 = vmatmul.bf16.gmra.mxu0 %v2024
        %v2054 = vpop.f32.mrf.mxu0
        %v2055 = vadd.f32 0.0, %v2054
        %v2056 = vpop.f32.mrf.mxu0
        %v2057 = vadd.f32 0.0, %v2056
        %2058 = vmatmul.bf16.gmra.mxu0 %v2027
        %v2059 = vpop.f32.mrf.mxu0
        %v2060 = vadd.f32 0.0, %v2059
        %v2061 = vpop.f32.mrf.mxu0
        %v2062 = vadd.f32 0.0, %v2061
        %2063 = vmatmul.bf16.gmra.mxu0 %v2030
        %v2064 = vpop.f32.mrf.mxu0
        %v2065 = vadd.f32 0.0, %v2064
        %v2066 = vpop.f32.mrf.mxu0
        %v2067 = vadd.f32 0.0, %v2066
        %2068 = vmatmul.bf16.gmra.mxu0 %v2033
        %v2069 = vpop.f32.mrf.mxu0
        %v2070 = vadd.f32 0.0, %v2069
        %v2071 = vpop.f32.mrf.mxu0
        %v2072 = vadd.f32 0.0, %v2071
        %2073 = vdwg.mxu0
        %2074 = vmatpush.bf16.msra.mxu0 0
        %2075 = vmatpush.bf16.msra.mxu0 0
        %2076 = vmatpush.bf16.msra.mxu0 0
        %2077 = vmatpush.bf16.msra.mxu0 0
        %2078 = vmatpush.bf16.msra.mxu0 0
        %2079 = vmatpush.bf16.msra.mxu0 0
        %2080 = vmatpush.bf16.msra.mxu0 %v1984
        %2081 = vmatpush.bf16.msra.mxu0 %v1980
        %2082 = vmatmul.bf16.gmra.mxu0 %v2018
        %v2083 = vpop.f32.mrf.mxu0
        %v2084 = vadd.f32 0.0, %v2083
        %v2085 = vpop.f32.mrf.mxu0
        %v2086 = vadd.f32 0.0, %v2085
        %2087 = vmatmul.bf16.gmra.mxu0 %v2021
        %v2088 = vpop.f32.mrf.mxu0
        %v2089 = vadd.f32 0.0, %v2088
        %v2090 = vpop.f32.mrf.mxu0
        %v2091 = vadd.f32 0.0, %v2090
        %2092 = vmatmul.bf16.gmra.mxu0 %v2024
        %v2093 = vpop.f32.mrf.mxu0
        %v2094 = vadd.f32 0.0, %v2093
        %v2095 = vpop.f32.mrf.mxu0
        %v2096 = vadd.f32 0.0, %v2095
        %2097 = vmatmul.bf16.gmra.mxu0 %v2027
        %v2098 = vpop.f32.mrf.mxu0
        %v2099 = vadd.f32 0.0, %v2098
        %v2100 = vpop.f32.mrf.mxu0
        %v2101 = vadd.f32 0.0, %v2100
        %2102 = vmatmul.bf16.gmra.mxu0 %v2030
        %v2103 = vpop.f32.mrf.mxu0
        %v2104 = vadd.f32 0.0, %v2103
        %v2105 = vpop.f32.mrf.mxu0
        %v2106 = vadd.f32 0.0, %v2105
        %2107 = vmatmul.bf16.gmra.mxu0 %v2033
        %v2108 = vpop.f32.mrf.mxu0
        %v2109 = vadd.f32 0.0, %v2108
        %v2110 = vpop.f32.mrf.mxu0
        %v2111 = vadd.f32 0.0, %v2110
        %2112 = vdwg.mxu0
        %2113 = vmatpush.bf16.msra.mxu0 0
        %2114 = vmatpush.bf16.msra.mxu0 0
        %2115 = vmatpush.bf16.msra.mxu0 0
        %2116 = vmatpush.bf16.msra.mxu0 0
        %2117 = vmatpush.bf16.msra.mxu0 0
        %2118 = vmatpush.bf16.msra.mxu0 0
        %2119 = vmatpush.bf16.msra.mxu0 %v1985
        %2120 = vmatpush.bf16.msra.mxu0 %v1981
        %2121 = vmatmul.bf16.gmra.mxu0 %v2018
        %v2122 = vpop.f32.mrf.mxu0
        %v2123 = vadd.f32 0.0, %v2122
        %v2124 = vpop.f32.mrf.mxu0
        %v2125 = vadd.f32 0.0, %v2124
        %2126 = vmatmul.bf16.gmra.mxu0 %v2021
        %v2127 = vpop.f32.mrf.mxu0
        %v2128 = vadd.f32 0.0, %v2127
        %v2129 = vpop.f32.mrf.mxu0
        %v2130 = vadd.f32 0.0, %v2129
        %2131 = vmatmul.bf16.gmra.mxu0 %v2024
        %v2132 = vpop.f32.mrf.mxu0
        %v2133 = vadd.f32 0.0, %v2132
        %v2134 = vpop.f32.mrf.mxu0
        %v2135 = vadd.f32 0.0, %v2134
        %2136 = vmatmul.bf16.gmra.mxu0 %v2027
        %v2137 = vpop.f32.mrf.mxu0
        %v2138 = vadd.f32 0.0, %v2137
        %v2139 = vpop.f32.mrf.mxu0
        %v2140 = vadd.f32 0.0, %v2139
        %2141 = vmatmul.bf16.gmra.mxu0 %v2030
        %v2142 = vpop.f32.mrf.mxu0
        %v2143 = vadd.f32 0.0, %v2142
        %v2144 = vpop.f32.mrf.mxu0
        %v2145 = vadd.f32 0.0, %v2144
        %2146 = vmatmul.bf16.gmra.mxu0 %v2033
        %v2147 = vpop.f32.mrf.mxu0
        %v2148 = vadd.f32 0.0, %v2147
        %v2149 = vpop.f32.mrf.mxu0
        %v2150 = vadd.f32 0.0, %v2149
        %2151 = vdwg.mxu0
        %2152 = vmatpush.bf16.msra.mxu0 0
        %2153 = vmatpush.bf16.msra.mxu0 0
        %2154 = vmatpush.bf16.msra.mxu0 0
        %2155 = vmatpush.bf16.msra.mxu0 0
        %2156 = vmatpush.bf16.msra.mxu0 0
        %2157 = vmatpush.bf16.msra.mxu0 0
        %2158 = vmatpush.bf16.msra.mxu0 %v1986
        %2159 = vmatpush.bf16.msra.mxu0 %v1982
        %2160 = vmatmul.bf16.gmra.mxu0 %v2018
        %v2161 = vpop.f32.mrf.mxu0
        %v2162 = vadd.f32 0.0, %v2161
        %v2163 = vpop.f32.mrf.mxu0
        %v2164 = vadd.f32 0.0, %v2163
        %2165 = vmatmul.bf16.gmra.mxu0 %v2021
        %v2166 = vpop.f32.mrf.mxu0
        %v2167 = vadd.f32 0.0, %v2166
        %v2168 = vpop.f32.mrf.mxu0
        %v2169 = vadd.f32 0.0, %v2168
        %2170 = vmatmul.bf16.gmra.mxu0 %v2024
        %v2171 = vpop.f32.mrf.mxu0
        %v2172 = vadd.f32 0.0, %v2171
        %v2173 = vpop.f32.mrf.mxu0
        %v2174 = vadd.f32 0.0, %v2173
        %2175 = vmatmul.bf16.gmra.mxu0 %v2027
        %v2176 = vpop.f32.mrf.mxu0
        %v2177 = vadd.f32 0.0, %v2176
        %v2178 = vpop.f32.mrf.mxu0
        %v2179 = vadd.f32 0.0, %v2178
        %2180 = vmatmul.bf16.gmra.mxu0 %v2030
        %v2181 = vpop.f32.mrf.mxu0
        %v2182 = vadd.f32 0.0, %v2181
        %v2183 = vpop.f32.mrf.mxu0
        %v2184 = vadd.f32 0.0, %v2183
        %2185 = vmatmul.bf16.gmra.mxu0 %v2033
        %v2186 = vpop.f32.mrf.mxu0
        %v2187 = vadd.f32 0.0, %v2186
        %v2188 = vpop.f32.mrf.mxu0
        %v2189 = vadd.f32 0.0, %v2188
        %2190 = vdwg.mxu0
        %2191 = vrot.lane.b32.xlu0 %v2045, 1
        %v2192 = vpop.permute.xlu0 %2191
        %2193 = vrot.lane.b32.xlu0 %v2047, 1
        %v2194 = vpop.permute.xlu0 %2193
        %2195 = vrot.lane.b32.xlu0 %v2050, 1
        %v2196 = vpop.permute.xlu0 %2195
        %2197 = vrot.lane.b32.xlu0 %v2052, 1
        %v2198 = vpop.permute.xlu0 %2197
        %2199 = vrot.lane.b32.xlu0 %v2084, 1
        %v2200 = vpop.permute.xlu0 %2199
        %2201 = vrot.lane.b32.xlu0 %v2086, 1
        %v2202 = vpop.permute.xlu0 %2201
        %2203 = vrot.lane.b32.xlu0 %v2089, 1
        %v2204 = vpop.permute.xlu0 %2203
        %2205 = vrot.lane.b32.xlu0 %v2091, 1
        %v2206 = vpop.permute.xlu0 %2205
        %2207 = vrot.lane.b32.xlu0 %v2123, 1
        %v2208 = vpop.permute.xlu0 %2207
        %2209 = vrot.lane.b32.xlu0 %v2125, 1
        %v2210 = vpop.permute.xlu0 %2209
        %2211 = vrot.lane.b32.xlu0 %v2128, 1
        %v2212 = vpop.permute.xlu0 %2211
        %2213 = vrot.lane.b32.xlu0 %v2130, 1
        %v2214 = vpop.permute.xlu0 %2213
        %2215 = vrot.lane.b32.xlu0 %v2162, 1
        %v2216 = vpop.permute.xlu0 %2215
        %2217 = vrot.lane.b32.xlu0 %v2164, 1
        %v2218 = vpop.permute.xlu0 %2217
        %2219 = vrot.lane.b32.xlu0 %v2167, 1
        %v2220 = vpop.permute.xlu0 %2219
        %2221 = vrot.lane.b32.xlu0 %v2169, 1
        %v2222 = vpop.permute.xlu0 %2221
        %v2223 = vsel %vm636, %v2208, %v2216
        %v2224 = vsel %vm636, %v2210, %v2218
        %v2225 = vsel %vm636, %v2212, %v2220
        %v2226 = vsel %vm636, %v2214, %v2222
        %v2227 = vsel %vm636, %v2200, %v2208
        %v2228 = vsel %vm636, %v2202, %v2210
        %v2229 = vsel %vm636, %v2204, %v2212
        %v2230 = vsel %vm636, %v2206, %v2214
        %v2231 = vsel %vm636, %v2192, %v2200
        %v2232 = vsel %vm636, %v2194, %v2202
        %v2233 = vsel %vm636, %v2196, %v2204
        %v2234 = vsel %vm636, %v2198, %v2206
        %v2235 = vsel %vm636, %v2216, %v2192
        %v2236 = vsel %vm636, %v2218, %v2194
        %v2237 = vsel %vm636, %v2220, %v2196
        %v2238 = vsel %vm636, %v2222, %v2198
        %v2239 = vmul.f32 %v2235, %v294
        %v2240 = vmul.f32 %v2231, %v295
        %v2241 = vmul.f32 %v2227, %v296
        %v2242 = vmul.f32 %v2223, %v297
        %v2243 = vmul.f32 %v2236, %v294
        %v2244 = vmul.f32 %v2232, %v295
        %v2245 = vmul.f32 %v2228, %v296
        %v2246 = vmul.f32 %v2224, %v297
        %v2247 = vmul.f32 %v2237, %v294
        %v2248 = vmul.f32 %v2233, %v295
        %v2249 = vmul.f32 %v2229, %v296
        %v2250 = vmul.f32 %v2225, %v297
        %v2251 = vmul.f32 %v2238, %v294
        %v2252 = vmul.f32 %v2234, %v295
        %v2253 = vmul.f32 %v2230, %v296
        %v2254 = vmul.f32 %v2226, %v297
        %v2255 = vadd.f32 %v2055, %v2239
        %v2256 = vadd.f32 %v2094, %v2240
        %v2257 = vadd.f32 %v2133, %v2241
        %v2258 = vadd.f32 %v2172, %v2242
        %v2259 = vadd.f32 %v2057, %v2243
        %v2260 = vadd.f32 %v2096, %v2244
        %v2261 = vadd.f32 %v2135, %v2245
        %v2262 = vadd.f32 %v2174, %v2246
        %v2263 = vadd.f32 %v2060, %v2247
        %v2264 = vadd.f32 %v2099, %v2248
        %v2265 = vadd.f32 %v2138, %v2249
        %v2266 = vadd.f32 %v2177, %v2250
        %v2267 = vadd.f32 %v2062, %v2251
        %v2268 = vadd.f32 %v2101, %v2252
        %v2269 = vadd.f32 %v2140, %v2253
        %v2270 = vadd.f32 %v2179, %v2254
        %2271 = vrot.lane.b32.xlu0 %v2065, 127
        %v2272 = vpop.permute.xlu0 %2271
        %2273 = vrot.lane.b32.xlu0 %v2067, 127
        %v2274 = vpop.permute.xlu0 %2273
        %2275 = vrot.lane.b32.xlu0 %v2070, 127
        %v2276 = vpop.permute.xlu0 %2275
        %2277 = vrot.lane.b32.xlu0 %v2072, 127
        %v2278 = vpop.permute.xlu0 %2277
        %2279 = vrot.lane.b32.xlu0 %v2104, 127
        %v2280 = vpop.permute.xlu0 %2279
        %2281 = vrot.lane.b32.xlu0 %v2106, 127
        %v2282 = vpop.permute.xlu0 %2281
        %2283 = vrot.lane.b32.xlu0 %v2109, 127
        %v2284 = vpop.permute.xlu0 %2283
        %2285 = vrot.lane.b32.xlu0 %v2111, 127
        %v2286 = vpop.permute.xlu0 %2285
        %2287 = vrot.lane.b32.xlu0 %v2143, 127
        %v2288 = vpop.permute.xlu0 %2287
        %2289 = vrot.lane.b32.xlu0 %v2145, 127
        %v2290 = vpop.permute.xlu0 %2289
        %2291 = vrot.lane.b32.xlu0 %v2148, 127
        %v2292 = vpop.permute.xlu0 %2291
        %2293 = vrot.lane.b32.xlu0 %v2150, 127
        %v2294 = vpop.permute.xlu0 %2293
        %2295 = vrot.lane.b32.xlu0 %v2182, 127
        %v2296 = vpop.permute.xlu0 %2295
        %2297 = vrot.lane.b32.xlu0 %v2184, 127
        %v2298 = vpop.permute.xlu0 %2297
        %2299 = vrot.lane.b32.xlu0 %v2187, 127
        %v2300 = vpop.permute.xlu0 %2299
        %2301 = vrot.lane.b32.xlu0 %v2189, 127
        %v2302 = vpop.permute.xlu0 %2301
        %v2303 = vsel %vm717, %v2288, %v2296
        %v2304 = vsel %vm717, %v2290, %v2298
        %v2305 = vsel %vm717, %v2292, %v2300
        %v2306 = vsel %vm717, %v2294, %v2302
        %v2307 = vsel %vm717, %v2280, %v2288
        %v2308 = vsel %vm717, %v2282, %v2290
        %v2309 = vsel %vm717, %v2284, %v2292
        %v2310 = vsel %vm717, %v2286, %v2294
        %v2311 = vsel %vm717, %v2272, %v2280
        %v2312 = vsel %vm717, %v2274, %v2282
        %v2313 = vsel %vm717, %v2276, %v2284
        %v2314 = vsel %vm717, %v2278, %v2286
        %v2315 = vsel %vm717, %v2296, %v2272
        %v2316 = vsel %vm717, %v2298, %v2274
        %v2317 = vsel %vm717, %v2300, %v2276
        %v2318 = vsel %vm717, %v2302, %v2278
        %v2319 = vmul.f32 %v2311, %v306
        %v2320 = vmul.f32 %v2307, %v307
        %v2321 = vmul.f32 %v2303, %v308
        %v2322 = vmul.f32 %v2315, %v309
        %v2323 = vmul.f32 %v2312, %v306
        %v2324 = vmul.f32 %v2308, %v307
        %v2325 = vmul.f32 %v2304, %v308
        %v2326 = vmul.f32 %v2316, %v309
        %v2327 = vmul.f32 %v2313, %v306
        %v2328 = vmul.f32 %v2309, %v307
        %v2329 = vmul.f32 %v2305, %v308
        %v2330 = vmul.f32 %v2317, %v309
        %v2331 = vmul.f32 %v2314, %v306
        %v2332 = vmul.f32 %v2310, %v307
        %v2333 = vmul.f32 %v2306, %v308
        %v2334 = vmul.f32 %v2318, %v309
        %v2335 = vadd.f32 %v2255, %v2319
        %v2336 = vadd.f32 %v2256, %v2320
        %v2337 = vadd.f32 %v2257, %v2321
        %v2338 = vadd.f32 %v2258, %v2322
        %v2339 = vadd.f32 %v2259, %v2323
        %v2340 = vadd.f32 %v2260, %v2324
        %v2341 = vadd.f32 %v2261, %v2325
        %v2342 = vadd.f32 %v2262, %v2326
        %v2343 = vadd.f32 %v2263, %v2327
        %v2344 = vadd.f32 %v2264, %v2328
        %v2345 = vadd.f32 %v2265, %v2329
        %v2346 = vadd.f32 %v2266, %v2330
        %v2347 = vadd.f32 %v2267, %v2331
        %v2348 = vadd.f32 %v2268, %v2332
        %v2349 = vadd.f32 %v2269, %v2333
        %v2350 = vadd.f32 %v2270, %v2334
        %2351 = vset.pattern.permute.xlu0 2
        %2352 = vperm.xlu0 %2351, %v310
        %v2353 = vpop.permute.xlu0 %2352
        %2355 = vset.pattern.permute.xlu0 2
        %2356 = vperm.xlu0 %2355, %v311
        %v2357 = vpop.permute.xlu0 %2356
        %2359 = vset.pattern.permute.xlu0 2
        %2360 = vperm.xlu0 %2359, %v312
        %v2361 = vpop.permute.xlu0 %2360
        %2363 = vset.pattern.permute.xlu0 2
        %2364 = vperm.xlu0 %2363, %v313
        %v2365 = vpop.permute.xlu0 %2364
        %v2367 = vadd.f32 %v2335, %v2353
        %v2368 = vadd.f32 %v2336, %v2353
        %v2369 = vadd.f32 %v2337, %v2353
        %v2370 = vadd.f32 %v2338, %v2353
        %v2371 = vadd.f32 %v2339, %v2357
        %v2372 = vadd.f32 %v2340, %v2357
        %v2373 = vadd.f32 %v2341, %v2357
        %v2374 = vadd.f32 %v2342, %v2357
        %v2375 = vadd.f32 %v2343, %v2361
        %v2376 = vadd.f32 %v2344, %v2361
        %v2377 = vadd.f32 %v2345, %v2361
        %v2378 = vadd.f32 %v2346, %v2361
        %v2379 = vadd.f32 %v2347, %v2365
        %v2380 = vadd.f32 %v2348, %v2365
        %v2381 = vadd.f32 %v2349, %v2365
        %v2382 = vadd.f32 %v2350, %v2365
        %v2383 = vmax.f32 %v2367, 0.0
        %v2384 = vmax.f32 %v2368, 0.0
        %v2385 = vmax.f32 %v2369, 0.0
        %v2386 = vmax.f32 %v2370, 0.0
        %v2387 = vmax.f32 %v2371, 0.0
        %v2388 = vmax.f32 %v2372, 0.0
        %v2389 = vmax.f32 %v2373, 0.0
        %v2390 = vmax.f32 %v2374, 0.0
        %v2391 = vmax.f32 %v2375, 0.0
        %v2392 = vmax.f32 %v2376, 0.0
        %v2393 = vmax.f32 %v2377, 0.0
        %v2394 = vmax.f32 %v2378, 0.0
        %v2395 = vmax.f32 %v2379, 0.0
        %v2396 = vmax.f32 %v2380, 0.0
        %v2397 = vmax.f32 %v2381, 0.0
        %v2398 = vmax.f32 %v2382, 0.0
        %2399 = vrot.lane.b32.xlu0 %v2383, 127
        %v2400 = vpop.permute.xlu0 %2399
        %2401 = vrot.lane.b32.xlu0 %v2387, 127
        %v2402 = vpop.permute.xlu0 %2401
        %2403 = vrot.lane.b32.xlu0 %v2391, 127
        %v2404 = vpop.permute.xlu0 %2403
        %2405 = vrot.lane.b32.xlu0 %v2395, 127
        %v2406 = vpop.permute.xlu0 %2405
        %2407 = vrot.lane.b32.xlu0 %v2384, 127
        %v2408 = vpop.permute.xlu0 %2407
        %2409 = vrot.lane.b32.xlu0 %v2388, 127
        %v2410 = vpop.permute.xlu0 %2409
        %2411 = vrot.lane.b32.xlu0 %v2392, 127
        %v2412 = vpop.permute.xlu0 %2411
        %2413 = vrot.lane.b32.xlu0 %v2396, 127
        %v2414 = vpop.permute.xlu0 %2413
        %2415 = vrot.lane.b32.xlu0 %v2385, 127
        %v2416 = vpop.permute.xlu0 %2415
        %2417 = vrot.lane.b32.xlu0 %v2389, 127
        %v2418 = vpop.permute.xlu0 %2417
        %2419 = vrot.lane.b32.xlu0 %v2393, 127
        %v2420 = vpop.permute.xlu0 %2419
        %2421 = vrot.lane.b32.xlu0 %v2397, 127
        %v2422 = vpop.permute.xlu0 %2421
        %2423 = vrot.lane.b32.xlu0 %v2386, 127
        %v2424 = vpop.permute.xlu0 %2423
        %2425 = vrot.lane.b32.xlu0 %v2390, 127
        %v2426 = vpop.permute.xlu0 %2425
        %2427 = vrot.lane.b32.xlu0 %v2394, 127
        %v2428 = vpop.permute.xlu0 %2427
        %2429 = vrot.lane.b32.xlu0 %v2398, 127
        %v2430 = vpop.permute.xlu0 %2429
        %v2431 = vsel %vm717, %v2416, %v2424
        %v2432 = vsel %vm717, %v2418, %v2426
        %v2433 = vsel %vm717, %v2420, %v2428
        %v2434 = vsel %vm717, %v2422, %v2430
        %v2435 = vsel %vm717, %v2408, %v2416
        %v2436 = vsel %vm717, %v2410, %v2418
        %v2437 = vsel %vm717, %v2412, %v2420
        %v2438 = vsel %vm717, %v2414, %v2422
        %v2439 = vsel %vm717, %v2400, %v2408
        %v2440 = vsel %vm717, %v2402, %v2410
        %v2441 = vsel %vm717, %v2404, %v2412
        %v2442 = vsel %vm717, %v2406, %v2414
        %v2443 = vsel %vm717, %v2424, %v2400
        %v2444 = vsel %vm717, %v2426, %v2402
        %v2445 = vsel %vm717, %v2428, %v2404
        %v2446 = vsel %vm717, %v2430, %v2406
        %v2447 = vmax.f32 %v2383, %v2439
        %v2448 = vmax.f32 %v2384, %v2435
        %v2449 = vmax.f32 %v2385, %v2431
        %v2450 = vmax.f32 %v2386, %v2443
        %v2451 = vmax.f32 %v2387, %v2440
        %v2452 = vmax.f32 %v2388, %v2436
        %v2453 = vmax.f32 %v2389, %v2432
        %v2454 = vmax.f32 %v2390, %v2444
        %v2455 = vmax.f32 %v2391, %v2441
        %v2456 = vmax.f32 %v2392, %v2437
        %v2457 = vmax.f32 %v2393, %v2433
        %v2458 = vmax.f32 %v2394, %v2445
        %v2459 = vmax.f32 %v2395, %v2442
        %v2460 = vmax.f32 %v2396, %v2438
        %v2461 = vmax.f32 %v2397, %v2434
        %v2462 = vmax.f32 %v2398, %v2446
        %v2463 = vpack.c.bf16 %v2448, %v2447
        %v2464 = vpack.c.bf16 %v2450, %v2449
        %v2465 = vpack.c.bf16 %v2452, %v2451
        %v2466 = vpack.c.bf16 %v2454, %v2453
        %v2467 = vpack.c.bf16 %v2456, %v2455
        %v2468 = vpack.c.bf16 %v2458, %v2457
        %v2469 = vpack.c.bf16 %v2460, %v2459
        %v2470 = vpack.c.bf16 %v2462, %v2461
        %v2471 = vld [vmem:[%s6] sm:$0xf]
        %v2472 = vld [vmem:[%s6 + $0x4] sm:$0xf]
        %v2473 = vld [vmem:[%s6 + $0x8] sm:$0xf]
        %v2474 = vld [vmem:[%s6 + $0xc] sm:$0xf]
        %v2475 = vld [vmem:[%s6 + $0x10] sm:$0xf]
        %v2476 = vld [vmem:[%s6 + $0x14] sm:$0xf]
        %v2477 = vld [vmem:[%s6 + $0x18] sm:$0xf]
        %v2478 = vld [vmem:[%s6 + $0x1c] sm:$0xf]
        %v2479 = vld [vmem:[%s6 + $0x20] sm:$0xf]
        %v2480 = vld [vmem:[%s6 + $0x24] sm:$0xf]
        %v2481 = vld [vmem:[%s6 + $0x28] sm:$0xf]
        %v2482 = vld [vmem:[%s6 + $0x2c] sm:$0xf]
        %v2483 = vld [vmem:[%s6 + $0x30] sm:$0xf]
        %v2484 = vld [vmem:[%s6 + $0x34] sm:$0xf]
        %v2485 = vld [vmem:[%s6 + $0x38] sm:$0xf]
        %v2486 = vld [vmem:[%s6 + $0x3c] sm:$0xf]
        %v2487 = vld [vmem:[%s5] sm:$0xff]
        %v2488 = vld [vmem:[%s5 + $0x8] sm:$0xff]
        %v2489 = vld [vmem:[%s5 + $0x10] sm:$0xff]
        %v2490 = vld [vmem:[%s5 + $0x18] sm:$0xff]
        %s2491 = scalar_lea.vmem %s5, 32
        %v2492 = vld [vmem:[%s2491] sm:$0xff]
        %v2493 = vld [vmem:[%s2491 + $0x8] sm:$0xff]
        %v2494 = vld [vmem:[%s2491 + $0x10] sm:$0xff]
        %v2495 = vld [vmem:[%s2491 + $0x18] sm:$0xff]
        %v2500 = vunpack.c.l.b16 %v2463
        %v2501 = vunpack.c.l.b16 %v2465
        %v2502 = vunpack.c.l.b16 %v2467
        %v2503 = vunpack.c.l.b16 %v2469
        %v2504 = vpack.c.b16 %v2501, %v2500
        %v2505 = vpack.c.b16 %v2503, %v2502
        %v2524 = vunpack.c.l.b16 %v2471
        %v2525 = vunpack.c.l.b16 %v2472
        %v2526 = vunpack.c.l.b16 %v2473
        %v2527 = vunpack.c.l.b16 %v2474
        %v2528 = vunpack.c.l.b16 %v2475
        %v2529 = vunpack.c.l.b16 %v2476
        %v2530 = vunpack.c.l.b16 %v2477
        %v2531 = vunpack.c.l.b16 %v2478
        %v2532 = vunpack.c.l.b16 %v2479
        %v2533 = vunpack.c.l.b16 %v2480
        %v2534 = vunpack.c.l.b16 %v2481
        %v2535 = vunpack.c.l.b16 %v2482
        %v2536 = vunpack.c.l.b16 %v2483
        %v2537 = vunpack.c.l.b16 %v2484
        %v2538 = vunpack.c.l.b16 %v2485
        %v2539 = vunpack.c.l.b16 %v2486
        %v2540 = vpack.c.b16 %v2525, %v2524
        %v2541 = vpack.c.b16 %v2527, %v2526
        %v2542 = vpack.c.b16 %v2529, %v2528
        %v2543 = vpack.c.b16 %v2531, %v2530
        %v2544 = vpack.c.b16 %v2533, %v2532
        %v2545 = vpack.c.b16 %v2535, %v2534
        %v2546 = vpack.c.b16 %v2537, %v2536
        %v2547 = vpack.c.b16 %v2539, %v2538
        %2556 = vmatpush.bf16.msra.mxu0 %v2547
        %2557 = vmatpush.bf16.msra.mxu0 %v2546
        %2558 = vmatpush.bf16.msra.mxu0 %v2545
        %2559 = vmatpush.bf16.msra.mxu0 %v2544
        %2560 = vmatpush.bf16.msra.mxu0 %v2543
        %2561 = vmatpush.bf16.msra.mxu0 %v2542
        %2562 = vmatpush.bf16.msra.mxu0 %v2541
        %2563 = vmatpush.bf16.msra.mxu0 %v2540
        %2564 = vmatmul.bf16.gmra.mxu0 %v2504
        %v2565 = vpop.f32.mrf.mxu0
        %v2566 = vadd.f32 0.0, %v2565
        %v2567 = vpop.f32.mrf.mxu0
        %v2568 = vadd.f32 0.0, %v2567
        %2569 = vmatmul.bf16.gmra.mxu0 %v2505
        %v2570 = vpop.f32.mrf.mxu0
        %v2571 = vadd.f32 0.0, %v2570
        %v2572 = vpop.f32.mrf.mxu0
        %v2573 = vadd.f32 0.0, %v2572
        %2574 = vdwg.mxu0
        %vm2575 = vcmask 523264
        %v2576 = vsel %vm2575, %v2566, 0.0
        %v2577 = vsel %vm2575, %v2568, 0.0
        %v2578 = vadd.f32 %v2576, %v2577
        %v2579 = vsel %vm2575, %v2571, 0.0
        %v2580 = vadd.f32 %v2578, %v2579
        %v2581 = vsel %vm2575, %v2573, 0.0
        %v2582 = vadd.f32 %v2580, %v2581
        %2583 = vadd.xlane.f32.xlu0 %v2582
        %v2584 = vpop.xlane.xlu0 %2583
        %v2585 = vrot.slane %v2584, 4
        %v2586 = vadd.f32 %v2584, %v2585
        %v2587 = vrot.slane %v2586, 2
        %v2588 = vadd.f32 %v2586, %v2587
        %v2589 = vrot.slane %v2588, 1
        %v2590 = vadd.f32 %v2588, %v2589
        %s2591 = vtos %v2590
        %v2592 = vrcp.pop 2048.0
        %v2593 = vmul.f32 2048.0, %v2592
        %v2594 = vsub.f32 1.0, %v2593
        %v2595 = vmul.f32 %v2592, %v2594
        %v2596 = vadd.f32 %v2592, %v2595
        %vm2597 = vweird.f32 %v2592
        %v2598 = vsel %vm2597, %v2592, %v2596
        %s2599 = vtos %v2598
        %s2600 = smul.f32 %s2591, %s2599
        %v2601 = vmul.f32 %v2566, %v2566
        %v2602 = vmul.f32 %v2568, %v2568
        %v2603 = vmul.f32 %v2571, %v2571
        %v2604 = vmul.f32 %v2573, %v2573
        %v2605 = vsel %vm2575, %v2601, 0.0
        %v2606 = vsel %vm2575, %v2602, 0.0
        %v2607 = vadd.f32 %v2605, %v2606
        %v2608 = vsel %vm2575, %v2603, 0.0
        %v2609 = vadd.f32 %v2607, %v2608
        %v2610 = vsel %vm2575, %v2604, 0.0
        %v2611 = vadd.f32 %v2609, %v2610
        %2612 = vadd.xlane.f32.xlu0 %v2611
        %v2613 = vpop.xlane.xlu0 %2612
        %v2614 = vrot.slane %v2613, 4
        %v2615 = vadd.f32 %v2613, %v2614
        %v2616 = vrot.slane %v2615, 2
        %v2617 = vadd.f32 %v2615, %v2616
        %v2618 = vrot.slane %v2617, 1
        %v2619 = vadd.f32 %v2617, %v2618
        %s2620 = vtos %v2619
        %v2621 = vrcp.pop 2048.0
        %v2622 = vmul.f32 2048.0, %v2621
        %v2623 = vsub.f32 1.0, %v2622
        %v2624 = vmul.f32 %v2621, %v2623
        %v2625 = vadd.f32 %v2621, %v2624
        %vm2626 = vweird.f32 %v2621
        %v2627 = vsel %vm2626, %v2621, %v2625
        %s2628 = vtos %v2627
        %s2629 = smul.f32 %s2620, %s2628
        %s2630 = smul.f32 %s2600, %s2600
        %s2631 = ssub.f32 %s2629, %s2630
        %s2632 = sadd.f32 %s2631, 1e-05
        %v2633 = vstv %s2632
        %v2634 = vrsqrt.pop %v2633
        %v2635 = vmul.f32 %v2634, %v2633
        %v2636 = vmul.f32 %v2635, %v2634
        %v2637 = vmul.f32 0.5, %v2636
        %v2638 = vsub.f32 1.5, %v2637
        %v2639 = vmul.f32 %v2634, %v2638
        %vm2640 = vweird.f32 %v2633
        %vm2641 = vweird.f32 %v2634
        %vm2642 = vmor %vm2640, %vm2641
        %v2643 = vsel %vm2642, %v2634, %v2639
        %s2644 = vtos %v2643
        %v2645 = vstv %s2600
        %v2646 = vsub.f32 %v2566, %v2645
        %v2647 = vsub.f32 %v2568, %v2645
        %v2648 = vsub.f32 %v2571, %v2645
        %v2649 = vsub.f32 %v2573, %v2645
        %v2650 = vstv %s2644
        %v2651 = vmul.f32 %v2646, %v2650
        %v2652 = vmul.f32 %v2647, %v2650
        %v2653 = vmul.f32 %v2648, %v2650
        %v2654 = vmul.f32 %v2649, %v2650
        %v2655 = vmul.f32 %v2651, %v2487
        %v2656 = vmul.f32 %v2652, %v2488
        %v2657 = vmul.f32 %v2653, %v2489
        %v2658 = vmul.f32 %v2654, %v2490
        %v2659 = vadd.f32 %v2655, %v2492
        %v2660 = vadd.f32 %v2656, %v2493
        %v2661 = vadd.f32 %v2657, %v2494
        %v2662 = vadd.f32 %v2658, %v2495
        %v2663 = vpack.c.bf16 %v2659, %v2659
        %v2664 = vpack.c.bf16 %v2660, %v2660
        %v2665 = vpack.c.bf16 %v2661, %v2661
        %v2666 = vpack.c.bf16 %v2662, %v2662
        %v2667 = vunpack.c.h.b16 %v2463
        %v2668 = vunpack.c.h.b16 %v2465
        %v2669 = vunpack.c.h.b16 %v2467
        %v2670 = vunpack.c.h.b16 %v2469
        %v2671 = vpack.c.b16 %v2668, %v2667
        %v2672 = vpack.c.b16 %v2670, %v2669
        %2675 = vmatpush.bf16.msra.mxu0 %v2547
        %2676 = vmatpush.bf16.msra.mxu0 %v2546
        %2677 = vmatpush.bf16.msra.mxu0 %v2545
        %2678 = vmatpush.bf16.msra.mxu0 %v2544
        %2679 = vmatpush.bf16.msra.mxu0 %v2543
        %2680 = vmatpush.bf16.msra.mxu0 %v2542
        %2681 = vmatpush.bf16.msra.mxu0 %v2541
        %2682 = vmatpush.bf16.msra.mxu0 %v2540
        %2683 = vmatmul.bf16.gmra.mxu0 %v2671
        %v2684 = vpop.f32.mrf.mxu0
        %v2685 = vadd.f32 0.0, %v2684
        %v2686 = vpop.f32.mrf.mxu0
        %v2687 = vadd.f32 0.0, %v2686
        %2688 = vmatmul.bf16.gmra.mxu0 %v2672
        %v2689 = vpop.f32.mrf.mxu0
        %v2690 = vadd.f32 0.0, %v2689
        %v2691 = vpop.f32.mrf.mxu0
        %v2692 = vadd.f32 0.0, %v2691
        %2693 = vdwg.mxu0
        %v2694 = vsel %vm2575, %v2685, 0.0
        %v2695 = vsel %vm2575, %v2687, 0.0
        %v2696 = vadd.f32 %v2694, %v2695
        %v2697 = vsel %vm2575, %v2690, 0.0
        %v2698 = vadd.f32 %v2696, %v2697
        %v2699 = vsel %vm2575, %v2692, 0.0
        %v2700 = vadd.f32 %v2698, %v2699
        %2701 = vadd.xlane.f32.xlu0 %v2700
        %v2702 = vpop.xlane.xlu0 %2701
        %v2703 = vrot.slane %v2702, 4
        %v2704 = vadd.f32 %v2702, %v2703
        %v2705 = vrot.slane %v2704, 2
        %v2706 = vadd.f32 %v2704, %v2705
        %v2707 = vrot.slane %v2706, 1
        %v2708 = vadd.f32 %v2706, %v2707
        %s2709 = vtos %v2708
        %v2710 = vrcp.pop 2048.0
        %v2711 = vmul.f32 2048.0, %v2710
        %v2712 = vsub.f32 1.0, %v2711
        %v2713 = vmul.f32 %v2710, %v2712
        %v2714 = vadd.f32 %v2710, %v2713
        %vm2715 = vweird.f32 %v2710
        %v2716 = vsel %vm2715, %v2710, %v2714
        %s2717 = vtos %v2716
        %s2718 = smul.f32 %s2709, %s2717
        %v2719 = vmul.f32 %v2685, %v2685
        %v2720 = vmul.f32 %v2687, %v2687
        %v2721 = vmul.f32 %v2690, %v2690
        %v2722 = vmul.f32 %v2692, %v2692
        %v2723 = vsel %vm2575, %v2719, 0.0
        %v2724 = vsel %vm2575, %v2720, 0.0
        %v2725 = vadd.f32 %v2723, %v2724
        %v2726 = vsel %vm2575, %v2721, 0.0
        %v2727 = vadd.f32 %v2725, %v2726
        %v2728 = vsel %vm2575, %v2722, 0.0
        %v2729 = vadd.f32 %v2727, %v2728
        %2730 = vadd.xlane.f32.xlu0 %v2729
        %v2731 = vpop.xlane.xlu0 %2730
        %v2732 = vrot.slane %v2731, 4
        %v2733 = vadd.f32 %v2731, %v2732
        %v2734 = vrot.slane %v2733, 2
        %v2735 = vadd.f32 %v2733, %v2734
        %v2736 = vrot.slane %v2735, 1
        %v2737 = vadd.f32 %v2735, %v2736
        %s2738 = vtos %v2737
        %v2739 = vrcp.pop 2048.0
        %v2740 = vmul.f32 2048.0, %v2739
        %v2741 = vsub.f32 1.0, %v2740
        %v2742 = vmul.f32 %v2739, %v2741
        %v2743 = vadd.f32 %v2739, %v2742
        %vm2744 = vweird.f32 %v2739
        %v2745 = vsel %vm2744, %v2739, %v2743
        %s2746 = vtos %v2745
        %s2747 = smul.f32 %s2738, %s2746
        %s2748 = smul.f32 %s2718, %s2718
        %s2749 = ssub.f32 %s2747, %s2748
        %s2750 = sadd.f32 %s2749, 1e-05
        %v2751 = vstv %s2750
        %v2752 = vrsqrt.pop %v2751
        %v2753 = vmul.f32 %v2752, %v2751
        %v2754 = vmul.f32 %v2753, %v2752
        %v2755 = vmul.f32 0.5, %v2754
        %v2756 = vsub.f32 1.5, %v2755
        %v2757 = vmul.f32 %v2752, %v2756
        %vm2758 = vweird.f32 %v2751
        %vm2759 = vweird.f32 %v2752
        %vm2760 = vmor %vm2758, %vm2759
        %v2761 = vsel %vm2760, %v2752, %v2757
        %s2762 = vtos %v2761
        %v2763 = vstv %s2718
        %v2764 = vsub.f32 %v2685, %v2763
        %v2765 = vsub.f32 %v2687, %v2763
        %v2766 = vsub.f32 %v2690, %v2763
        %v2767 = vsub.f32 %v2692, %v2763
        %v2768 = vstv %s2762
        %v2769 = vmul.f32 %v2764, %v2768
        %v2770 = vmul.f32 %v2765, %v2768
        %v2771 = vmul.f32 %v2766, %v2768
        %v2772 = vmul.f32 %v2767, %v2768
        %v2773 = vmul.f32 %v2769, %v2487
        %v2774 = vmul.f32 %v2770, %v2488
        %v2775 = vmul.f32 %v2771, %v2489
        %v2776 = vmul.f32 %v2772, %v2490
        %v2777 = vadd.f32 %v2773, %v2492
        %v2778 = vadd.f32 %v2774, %v2493
        %v2779 = vadd.f32 %v2775, %v2494
        %v2780 = vadd.f32 %v2776, %v2495
        %v2781 = vpack.c.bf16 %v2777, %v2777
        %v2782 = vpack.c.bf16 %v2778, %v2778
        %v2783 = vpack.c.bf16 %v2779, %v2779
        %v2784 = vpack.c.bf16 %v2780, %v2780
        %v2789 = vunpack.c.l.b16 %v2464
        %v2790 = vunpack.c.l.b16 %v2466
        %v2791 = vunpack.c.l.b16 %v2468
        %v2792 = vunpack.c.l.b16 %v2470
        %v2793 = vpack.c.b16 %v2790, %v2789
        %v2794 = vpack.c.b16 %v2792, %v2791
        %2797 = vmatpush.bf16.msra.mxu0 %v2547
        %2798 = vmatpush.bf16.msra.mxu0 %v2546
        %2799 = vmatpush.bf16.msra.mxu0 %v2545
        %2800 = vmatpush.bf16.msra.mxu0 %v2544
        %2801 = vmatpush.bf16.msra.mxu0 %v2543
        %2802 = vmatpush.bf16.msra.mxu0 %v2542
        %2803 = vmatpush.bf16.msra.mxu0 %v2541
        %2804 = vmatpush.bf16.msra.mxu0 %v2540
        %2805 = vmatmul.bf16.gmra.mxu0 %v2793
        %v2806 = vpop.f32.mrf.mxu0
        %v2807 = vadd.f32 0.0, %v2806
        %v2808 = vpop.f32.mrf.mxu0
        %v2809 = vadd.f32 0.0, %v2808
        %2810 = vmatmul.bf16.gmra.mxu0 %v2794
        %v2811 = vpop.f32.mrf.mxu0
        %v2812 = vadd.f32 0.0, %v2811
        %v2813 = vpop.f32.mrf.mxu0
        %v2814 = vadd.f32 0.0, %v2813
        %2815 = vdwg.mxu0
        %v2816 = vsel %vm2575, %v2807, 0.0
        %v2817 = vsel %vm2575, %v2809, 0.0
        %v2818 = vadd.f32 %v2816, %v2817
        %v2819 = vsel %vm2575, %v2812, 0.0
        %v2820 = vadd.f32 %v2818, %v2819
        %v2821 = vsel %vm2575, %v2814, 0.0
        %v2822 = vadd.f32 %v2820, %v2821
        %2823 = vadd.xlane.f32.xlu0 %v2822
        %v2824 = vpop.xlane.xlu0 %2823
        %v2825 = vrot.slane %v2824, 4
        %v2826 = vadd.f32 %v2824, %v2825
        %v2827 = vrot.slane %v2826, 2
        %v2828 = vadd.f32 %v2826, %v2827
        %v2829 = vrot.slane %v2828, 1
        %v2830 = vadd.f32 %v2828, %v2829
        %s2831 = vtos %v2830
        %v2832 = vrcp.pop 2048.0
        %v2833 = vmul.f32 2048.0, %v2832
        %v2834 = vsub.f32 1.0, %v2833
        %v2835 = vmul.f32 %v2832, %v2834
        %v2836 = vadd.f32 %v2832, %v2835
        %vm2837 = vweird.f32 %v2832
        %v2838 = vsel %vm2837, %v2832, %v2836
        %s2839 = vtos %v2838
        %s2840 = smul.f32 %s2831, %s2839
        %v2841 = vmul.f32 %v2807, %v2807
        %v2842 = vmul.f32 %v2809, %v2809
        %v2843 = vmul.f32 %v2812, %v2812
        %v2844 = vmul.f32 %v2814, %v2814
        %v2845 = vsel %vm2575, %v2841, 0.0
        %v2846 = vsel %vm2575, %v2842, 0.0
        %v2847 = vadd.f32 %v2845, %v2846
        %v2848 = vsel %vm2575, %v2843, 0.0
        %v2849 = vadd.f32 %v2847, %v2848
        %v2850 = vsel %vm2575, %v2844, 0.0
        %v2851 = vadd.f32 %v2849, %v2850
        %2852 = vadd.xlane.f32.xlu0 %v2851
        %v2853 = vpop.xlane.xlu0 %2852
        %v2854 = vrot.slane %v2853, 4
        %v2855 = vadd.f32 %v2853, %v2854
        %v2856 = vrot.slane %v2855, 2
        %v2857 = vadd.f32 %v2855, %v2856
        %v2858 = vrot.slane %v2857, 1
        %v2859 = vadd.f32 %v2857, %v2858
        %s2860 = vtos %v2859
        %v2861 = vrcp.pop 2048.0
        %v2862 = vmul.f32 2048.0, %v2861
        %v2863 = vsub.f32 1.0, %v2862
        %v2864 = vmul.f32 %v2861, %v2863
        %v2865 = vadd.f32 %v2861, %v2864
        %vm2866 = vweird.f32 %v2861
        %v2867 = vsel %vm2866, %v2861, %v2865
        %s2868 = vtos %v2867
        %s2869 = smul.f32 %s2860, %s2868
        %s2870 = smul.f32 %s2840, %s2840
        %s2871 = ssub.f32 %s2869, %s2870
        %s2872 = sadd.f32 %s2871, 1e-05
        %v2873 = vstv %s2872
        %v2874 = vrsqrt.pop %v2873
        %v2875 = vmul.f32 %v2874, %v2873
        %v2876 = vmul.f32 %v2875, %v2874
        %v2877 = vmul.f32 0.5, %v2876
        %v2878 = vsub.f32 1.5, %v2877
        %v2879 = vmul.f32 %v2874, %v2878
        %vm2880 = vweird.f32 %v2873
        %vm2881 = vweird.f32 %v2874
        %vm2882 = vmor %vm2880, %vm2881
        %v2883 = vsel %vm2882, %v2874, %v2879
        %s2884 = vtos %v2883
        %v2885 = vstv %s2840
        %v2886 = vsub.f32 %v2807, %v2885
        %v2887 = vsub.f32 %v2809, %v2885
        %v2888 = vsub.f32 %v2812, %v2885
        %v2889 = vsub.f32 %v2814, %v2885
        %v2890 = vstv %s2884
        %v2891 = vmul.f32 %v2886, %v2890
        %v2892 = vmul.f32 %v2887, %v2890
        %v2893 = vmul.f32 %v2888, %v2890
        %v2894 = vmul.f32 %v2889, %v2890
        %v2895 = vmul.f32 %v2891, %v2487
        %v2896 = vmul.f32 %v2892, %v2488
        %v2897 = vmul.f32 %v2893, %v2489
        %v2898 = vmul.f32 %v2894, %v2490
        %v2899 = vadd.f32 %v2895, %v2492
        %v2900 = vadd.f32 %v2896, %v2493
        %v2901 = vadd.f32 %v2897, %v2494
        %v2902 = vadd.f32 %v2898, %v2495
        %v2903 = vpack.c.bf16 %v2899, %v2899
        %v2904 = vpack.c.bf16 %v2900, %v2900
        %v2905 = vpack.c.bf16 %v2901, %v2901
        %v2906 = vpack.c.bf16 %v2902, %v2902
        %v2907 = vunpack.c.h.b16 %v2464
        %v2908 = vunpack.c.h.b16 %v2466
        %v2909 = vunpack.c.h.b16 %v2468
        %v2910 = vunpack.c.h.b16 %v2470
        %v2911 = vpack.c.b16 %v2908, %v2907
        %v2912 = vpack.c.b16 %v2910, %v2909
        %2915 = vmatpush.bf16.msra.mxu0 %v2547
        %2916 = vmatpush.bf16.msra.mxu0 %v2546
        %2917 = vmatpush.bf16.msra.mxu0 %v2545
        %2918 = vmatpush.bf16.msra.mxu0 %v2544
        %2919 = vmatpush.bf16.msra.mxu0 %v2543
        %2920 = vmatpush.bf16.msra.mxu0 %v2542
        %2921 = vmatpush.bf16.msra.mxu0 %v2541
        %2922 = vmatpush.bf16.msra.mxu0 %v2540
        %2923 = vmatmul.bf16.gmra.mxu0 %v2911
        %v2924 = vpop.f32.mrf.mxu0
        %v2925 = vadd.f32 0.0, %v2924
        %v2926 = vpop.f32.mrf.mxu0
        %v2927 = vadd.f32 0.0, %v2926
        %2928 = vmatmul.bf16.gmra.mxu0 %v2912
        %v2929 = vpop.f32.mrf.mxu0
        %v2930 = vadd.f32 0.0, %v2929
        %v2931 = vpop.f32.mrf.mxu0
        %v2932 = vadd.f32 0.0, %v2931
        %2933 = vdwg.mxu0
        %v2934 = vsel %vm2575, %v2925, 0.0
        %v2935 = vsel %vm2575, %v2927, 0.0
        %v2936 = vadd.f32 %v2934, %v2935
        %v2937 = vsel %vm2575, %v2930, 0.0
        %v2938 = vadd.f32 %v2936, %v2937
        %v2939 = vsel %vm2575, %v2932, 0.0
        %v2940 = vadd.f32 %v2938, %v2939
        %2941 = vadd.xlane.f32.xlu0 %v2940
        %v2942 = vpop.xlane.xlu0 %2941
        %v2943 = vrot.slane %v2942, 4
        %v2944 = vadd.f32 %v2942, %v2943
        %v2945 = vrot.slane %v2944, 2
        %v2946 = vadd.f32 %v2944, %v2945
        %v2947 = vrot.slane %v2946, 1
        %v2948 = vadd.f32 %v2946, %v2947
        %s2949 = vtos %v2948
        %v2950 = vrcp.pop 2048.0
        %v2951 = vmul.f32 2048.0, %v2950
        %v2952 = vsub.f32 1.0, %v2951
        %v2953 = vmul.f32 %v2950, %v2952
        %v2954 = vadd.f32 %v2950, %v2953
        %vm2955 = vweird.f32 %v2950
        %v2956 = vsel %vm2955, %v2950, %v2954
        %s2957 = vtos %v2956
        %s2958 = smul.f32 %s2949, %s2957
        %v2959 = vmul.f32 %v2925, %v2925
        %v2960 = vmul.f32 %v2927, %v2927
        %v2961 = vmul.f32 %v2930, %v2930
        %v2962 = vmul.f32 %v2932, %v2932
        %v2963 = vsel %vm2575, %v2959, 0.0
        %v2964 = vsel %vm2575, %v2960, 0.0
        %v2965 = vadd.f32 %v2963, %v2964
        %v2966 = vsel %vm2575, %v2961, 0.0
        %v2967 = vadd.f32 %v2965, %v2966
        %v2968 = vsel %vm2575, %v2962, 0.0
        %v2969 = vadd.f32 %v2967, %v2968
        %2970 = vadd.xlane.f32.xlu0 %v2969
        %v2971 = vpop.xlane.xlu0 %2970
        %v2972 = vrot.slane %v2971, 4
        %v2973 = vadd.f32 %v2971, %v2972
        %v2974 = vrot.slane %v2973, 2
        %v2975 = vadd.f32 %v2973, %v2974
        %v2976 = vrot.slane %v2975, 1
        %v2977 = vadd.f32 %v2975, %v2976
        %s2978 = vtos %v2977
        %v2979 = vrcp.pop 2048.0
        %v2980 = vmul.f32 2048.0, %v2979
        %v2981 = vsub.f32 1.0, %v2980
        %v2982 = vmul.f32 %v2979, %v2981
        %v2983 = vadd.f32 %v2979, %v2982
        %vm2984 = vweird.f32 %v2979
        %v2985 = vsel %vm2984, %v2979, %v2983
        %s2986 = vtos %v2985
        %s2987 = smul.f32 %s2978, %s2986
        %s2988 = smul.f32 %s2958, %s2958
        %s2989 = ssub.f32 %s2987, %s2988
        %s2990 = sadd.f32 %s2989, 1e-05
        %v2991 = vstv %s2990
        %v2992 = vrsqrt.pop %v2991
        %v2993 = vmul.f32 %v2992, %v2991
        %v2994 = vmul.f32 %v2993, %v2992
        %v2995 = vmul.f32 0.5, %v2994
        %v2996 = vsub.f32 1.5, %v2995
        %v2997 = vmul.f32 %v2992, %v2996
        %vm2998 = vweird.f32 %v2991
        %vm2999 = vweird.f32 %v2992
        %vm3000 = vmor %vm2998, %vm2999
        %v3001 = vsel %vm3000, %v2992, %v2997
        %s3002 = vtos %v3001
        %v3003 = vstv %s2958
        %v3004 = vsub.f32 %v2925, %v3003
        %v3005 = vsub.f32 %v2927, %v3003
        %v3006 = vsub.f32 %v2930, %v3003
        %v3007 = vsub.f32 %v2932, %v3003
        %v3008 = vstv %s3002
        %v3009 = vmul.f32 %v3004, %v3008
        %v3010 = vmul.f32 %v3005, %v3008
        %v3011 = vmul.f32 %v3006, %v3008
        %v3012 = vmul.f32 %v3007, %v3008
        %v3013 = vmul.f32 %v3009, %v2487
        %v3014 = vmul.f32 %v3010, %v2488
        %v3015 = vmul.f32 %v3011, %v2489
        %v3016 = vmul.f32 %v3012, %v2490
        %v3017 = vadd.f32 %v3013, %v2492
        %v3018 = vadd.f32 %v3014, %v2493
        %v3019 = vadd.f32 %v3015, %v2494
        %v3020 = vadd.f32 %v3016, %v2495
        %v3021 = vpack.c.bf16 %v3017, %v3017
        %v3022 = vpack.c.bf16 %v3018, %v3018
        %v3023 = vpack.c.bf16 %v3019, %v3019
        %v3024 = vpack.c.bf16 %v3020, %v3020
        %v3029 = vunpack.c.l.b16 %v2663
        %v3030 = vunpack.c.l.b16 %v2664
        %v3031 = vunpack.c.l.b16 %v2665
        %v3032 = vunpack.c.l.b16 %v2666
        %v3033 = vpack.c.b16 %v3030, %v3029
        %v3034 = vpack.c.b16 %v3032, %v3031
        %v3039 = vunpack.c.l.b16 %v2781
        %v3040 = vunpack.c.l.b16 %v2782
        %v3041 = vunpack.c.l.b16 %v2783
        %v3042 = vunpack.c.l.b16 %v2784
        %v3043 = vpack.c.b16 %v3040, %v3039
        %v3044 = vpack.c.b16 %v3042, %v3041
        %3045 = vrot.lane.b32.xlu0 %v3043, 64
        %v3046 = vpop.permute.xlu0 %3045
        %3047 = vrot.lane.b32.xlu0 %v3044, 64
        %v3048 = vpop.permute.xlu0 %3047
        %v3053 = vunpack.c.l.b16 %v2903
        %v3054 = vunpack.c.l.b16 %v2904
        %v3055 = vunpack.c.l.b16 %v2905
        %v3056 = vunpack.c.l.b16 %v2906
        %v3057 = vpack.c.b16 %v3054, %v3053
        %v3058 = vpack.c.b16 %v3056, %v3055
        %v3063 = vunpack.c.l.b16 %v3021
        %v3064 = vunpack.c.l.b16 %v3022
        %v3065 = vunpack.c.l.b16 %v3023
        %v3066 = vunpack.c.l.b16 %v3024
        %v3067 = vpack.c.b16 %v3064, %v3063
        %v3068 = vpack.c.b16 %v3066, %v3065
        %3069 = vrot.lane.b32.xlu0 %v3067, 64
        %v3070 = vpop.permute.xlu0 %3069
        %3071 = vrot.lane.b32.xlu0 %v3068, 64
        %v3072 = vpop.permute.xlu0 %3071
        %v3075 = vsel %vm2575, %v3033, %v3046
        %v3078 = vsel %vm2575, %v3034, %v3048
        %v3081 = vsel %vm2575, %v3057, %v3070
        %v3084 = vsel %vm2575, %v3058, %v3072
        %v3089 = vunpack.c.l.b16 %v3075
        %v3090 = vunpack.c.l.b16 %v3081
        %v3091 = vunpack.c.h.b16 %v3075
        %v3092 = vunpack.c.h.b16 %v3081
        %v3093 = vunpack.c.l.b16 %v3078
        %v3094 = vunpack.c.l.b16 %v3084
        %v3095 = vunpack.c.h.b16 %v3078
        %v3096 = vunpack.c.h.b16 %v3084
        %v3097 = vpack.c.b16 %v3090, %v3089
        %v3098 = vpack.c.b16 %v3092, %v3091
        %v3099 = vpack.c.b16 %v3094, %v3093
        %v3100 = vpack.c.b16 %v3096, %v3095
        %3105 = vst [vmem:[%s268] sm:$0xff] %v3097
        %3106 = vst [vmem:[%s268 + $0x8] sm:$0xff] %v3098
        %3107 = vst [vmem:[%s268 + $0x10] sm:$0xff] %v3099
        %3108 = vst [vmem:[%s268 + $0x18] sm:$0xff] %v3100
        %s3109 = sand.u32 %s178, 1
        %s3110 = sand.u32 %s178, 1
        %s3111 = smul.addr %s3110, 32
        %s3112 = scalar_lea.vmem [#allocation2], %s3111
        // Predicated region
        $region49: #{cnn2_forward.2} parent=47 // pred_check
          %p3113 = pneg %p188
        $region50: #{cnn2_forward.2} parent=47 // pred_check_branch
          %3115 = sbr.rel (%p3113) target = $region52
        $region51: #{cnn2_forward.2} parent=47 // pred_region
          %s3116 = smul.u32 2, %s18
          %s3117 = smul.addr %s3116, 4
          %s3118 = scalar_lea.vmem %s7, %s3117
          // Predicated region
          $region53: #{cnn2_forward.2} parent=51 // pred_check
            _
          $region54: #{cnn2_forward.2} parent=51 // pred_check_branch
            %3120 = sbr.rel (0) target = $region56
          $region55: #{cnn2_forward.2} parent=51 // pred_region
            // Predicated region
            $region57: #{cnn2_forward.2} parent=55 // pred_check
              _
            $region58: #{cnn2_forward.2} parent=55 // pred_check_branch
              %3122 = sbr.rel (0) target = $region60
            $region59: #{cnn2_forward.2} parent=55 // pred_region
              // Predicated region
              $region72: #{cnn2_forward.2} parent=59 // pred_check
                _
              $region73: #{cnn2_forward.2} parent=59 // pred_check_branch
                %3144 = sbr.rel (0) target = $region75
              $region74: #{cnn2_forward.2} parent=59 // pred_region
                loop: start=0, step=1, limit=1
                $region76: #{cnn2_forward.2} parent=74 // loop_pre_header
                  _
                $region77: #{cnn2_forward.2} parent=74 // loop_header
                  %s3146 = sphi 0, %s3150
                  %p3147 = scmp.ge.s32.totalorder %s3146, 1
                  %s3151 = sphi %s3112, %s3112
                  %s3152 = sphi %s3118, %s3118
                $region78: #{cnn2_forward.2} parent=74 // loop_header_branch
                  %3149 = sbr.rel (%p3147) target = $region82
                $region79: #{cnn2_forward.2} parent=74 // loop_body
                  %v3153 = vld [vmem:[%s3151] sm:$0xff]
                  %3154 = vst [vmem:[%s3152] sm:$0xff] %v3153
                  %v3155 = vld [vmem:[%s3151 + $0x8] sm:$0xff]
                  %3156 = vst [vmem:[%s3152 + $0x10] sm:$0xff] %v3155
                  %v3157 = vld [vmem:[%s3151 + $0x10] sm:$0xff]
                  %3158 = vst [vmem:[%s3152 + $0x20] sm:$0xff] %v3157
                  %v3159 = vld [vmem:[%s3151 + $0x18] sm:$0xff]
                  %3160 = vst [vmem:[%s3152 + $0x30] sm:$0xff] %v3159
                $region80: #{cnn2_forward.2} parent=74 // loop_footer
                  %s3150 = sadd.s32 1, %s3146
                $region81: #{cnn2_forward.2} parent=74 // loop_footer_branch
                  %3145 = sbr.rel target = $region77
                $region82: #{cnn2_forward.2} parent=74 // loop_exit
                  _
              $region75: #{cnn2_forward.2} parent=59 // pred_fallthru
                _
              // Predicated region
              $region83: #{cnn2_forward.2} parent=59 // pred_check
                _
              $region84: #{cnn2_forward.2} parent=59 // pred_check_branch
                %3162 = sbr.rel target = $region86
              $region85: #{cnn2_forward.2} parent=59 // pred_region
                _
              $region86: #{cnn2_forward.2} parent=59 // pred_fallthru
                _
            $region60: #{cnn2_forward.2} parent=55 // pred_fallthru
              _
            // Predicated region
            $region61: #{cnn2_forward.2} parent=55 // pred_check
              _
            $region62: #{cnn2_forward.2} parent=55 // pred_check_branch
              %3124 = sbr.rel target = $region64
            $region63: #{cnn2_forward.2} parent=55 // pred_region
              %s3126 = ssub.s32 256, 1
              loop: start=0, step=1, limit=1
              $region65: #{cnn2_forward.2} parent=63 // loop_pre_header
                _
              $region66: #{cnn2_forward.2} parent=63 // loop_header
                %s3128 = sphi 0, %s3132
                %p3129 = scmp.ge.s32.totalorder %s3128, 1
                %s3133 = sphi %s3112, %s3112
                %s3134 = sphi %s3118, %s3118
              $region67: #{cnn2_forward.2} parent=63 // loop_header_branch
                %3131 = sbr.rel (%p3129) target = $region71
              $region68: #{cnn2_forward.2} parent=63 // loop_body
                %v3135 = vld [vmem:[%s3133] sm:%s3126]
                %3136 = vst [vmem:[%s3134] sm:%s3126] %v3135
                %v3137 = vld [vmem:[%s3133 + $0x8] sm:%s3126]
                %3138 = vst [vmem:[%s3134 + $0x10] sm:%s3126] %v3137
                %v3139 = vld [vmem:[%s3133 + $0x10] sm:%s3126]
                %3140 = vst [vmem:[%s3134 + $0x20] sm:%s3126] %v3139
                %v3141 = vld [vmem:[%s3133 + $0x18] sm:%s3126]
                %3142 = vst [vmem:[%s3134 + $0x30] sm:%s3126] %v3141
              $region69: #{cnn2_forward.2} parent=63 // loop_footer
                %s3132 = sadd.s32 1, %s3128
              $region70: #{cnn2_forward.2} parent=63 // loop_footer_branch
                %3127 = sbr.rel target = $region66
              $region71: #{cnn2_forward.2} parent=63 // loop_exit
                _
            $region64: #{cnn2_forward.2} parent=55 // pred_fallthru
              _
          $region56: #{cnn2_forward.2} parent=51 // pred_fallthru
            _
          %3163 = vnop
        $region52: #{cnn2_forward.2} parent=47 // pred_fallthru
          _
      $region48: #{cnn2_forward.2} parent=5 // pred_fallthru
        _
      %p3164 = scmp.le.s32.totalorder 2, %s13
      // Predicated region
      $region87: #{cnn2_forward.2} parent=5 // pred_check
        %p3165 = pneg %p3164
      $region88: #{cnn2_forward.2} parent=5 // pred_check_branch
        %3167 = sbr.rel (%p3165) target = $region90
      $region89: #{cnn2_forward.2} parent=5 // pred_region
        %s3168 = ssub.s32 %s13, 2
        // Predicated region
        $region91: #{cnn2_forward.2} parent=89 // pred_check
          %p3169 = pneg %p194
        $region92: #{cnn2_forward.2} parent=89 // pred_check_branch
          %3171 = sbr.rel (%p3169) target = $region94
        $region93: #{cnn2_forward.2} parent=89 // pred_region
          %s3172 = sand.u32 %s179, 1
          %s3173 = sand.u32 %s179, 1
          %s3174 = smul.addr %s3173, 32
          %s3175 = scalar_lea.vmem [#allocation2], %s3174
        $region94: #{cnn2_forward.2} parent=89 // pred_fallthru
          _
      $region90: #{cnn2_forward.2} parent=5 // pred_fallthru
        _
    $region6: #{cnn2_forward.2} parent=1 // loop_footer
      %s17 = sadd.s32 1, %s13
    $region7: #{cnn2_forward.2} parent=1 // loop_footer_branch
      %12 = sbr.rel target = $region3
    $region8: #{cnn2_forward.2} parent=1 // loop_exit
      _

</llo_original>
